<compile_context>
chip_gen: v6e
topology: v6e:2x2x1
jax: 0.10.0
libtpu: 0.0.40
codegen_flags: <defaults>
</compile_context>

<pallas_src>
import jax
import jax.numpy as jnp
from jax import lax
from jax.experimental import pallas as pl
from jax.experimental.pallas import tpu as pltpu

EPS = 1e-5  # LayerNorm eps


def _softplus(v):
    return jnp.where(v > 20.0, v, jnp.log1p(jnp.exp(v)))


def _silu(v):
    # sigmoid denominator via EUP approximate reciprocal (free-ish slot).
    return v * pl.reciprocal(1.0 + jnp.exp(-v), approx=True)


def bimamba_kernel(x_ref, ln_w_ref, ln_b_ref, w_in_ref, conv_w_ref, conv_b_ref,
                   w_xp_ref, dt_w_ref, dt_b_ref, a_ref, d_ref, w_out_ref,
                   out_ref,
                   pad_ref, u_ref, dl_ref, bc_ref, ys_ref):
    S = x_ref.shape[1]
    DI = conv_b_ref.shape[1]
    DS = a_ref.shape[0]
    DTR = dt_w_ref.shape[0]
    K = conv_w_ref.shape[0]
    PAD = K - 1

    # time-block size: fori_loop over blocks, static unroll inside.
    TB = 8
    while S % TB:
        TB //= 2
    NB = S // TB

    x = x_ref[0]                                     # (S, DIM), also the residual

    # ---- LayerNorm over the feature axis ----
    mu = jnp.mean(x, axis=-1, keepdims=True)
    xc = x - mu
    var = jnp.mean(xc * xc, axis=-1, keepdims=True)
    xn = xc * lax.rsqrt(var + EPS) * ln_w_ref[...] + ln_b_ref[...]

    # ---- fused in_proj: single (DIM, 2*DI) matmul, then split x/z streams ----
    xz = jnp.dot(xn, w_in_ref[...], preferred_element_type=jnp.float32)  # (S, 2*DI)
    x1 = xz[:, :DI]
    z1 = xz[:, DI:]

    # ---- depthwise causal (fwd) + anti-causal (bwd) conv via padded scratch ----
    if PAD > 0:
        pad_ref[0:PAD, :] = jnp.zeros((PAD, DI), jnp.float32)
        pad_ref[PAD + S:, :] = jnp.zeros((PAD, DI), jnp.float32)
    pad_ref[PAD:PAD + S, :] = x1

    acc_f = conv_b_ref[...]                          # (1, DI), broadcasts up
    acc_b = conv_b_ref[...]
    for k in range(K):
        w_k = conv_w_ref[k:k + 1, :]                 # (1, DI)
        acc_f = acc_f + pad_ref[k:k + S, :] * w_k                      # causal
        acc_b = acc_b + pad_ref[2 * PAD - k:2 * PAD - k + S, :] * w_k  # anti-causal
    u_ref[0:S, :] = _softplus(acc_f)                 # forward-direction activations
    u_ref[S:, :] = _softplus(acc_b)                  # backward direction (orig order)
    u_all = u_ref[...]                               # (2S, DI)

    # ---- fused x_proj (delta_lowrank | B | C) + dt_proj on stacked directions ----
    xp = jnp.dot(u_all, w_xp_ref[...], preferred_element_type=jnp.float32)
    bc_ref[...] = xp[:, DTR:]                        # (2S, 2*DS): [B | C]
    dl_ref[...] = _softplus(
        jnp.dot(xp[:, :DTR], dt_w_ref[...], preferred_element_type=jnp.float32)
        + dt_b_ref[...])                             # (2S, DI) delta

    # ---- selective scan, vectorized over d_state ----
    A = a_ref[...]                                   # (DS, DI), already -exp(A_log)
    eye = (lax.broadcasted_iota(jnp.int32, (DS, DS), 0)
           == lax.broadcasted_iota(jnp.int32, (DS, DS), 1)).astype(jnp.float32)

    def run_scan(direction, reverse):
        off = direction * S

        def block_body(i, H):
            nb = (NB - 1 - i) if reverse else i
            base = pl.multiple_of(off + nb * TB, TB)
            d_blk = dl_ref[pl.ds(base, TB), :]       # (TB, DI)
            u_blk = u_ref[pl.ds(base, TB), :]        # (TB, DI)
            bc_blk = bc_ref[pl.ds(base, TB), :]      # (TB, 2*DS)
            order = range(TB - 1, -1, -1) if reverse else range(TB)
            for r in order:
                d_t = d_blk[r:r + 1, :]              # (1, DI)
                du = d_t * u_blk[r:r + 1, :]         # (1, DI)
                b_t = bc_blk[r:r + 1, 0:DS]          # (1, DS)
                c_t = bc_blk[r:r + 1, DS:]           # (1, DS)
                # row -> column without transposes: mask with identity, lane-reduce
                b_col = jnp.sum(eye * b_t, axis=1, keepdims=True)      # (DS, 1)
                dA = jnp.exp(d_t * A)                # (DS, DI)
                H = dA * H + du * b_col              # (DS, DI)
                y_r = jnp.dot(c_t, H, preferred_element_type=jnp.float32)  # (1, DI)
                # TODO(synk): v5e micro-opt — buffer TB rows and do one (TB, DI) store.
                ys_ref[pl.ds(base + r, 1), :] = y_r
            return H

        lax.fori_loop(0, NB, block_body, jnp.zeros((DS, DI), jnp.float32))

    run_scan(0, reverse=False)   # forward-in-time scan
    run_scan(1, reverse=True)    # backward-in-time scan (replaces the .flip pair)

    # ---- D skip, shared SiLU gate, combine directions, out_proj, residual ----
    y_all = ys_ref[...] + u_ref[...] * d_ref[...]    # (2S, DI)
    gate = _silu(z1)                                 # silu(z1) == flip(silu(z2))
    comb = (y_all[0:S, :] + y_all[S:, :]) * gate * 0.5
    out = jnp.dot(comb, w_out_ref[...], preferred_element_type=jnp.float32) + x
    out_ref[0] = out.astype(out_ref.dtype)


def bimamba_forward(x, params):
    B, S, DIM = x.shape
    DI = params['conv_b'].shape[1]
    DS = params['a_log'].shape[0]
    DTR = params['dt_w'].shape[0]
    K = params['conv_w'].shape[0]
    PAD = K - 1

    # Fused / preprocessed weights (hoisted out of the kernel).
    w_in = jnp.concatenate([params['w_in_x'], params['w_in_z']], axis=1)       # (DIM, 2DI)
    w_xp = jnp.concatenate([params['w_dt'], params['w_B'], params['w_C']], axis=1)
    a_neg = -jnp.exp(params['a_log'])                                          # (DS, DI)

    def full(shape):
        n = len(shape)
        return pl.BlockSpec(shape, lambda b, n=n: (0,) * n)

    in_specs = [
        pl.BlockSpec((1, S, DIM), lambda b: (b, 0, 0)),   # x
        full((1, DIM)), full((1, DIM)),                   # ln_w, ln_b
        full((DIM, 2 * DI)),                              # fused in_proj
        full((K, DI)), full((1, DI)),                     # conv_w, conv_b
        full((DI, DTR + 2 * DS)),                         # fused x_proj (dt|B|C)
        full((DTR, DI)), full((1, DI)),                   # dt_w, dt_b
        full((DS, DI)), full((1, DI)),                    # A (= -exp(A_log)), D
        full((DI, DIM)),                                  # out_proj
    ]

    return pl.pallas_call(
        bimamba_kernel,
        out_shape=jax.ShapeDtypeStruct((B, S, DIM), jnp.float32),
        grid_spec=pltpu.PrefetchScalarGridSpec(
            num_scalar_prefetch=0,
            grid=(B,),
            in_specs=in_specs,
            out_specs=pl.BlockSpec((1, S, DIM), lambda b: (b, 0, 0)),
            scratch_shapes=[
                pltpu.VMEM((S + 2 * PAD, DI), jnp.float32),  # zero-padded conv input
                pltpu.VMEM((2 * S, DI), jnp.float32),        # u (fwd rows | bwd rows)
                pltpu.VMEM((2 * S, DI), jnp.float32),        # delta
                pltpu.VMEM((2 * S, 2 * DS), jnp.float32),    # [B | C]
                pltpu.VMEM((2 * S, DI), jnp.float32),        # scan outputs
            ],
        ),
        compiler_params=pltpu.CompilerParams(dimension_semantics=("parallel",)),
    )(x, params['ln_w'], params['ln_b'], w_in,
      params['conv_w'], params['conv_b'], w_xp,
      params['dt_w'], params['dt_b'], a_neg, params['d'], params['w_out'])


def make_params(key, dim, d_state, d_conv=4, expand=2):
    d_inner = expand * dim
    dt_rank = -(-dim // d_state)   # ceil(dim / d_state)
    ks = jax.random.split(key, 12)

    def rn(k, shape, scale):
        return (scale * jax.random.normal(k, shape)).astype(jnp.float32)

    return dict(
        ln_w=(jnp.ones((1, dim)) + 0.05 * jax.random.normal(ks[0], (1, dim))).astype(jnp.float32),
        ln_b=rn(ks[1], (1, dim), 0.05),
        w_in_x=rn(ks[2], (dim, d_inner), 0.3),
        w_in_z=rn(ks[3], (dim, d_inner), 0.3),
        conv_w=rn(ks[4], (d_conv, d_inner), 0.3),     # conv_w[k, d] == torch weight[d, 0, k]
        conv_b=rn(ks[5], (1, d_inner), 0.05),
        w_dt=rn(ks[6], (d_inner, dt_rank), 0.3),
        w_B=rn(ks[7], (d_inner, d_state), 0.3),
        w_C=rn(ks[8], (d_inner, d_state), 0.3),
        dt_w=rn(ks[9], (dt_rank, d_inner), 0.3),
        dt_b=rn(ks[10], (1, d_inner), 0.05),
        a_log=jnp.broadcast_to(
            jnp.log(jnp.arange(1, d_state + 1, dtype=jnp.float32))[:, None],
            (d_state, d_inner)).astype(jnp.float32),  # == torch A_log.T (mamba init)
        d=jnp.ones((1, d_inner), jnp.float32),
        w_out=rn(ks[11], (d_inner, dim), 0.3),
    )


def reference_forward(x, params):
    """Pure-JAX mirror of the PyTorch forward, for correctness checking."""
    B, S, DIM = x.shape
    DS = params['a_log'].shape[0]
    K = params['conv_w'].shape[0]

    def softplus(v): return jnp.where(v > 20.0, v, jnp.log1p(jnp.exp(v)))
    def silu(v): return v * jax.nn.sigmoid(v)

    mu = x.mean(-1, keepdims=True)
    var = ((x - mu) ** 2).mean(-1, keepdims=True)
    xn = (x - mu) / jnp.sqrt(var + EPS) * params['ln_w'][0] + params['ln_b'][0]

    x1 = xn @ params['w_in_x']
    z1 = xn @ params['w_in_z']
    x2 = jnp.flip(x1, axis=1)
    z2 = jnp.flip(z1, axis=1)

    A = -jnp.exp(params['a_log'])    # (DS, DI)

    def conv(u):
        pad = jnp.pad(u, ((0, 0), (K - 1, 0), (0, 0)))
        out = jnp.zeros_like(u) + params['conv_b'][0]
        for k in range(K):
            out = out + pad[:, k:k + S, :] * params['conv_w'][k]
        return out

    def ssm(u):
        dlr = u @ params['w_dt']
        Bm = u @ params['w_B']
        Cm = u @ params['w_C']
        delta = softplus(dlr @ params['dt_w'] + params['dt_b'][0])

        def step(h, inp):
            d_t, u_t, b_t, c_t = inp
            dA = jnp.exp(d_t[None, :] * A)
            h = dA * h + (d_t * u_t)[None, :] * b_t[:, None]
            y = jnp.sum(h * c_t[:, None], axis=0)
            return h, y

        def per_batch(db, ub, bb, cb):
            h0 = jnp.zeros((DS, u.shape[-1]), jnp.float32)
            _, ys = lax.scan(step, h0, (db, ub, bb, cb))
            return ys

        ys = jax.vmap(per_batch)(delta, u, Bm, Cm)
        return ys + u * params['d'][0]

    def process(u):
        return ssm(softplus(conv(u)))

    y1 = process(x1)
    y2 = process(x2)
    g1 = y1 * silu(z1)
    g2 = y2 * silu(z2)
    comb = (g1 + jnp.flip(g2, axis=1)) * 0.5
    return comb @ params['w_out'] + x


if __name__ == "__main__":
    B, S, DIM, D_STATE = 2, 8, 8, 4            # -> d_inner=16, dt_rank=2, d_conv=4
    key = jax.random.PRNGKey(0)
    kx, kp = jax.random.split(key)
    x = jax.random.normal(kx, (B, S, DIM), dtype=jnp.float32)
    params = make_params(kp, DIM, D_STATE)

    out = jax.block_until_ready(bimamba_forward(x, params))

    with jax.default_matmul_precision("highest"):
        ref = jax.block_until_ready(reference_forward(x, params))

    assert out.shape == x.shape
    err = float(jnp.max(jnp.abs(out - ref)))
    if err > 3e-2:
        raise AssertionError(f"mismatch vs reference: max abs err {err}")
    print("KERNEL_OK")
</pallas_src>

<mosaic_0001>
module attributes {stable_mosaic.version = 11 : i64} {
  func.func @bimamba_kernel(%arg0: i32, %arg1: memref<1x8x8xf32, #tpu.memory_space<vmem>>, %arg2: memref<1x8xf32, #tpu.memory_space<vmem>>, %arg3: memref<1x8xf32, #tpu.memory_space<vmem>>, %arg4: memref<8x32xf32, #tpu.memory_space<vmem>>, %arg5: memref<4x16xf32, #tpu.memory_space<vmem>>, %arg6: memref<1x16xf32, #tpu.memory_space<vmem>>, %arg7: memref<16x10xf32, #tpu.memory_space<vmem>>, %arg8: memref<2x16xf32, #tpu.memory_space<vmem>>, %arg9: memref<1x16xf32, #tpu.memory_space<vmem>>, %arg10: memref<4x16xf32, #tpu.memory_space<vmem>>, %arg11: memref<1x16xf32, #tpu.memory_space<vmem>>, %arg12: memref<16x8xf32, #tpu.memory_space<vmem>>, %arg13: memref<1x8x8xf32, #tpu.memory_space<vmem>>, %arg14: memref<14x16xf32, #tpu.memory_space<vmem>>, %arg15: memref<16x16xf32, #tpu.memory_space<vmem>>, %arg16: memref<16x16xf32, #tpu.memory_space<vmem>>, %arg17: memref<16x8xf32, #tpu.memory_space<vmem>>, %arg18: memref<16x16xf32, #tpu.memory_space<vmem>>) attributes {dimension_semantics = [#tpu.dimension_semantics<parallel>], iteration_bounds = array<i64: 2>, scalar_prefetch = 0 : i64, scratch_operands = 5 : i64, tpu.core_type = #tpu.core_type<tc>, window_params = [{transform_indices = @transform_0, window_bounds = array<i64: 1, 8, 8>}, {pipeline_mode = #tpu.pipeline_mode<synchronous>, transform_indices = @transform_1, window_bounds = array<i64: 1, 8>}, {pipeline_mode = #tpu.pipeline_mode<synchronous>, transform_indices = @transform_2, window_bounds = array<i64: 1, 8>}, {pipeline_mode = #tpu.pipeline_mode<synchronous>, transform_indices = @transform_3, window_bounds = array<i64: 8, 32>}, {pipeline_mode = #tpu.pipeline_mode<synchronous>, transform_indices = @transform_4, window_bounds = array<i64: 4, 16>}, {pipeline_mode = #tpu.pipeline_mode<synchronous>, transform_indices = @transform_5, window_bounds = array<i64: 1, 16>}, {pipeline_mode = #tpu.pipeline_mode<synchronous>, transform_indices = @transform_6, window_bounds = array<i64: 16, 10>}, {pipeline_mode = #tpu.pipeline_mode<synchronous>, transform_indices = @transform_7, window_bounds = array<i64: 2, 16>}, {pipeline_mode = #tpu.pipeline_mode<synchronous>, transform_indices = @transform_8, window_bounds = array<i64: 1, 16>}, {pipeline_mode = #tpu.pipeline_mode<synchronous>, transform_indices = @transform_9, window_bounds = array<i64: 4, 16>}, {pipeline_mode = #tpu.pipeline_mode<synchronous>, transform_indices = @transform_10, window_bounds = array<i64: 1, 16>}, {pipeline_mode = #tpu.pipeline_mode<synchronous>, transform_indices = @transform_11, window_bounds = array<i64: 16, 8>}, {transform_indices = @transform_12, window_bounds = array<i64: 1, 8, 8>}]} {
    %c0 = arith.constant 0 : index
    %c0_0 = arith.constant 0 : index
    %c0_1 = arith.constant 0 : index
    %0 = vector.load %arg1[%c0, %c0_0, %c0_1] : memref<1x8x8xf32, #tpu.memory_space<vmem>>, vector<1x8x8xf32>
    %1 = vector.shape_cast %0 : vector<1x8x8xf32> to vector<8x8xf32>
    %cst = arith.constant dense<0.000000e+00> : vector<8xf32>
    %2 = vector.multi_reduction <add>, %1, %cst [1] : vector<8x8xf32> to vector<8xf32>
    %3 = vector.shape_cast %2 : vector<8xf32> to vector<8x1xf32>
    %cst_2 = arith.constant 8.000000e+00 : f32
    %4 = vector.broadcast %cst_2 : f32 to vector<8x1xf32>
    %5 = arith.divf %3, %4 : vector<8x1xf32>
    %6 = vector.broadcast %5 : vector<8x1xf32> to vector<8x8xf32>
    %7 = arith.subf %1, %6 : vector<8x8xf32>
    %8 = arith.mulf %7, %7 : vector<8x8xf32>
    %cst_3 = arith.constant dense<0.000000e+00> : vector<8xf32>
    %9 = vector.multi_reduction <add>, %8, %cst_3 [1] : vector<8x8xf32> to vector<8xf32>
    %10 = vector.shape_cast %9 : vector<8xf32> to vector<8x1xf32>
    %cst_4 = arith.constant 8.000000e+00 : f32
    %11 = vector.broadcast %cst_4 : f32 to vector<8x1xf32>
    %12 = arith.divf %10, %11 : vector<8x1xf32>
    %cst_5 = arith.constant 9.99999974E-6 : f32
    %13 = vector.broadcast %cst_5 : f32 to vector<8x1xf32>
    %14 = arith.addf %12, %13 : vector<8x1xf32>
    %15 = math.rsqrt %14 : vector<8x1xf32>
    %16 = vector.broadcast %15 : vector<8x1xf32> to vector<8x8xf32>
    %17 = arith.mulf %7, %16 : vector<8x8xf32>
    %c0_6 = arith.constant 0 : index
    %c0_7 = arith.constant 0 : index
    %18 = vector.load %arg2[%c0_6, %c0_7] : memref<1x8xf32, #tpu.memory_space<vmem>>, vector<1x8xf32>
    %19 = vector.broadcast %18 : vector<1x8xf32> to vector<8x8xf32>
    %20 = arith.mulf %17, %19 : vector<8x8xf32>
    %c0_8 = arith.constant 0 : index
    %c0_9 = arith.constant 0 : index
    %21 = vector.load %arg3[%c0_8, %c0_9] : memref<1x8xf32, #tpu.memory_space<vmem>>, vector<1x8xf32>
    %22 = vector.broadcast %21 : vector<1x8xf32> to vector<8x8xf32>
    %23 = arith.addf %20, %22 : vector<8x8xf32>
    %c0_10 = arith.constant 0 : index
    %c0_11 = arith.constant 0 : index
    %24 = vector.load %arg4[%c0_10, %c0_11] : memref<8x32xf32, #tpu.memory_space<vmem>>, vector<8x32xf32>
    %cst_12 = arith.constant dense<0.000000e+00> : vector<8x32xf32>
    %25 = tpu.matmul %23, %24, %cst_12 {dimension_numbers = #tpu.dot_dimension_numbers<[1], [0], [0], [1], [0, 0, 1, 1], [], []>} : vector<8x8xf32>, vector<8x32xf32>, vector<8x32xf32> -> vector<8x32xf32>
    %26 = vector.extract_strided_slice %25 {offsets = [0, 0], sizes = [8, 16], strides = [1, 1]} : vector<8x32xf32> to vector<8x16xf32>
    %27 = vector.extract_strided_slice %25 {offsets = [0, 16], sizes = [8, 16], strides = [1, 1]} : vector<8x32xf32> to vector<8x16xf32>
    %cst_13 = arith.constant 0.000000e+00 : f32
    %28 = vector.broadcast %cst_13 : f32 to vector<3x16xf32>
    %c0_14 = arith.constant 0 : index
    %c0_15 = arith.constant 0 : index
    %29 = vector.load %arg14[%c0_14, %c0_15] : memref<14x16xf32, #tpu.memory_space<vmem>>, vector<3x16xf32>
    tpu.vector_store %arg14[%c0_14, %c0_15], %28 {strides = array<i32>} : memref<14x16xf32, #tpu.memory_space<vmem>>, vector<3x16xf32>,
    %cst_16 = arith.constant 0.000000e+00 : f32
    %30 = vector.broadcast %cst_16 : f32 to vector<3x16xf32>
    %c11 = arith.constant 11 : index
    %c0_17 = arith.constant 0 : index
    %31 = vector.load %arg14[%c11, %c0_17] : memref<14x16xf32, #tpu.memory_space<vmem>>, vector<3x16xf32>
    tpu.vector_store %arg14[%c11, %c0_17], %30 {strides = array<i32>} : memref<14x16xf32, #tpu.memory_space<vmem>>, vector<3x16xf32>,
    %c3 = arith.constant 3 : index
    %c0_18 = arith.constant 0 : index
    %32 = vector.load %arg14[%c3, %c0_18] : memref<14x16xf32, #tpu.memory_space<vmem>>, vector<8x16xf32>
    tpu.vector_store %arg14[%c3, %c0_18], %26 {strides = array<i32>} : memref<14x16xf32, #tpu.memory_space<vmem>>, vector<8x16xf32>,
    %c0_19 = arith.constant 0 : index
    %c0_20 = arith.constant 0 : index
    %33 = vector.load %arg6[%c0_19, %c0_20] : memref<1x16xf32, #tpu.memory_space<vmem>>, vector<1x16xf32>
    %c0_21 = arith.constant 0 : index
    %c0_22 = arith.constant 0 : index
    %34 = vector.load %arg6[%c0_21, %c0_22] : memref<1x16xf32, #tpu.memory_space<vmem>>, vector<1x16xf32>
    %c0_23 = arith.constant 0 : index
    %c0_24 = arith.constant 0 : index
    %35 = vector.load %arg5[%c0_23, %c0_24] : memref<4x16xf32, #tpu.memory_space<vmem>>, vector<1x16xf32>
    %c0_25 = arith.constant 0 : index
    %c0_26 = arith.constant 0 : index
    %36 = vector.load %arg14[%c0_25, %c0_26] : memref<14x16xf32, #tpu.memory_space<vmem>>, vector<8x16xf32>
    %37 = vector.broadcast %35 : vector<1x16xf32> to vector<8x16xf32>
    %38 = arith.mulf %36, %37 : vector<8x16xf32>
    %39 = vector.broadcast %33 : vector<1x16xf32> to vector<8x16xf32>
    %40 = arith.addf %39, %38 : vector<8x16xf32>
    %c6 = arith.constant 6 : index
    %c0_27 = arith.constant 0 : index
    %41 = vector.load %arg14[%c6, %c0_27] : memref<14x16xf32, #tpu.memory_space<vmem>>, vector<8x16xf32>
    %42 = vector.broadcast %35 : vector<1x16xf32> to vector<8x16xf32>
    %43 = arith.mulf %41, %42 : vector<8x16xf32>
    %44 = vector.broadcast %34 : vector<1x16xf32> to vector<8x16xf32>
    %45 = arith.addf %44, %43 : vector<8x16xf32>
    %c1 = arith.constant 1 : index
    %c0_28 = arith.constant 0 : index
    %46 = vector.load %arg5[%c1, %c0_28] : memref<4x16xf32, #tpu.memory_space<vmem>>, vector<1x16xf32>
    %c1_29 = arith.constant 1 : index
    %c0_30 = arith.constant 0 : index
    %47 = vector.load %arg14[%c1_29, %c0_30] : memref<14x16xf32, #tpu.memory_space<vmem>>, vector<8x16xf32>
    %48 = vector.broadcast %46 : vector<1x16xf32> to vector<8x16xf32>
    %49 = arith.mulf %47, %48 : vector<8x16xf32>
    %50 = arith.addf %40, %49 : vector<8x16xf32>
    %c5 = arith.constant 5 : index
    %c0_31 = arith.constant 0 : index
    %51 = vector.load %arg14[%c5, %c0_31] : memref<14x16xf32, #tpu.memory_space<vmem>>, vector<8x16xf32>
    %52 = vector.broadcast %46 : vector<1x16xf32> to vector<8x16xf32>
    %53 = arith.mulf %51, %52 : vector<8x16xf32>
    %54 = arith.addf %45, %53 : vector<8x16xf32>
    %c2 = arith.constant 2 : index
    %c0_32 = arith.constant 0 : index
    %55 = vector.load %arg5[%c2, %c0_32] : memref<4x16xf32, #tpu.memory_space<vmem>>, vector<1x16xf32>
    %c2_33 = arith.constant 2 : index
    %c0_34 = arith.constant 0 : index
    %56 = vector.load %arg14[%c2_33, %c0_34] : memref<14x16xf32, #tpu.memory_space<vmem>>, vector<8x16xf32>
    %57 = vector.broadcast %55 : vector<1x16xf32> to vector<8x16xf32>
    %58 = arith.mulf %56, %57 : vector<8x16xf32>
    %59 = arith.addf %50, %58 : vector<8x16xf32>
    %c4 = arith.constant 4 : index
    %c0_35 = arith.constant 0 : index
    %60 = vector.load %arg14[%c4, %c0_35] : memref<14x16xf32, #tpu.memory_space<vmem>>, vector<8x16xf32>
    %61 = vector.broadcast %55 : vector<1x16xf32> to vector<8x16xf32>
    %62 = arith.mulf %60, %61 : vector<8x16xf32>
    %63 = arith.addf %54, %62 : vector<8x16xf32>
    %c3_36 = arith.constant 3 : index
    %c0_37 = arith.constant 0 : index
    %64 = vector.load %arg5[%c3_36, %c0_37] : memref<4x16xf32, #tpu.memory_space<vmem>>, vector<1x16xf32>
    %c3_38 = arith.constant 3 : index
    %c0_39 = arith.constant 0 : index
    %65 = vector.load %arg14[%c3_38, %c0_39] : memref<14x16xf32, #tpu.memory_space<vmem>>, vector<8x16xf32>
    %66 = vector.broadcast %64 : vector<1x16xf32> to vector<8x16xf32>
    %67 = arith.mulf %65, %66 : vector<8x16xf32>
    %68 = arith.addf %59, %67 : vector<8x16xf32>
    %c3_40 = arith.constant 3 : index
    %c0_41 = arith.constant 0 : index
    %69 = vector.load %arg14[%c3_40, %c0_41] : memref<14x16xf32, #tpu.memory_space<vmem>>, vector<8x16xf32>
    %70 = vector.broadcast %64 : vector<1x16xf32> to vector<8x16xf32>
    %71 = arith.mulf %69, %70 : vector<8x16xf32>
    %72 = arith.addf %63, %71 : vector<8x16xf32>
    %cst_42 = arith.constant 2.000000e+01 : f32
    %73 = vector.broadcast %cst_42 : f32 to vector<8x16xf32>
    %74 = arith.cmpf ogt, %68, %73 : vector<8x16xf32>
    %75 = math.exp %68 : vector<8x16xf32>
    %76 = math.log1p %75 : vector<8x16xf32>
    %77 = arith.select %74, %68, %76 : vector<8x16xi1>, vector<8x16xf32>
    %c0_43 = arith.constant 0 : index
    %c0_44 = arith.constant 0 : index
    %78 = vector.load %arg15[%c0_43, %c0_44] : memref<16x16xf32, #tpu.memory_space<vmem>>, vector<8x16xf32>
    tpu.vector_store %arg15[%c0_43, %c0_44], %77 {strides = array<i32>} : memref<16x16xf32, #tpu.memory_space<vmem>>, vector<8x16xf32>,
    %cst_45 = arith.constant 2.000000e+01 : f32
    %79 = vector.broadcast %cst_45 : f32 to vector<8x16xf32>
    %80 = arith.cmpf ogt, %72, %79 : vector<8x16xf32>
    %81 = math.exp %72 : vector<8x16xf32>
    %82 = math.log1p %81 : vector<8x16xf32>
    %83 = arith.select %80, %72, %82 : vector<8x16xi1>, vector<8x16xf32>
    %c8 = arith.constant 8 : index
    %c0_46 = arith.constant 0 : index
    %84 = vector.load %arg15[%c8, %c0_46] : memref<16x16xf32, #tpu.memory_space<vmem>>, vector<8x16xf32>
    tpu.vector_store %arg15[%c8, %c0_46], %83 {strides = array<i32>} : memref<16x16xf32, #tpu.memory_space<vmem>>, vector<8x16xf32>,
    %c0_47 = arith.constant 0 : index
    %c0_48 = arith.constant 0 : index
    %85 = vector.load %arg15[%c0_47, %c0_48] : memref<16x16xf32, #tpu.memory_space<vmem>>, vector<16x16xf32>
    %c0_49 = arith.constant 0 : index
    %c0_50 = arith.constant 0 : index
    %86 = vector.load %arg7[%c0_49, %c0_50] : memref<16x10xf32, #tpu.memory_space<vmem>>, vector<16x10xf32>
    %cst_51 = arith.constant dense<0.000000e+00> : vector<16x10xf32>
    %87 = tpu.matmul %85, %86, %cst_51 {dimension_numbers = #tpu.dot_dimension_numbers<[1], [0], [0], [1], [0, 0, 1, 1], [], []>} : vector<16x16xf32>, vector<16x10xf32>, vector<16x10xf32> -> vector<16x10xf32>
    %88 = vector.extract_strided_slice %87 {offsets = [0, 2], sizes = [16, 8], strides = [1, 1]} : vector<16x10xf32> to vector<16x8xf32>
    %c0_52 = arith.constant 0 : index
    %c0_53 = arith.constant 0 : index
    %89 = vector.load %arg17[%c0_52, %c0_53] : memref<16x8xf32, #tpu.memory_space<vmem>>, vector<16x8xf32>
    tpu.vector_store %arg17[%c0_52, %c0_53], %88 {strides = array<i32>} : memref<16x8xf32, #tpu.memory_space<vmem>>, vector<16x8xf32>,
    %90 = vector.extract_strided_slice %87 {offsets = [0, 0], sizes = [16, 2], strides = [1, 1]} : vector<16x10xf32> to vector<16x2xf32>
    %c0_54 = arith.constant 0 : index
    %c0_55 = arith.constant 0 : index
    %91 = vector.load %arg8[%c0_54, %c0_55] : memref<2x16xf32, #tpu.memory_space<vmem>>, vector<2x16xf32>
    %cst_56 = arith.constant dense<0.000000e+00> : vector<16x16xf32>
    %92 = tpu.matmul %90, %91, %cst_56 {dimension_numbers = #tpu.dot_dimension_numbers<[1], [0], [0], [1], [0, 0, 1, 1], [], []>} : vector<16x2xf32>, vector<2x16xf32>, vector<16x16xf32> -> vector<16x16xf32>
    %c0_57 = arith.constant 0 : index
    %c0_58 = arith.constant 0 : index
    %93 = vector.load %arg9[%c0_57, %c0_58] : memref<1x16xf32, #tpu.memory_space<vmem>>, vector<1x16xf32>
    %94 = vector.broadcast %93 : vector<1x16xf32> to vector<16x16xf32>
    %95 = arith.addf %92, %94 : vector<16x16xf32>
    %cst_59 = arith.constant 2.000000e+01 : f32
    %96 = vector.broadcast %cst_59 : f32 to vector<16x16xf32>
    %97 = arith.cmpf ogt, %95, %96 : vector<16x16xf32>
    %98 = math.exp %95 : vector<16x16xf32>
    %99 = math.log1p %98 : vector<16x16xf32>
    %100 = arith.select %97, %95, %99 : vector<16x16xi1>, vector<16x16xf32>
    %c0_60 = arith.constant 0 : index
    %c0_61 = arith.constant 0 : index
    %101 = vector.load %arg16[%c0_60, %c0_61] : memref<16x16xf32, #tpu.memory_space<vmem>>, vector<16x16xf32>
    tpu.vector_store %arg16[%c0_60, %c0_61], %100 {strides = array<i32>} : memref<16x16xf32, #tpu.memory_space<vmem>>, vector<16x16xf32>,
    %c0_62 = arith.constant 0 : index
    %c0_63 = arith.constant 0 : index
    %102 = vector.load %arg10[%c0_62, %c0_63] : memref<4x16xf32, #tpu.memory_space<vmem>>, vector<4x16xf32>
    %103 = tpu.iota {dimensions = array<i32: 0>} : vector<4x4xi32>
    %104 = tpu.iota {dimensions = array<i32: 1>} : vector<4x4xi32>
    %105 = arith.cmpi eq, %103, %104 : vector<4x4xi32>
    %106 = arith.extui %105 : vector<4x4xi1> to vector<4x4xi32>
    %107 = arith.sitofp %106 : vector<4x4xi32> to vector<4x4xf32>
    %cst_64 = arith.constant 0.000000e+00 : f32
    %108 = vector.broadcast %cst_64 : f32 to vector<4x16xf32>
    %c0_i32 = arith.constant 0 : i32
    %c8_i32 = arith.constant 8 : i32
    %109 = arith.muli %c0_i32, %c8_i32 : i32
    %c0_i32_65 = arith.constant 0 : i32
    %110 = arith.addi %c0_i32_65, %109 : i32
    %111 = tpu.assume_multiple %110, 8 : i32
    %112 = arith.index_cast %111 : i32 to index
    %c0_66 = arith.constant 0 : index
    %113 = vector.load %arg16[%112, %c0_66] : memref<16x16xf32, #tpu.memory_space<vmem>>, vector<8x16xf32>
    %114 = arith.index_cast %111 : i32 to index
    %c0_67 = arith.constant 0 : index
    %115 = vector.load %arg15[%114, %c0_67] : memref<16x16xf32, #tpu.memory_space<vmem>>, vector<8x16xf32>
    %116 = arith.index_cast %111 : i32 to index
    %c0_68 = arith.constant 0 : index
    %117 = vector.load %arg17[%116, %c0_68] : memref<16x8xf32, #tpu.memory_space<vmem>>, vector<8x8xf32>
    %118 = vector.extract_strided_slice %113 {offsets = [0, 0], sizes = [1, 16], strides = [1, 1]} : vector<8x16xf32> to vector<1x16xf32>
    %119 = vector.extract_strided_slice %115 {offsets = [0, 0], sizes = [1, 16], strides = [1, 1]} : vector<8x16xf32> to vector<1x16xf32>
    %120 = arith.mulf %118, %119 : vector<1x16xf32>
    %121 = vector.extract_strided_slice %117 {offsets = [0, 0], sizes = [1, 4], strides = [1, 1]} : vector<8x8xf32> to vector<1x4xf32>
    %122 = vector.extract_strided_slice %117 {offsets = [0, 4], sizes = [1, 4], strides = [1, 1]} : vector<8x8xf32> to vector<1x4xf32>
    %123 = vector.broadcast %121 : vector<1x4xf32> to vector<4x4xf32>
    %124 = arith.mulf %107, %123 : vector<4x4xf32>
    %cst_69 = arith.constant dense<0.000000e+00> : vector<4xf32>
    %125 = vector.multi_reduction <add>, %124, %cst_69 [1] : vector<4x4xf32> to vector<4xf32>
    %126 = vector.shape_cast %125 : vector<4xf32> to vector<4x1xf32>
    %127 = vector.broadcast %118 : vector<1x16xf32> to vector<4x16xf32>
    %128 = arith.mulf %127, %102 : vector<4x16xf32>
    %129 = math.exp %128 : vector<4x16xf32>
    %130 = arith.mulf %129, %108 : vector<4x16xf32>
    %131 = vector.broadcast %120 : vector<1x16xf32> to vector<4x16xf32>
    %132 = vector.broadcast %126 : vector<4x1xf32> to vector<4x16xf32>
    %133 = arith.mulf %131, %132 : vector<4x16xf32>
    %134 = arith.addf %130, %133 : vector<4x16xf32>
    %cst_70 = arith.constant dense<0.000000e+00> : vector<1x16xf32>
    %135 = tpu.matmul %122, %134, %cst_70 {dimension_numbers = #tpu.dot_dimension_numbers<[1], [0], [0], [1], [0, 0, 1, 1], [], []>} : vector<1x4xf32>, vector<4x16xf32>, vector<1x16xf32> -> vector<1x16xf32>
    %c0_i32_71 = arith.constant 0 : i32
    %136 = arith.addi %111, %c0_i32_71 : i32
    %137 = arith.index_cast %136 : i32 to index
    %c0_72 = arith.constant 0 : index
    %138 = vector.load %arg18[%137, %c0_72] : memref<16x16xf32, #tpu.memory_space<vmem>>, vector<1x16xf32>
    tpu.vector_store %arg18[%137, %c0_72], %135 {strides = array<i32>} : memref<16x16xf32, #tpu.memory_space<vmem>>, vector<1x16xf32>,
    %139 = vector.extract_strided_slice %113 {offsets = [1, 0], sizes = [1, 16], strides = [1, 1]} : vector<8x16xf32> to vector<1x16xf32>
    %140 = vector.extract_strided_slice %115 {offsets = [1, 0], sizes = [1, 16], strides = [1, 1]} : vector<8x16xf32> to vector<1x16xf32>
    %141 = arith.mulf %139, %140 : vector<1x16xf32>
    %142 = vector.extract_strided_slice %117 {offsets = [1, 0], sizes = [1, 4], strides = [1, 1]} : vector<8x8xf32> to vector<1x4xf32>
    %143 = vector.extract_strided_slice %117 {offsets = [1, 4], sizes = [1, 4], strides = [1, 1]} : vector<8x8xf32> to vector<1x4xf32>
    %144 = vector.broadcast %142 : vector<1x4xf32> to vector<4x4xf32>
    %145 = arith.mulf %107, %144 : vector<4x4xf32>
    %cst_73 = arith.constant dense<0.000000e+00> : vector<4xf32>
    %146 = vector.multi_reduction <add>, %145, %cst_73 [1] : vector<4x4xf32> to vector<4xf32>
    %147 = vector.shape_cast %146 : vector<4xf32> to vector<4x1xf32>
    %148 = vector.broadcast %139 : vector<1x16xf32> to vector<4x16xf32>
    %149 = arith.mulf %148, %102 : vector<4x16xf32>
    %150 = math.exp %149 : vector<4x16xf32>
    %151 = arith.mulf %150, %134 : vector<4x16xf32>
    %152 = vector.broadcast %141 : vector<1x16xf32> to vector<4x16xf32>
    %153 = vector.broadcast %147 : vector<4x1xf32> to vector<4x16xf32>
    %154 = arith.mulf %152, %153 : vector<4x16xf32>
    %155 = arith.addf %151, %154 : vector<4x16xf32>
    %cst_74 = arith.constant dense<0.000000e+00> : vector<1x16xf32>
    %156 = tpu.matmul %143, %155, %cst_74 {dimension_numbers = #tpu.dot_dimension_numbers<[1], [0], [0], [1], [0, 0, 1, 1], [], []>} : vector<1x4xf32>, vector<4x16xf32>, vector<1x16xf32> -> vector<1x16xf32>
    %c1_i32 = arith.constant 1 : i32
    %157 = arith.addi %111, %c1_i32 : i32
    %158 = arith.index_cast %157 : i32 to index
    %c0_75 = arith.constant 0 : index
    %159 = vector.load %arg18[%158, %c0_75] : memref<16x16xf32, #tpu.memory_space<vmem>>, vector<1x16xf32>
    tpu.vector_store %arg18[%158, %c0_75], %156 {strides = array<i32>} : memref<16x16xf32, #tpu.memory_space<vmem>>, vector<1x16xf32>,
    %160 = vector.extract_strided_slice %113 {offsets = [2, 0], sizes = [1, 16], strides = [1, 1]} : vector<8x16xf32> to vector<1x16xf32>
    %161 = vector.extract_strided_slice %115 {offsets = [2, 0], sizes = [1, 16], strides = [1, 1]} : vector<8x16xf32> to vector<1x16xf32>
    %162 = arith.mulf %160, %161 : vector<1x16xf32>
    %163 = vector.extract_strided_slice %117 {offsets = [2, 0], sizes = [1, 4], strides = [1, 1]} : vector<8x8xf32> to vector<1x4xf32>
    %164 = vector.extract_strided_slice %117 {offsets = [2, 4], sizes = [1, 4], strides = [1, 1]} : vector<8x8xf32> to vector<1x4xf32>
    %165 = vector.broadcast %163 : vector<1x4xf32> to vector<4x4xf32>
    %166 = arith.mulf %107, %165 : vector<4x4xf32>
    %cst_76 = arith.constant dense<0.000000e+00> : vector<4xf32>
    %167 = vector.multi_reduction <add>, %166, %cst_76 [1] : vector<4x4xf32> to vector<4xf32>
    %168 = vector.shape_cast %167 : vector<4xf32> to vector<4x1xf32>
    %169 = vector.broadcast %160 : vector<1x16xf32> to vector<4x16xf32>
    %170 = arith.mulf %169, %102 : vector<4x16xf32>
    %171 = math.exp %170 : vector<4x16xf32>
    %172 = arith.mulf %171, %155 : vector<4x16xf32>
    %173 = vector.broadcast %162 : vector<1x16xf32> to vector<4x16xf32>
    %174 = vector.broadcast %168 : vector<4x1xf32> to vector<4x16xf32>
    %175 = arith.mulf %173, %174 : vector<4x16xf32>
    %176 = arith.addf %172, %175 : vector<4x16xf32>
    %cst_77 = arith.constant dense<0.000000e+00> : vector<1x16xf32>
    %177 = tpu.matmul %164, %176, %cst_77 {dimension_numbers = #tpu.dot_dimension_numbers<[1], [0], [0], [1], [0, 0, 1, 1], [], []>} : vector<1x4xf32>, vector<4x16xf32>, vector<1x16xf32> -> vector<1x16xf32>
    %c2_i32 = arith.constant 2 : i32
    %178 = arith.addi %111, %c2_i32 : i32
    %179 = arith.index_cast %178 : i32 to index
    %c0_78 = arith.constant 0 : index
    %180 = vector.load %arg18[%179, %c0_78] : memref<16x16xf32, #tpu.memory_space<vmem>>, vector<1x16xf32>
    tpu.vector_store %arg18[%179, %c0_78], %177 {strides = array<i32>} : memref<16x16xf32, #tpu.memory_space<vmem>>, vector<1x16xf32>,
    %181 = vector.extract_strided_slice %113 {offsets = [3, 0], sizes = [1, 16], strides = [1, 1]} : vector<8x16xf32> to vector<1x16xf32>
    %182 = vector.extract_strided_slice %115 {offsets = [3, 0], sizes = [1, 16], strides = [1, 1]} : vector<8x16xf32> to vector<1x16xf32>
    %183 = arith.mulf %181, %182 : vector<1x16xf32>
    %184 = vector.extract_strided_slice %117 {offsets = [3, 0], sizes = [1, 4], strides = [1, 1]} : vector<8x8xf32> to vector<1x4xf32>
    %185 = vector.extract_strided_slice %117 {offsets = [3, 4], sizes = [1, 4], strides = [1, 1]} : vector<8x8xf32> to vector<1x4xf32>
    %186 = vector.broadcast %184 : vector<1x4xf32> to vector<4x4xf32>
    %187 = arith.mulf %107, %186 : vector<4x4xf32>
    %cst_79 = arith.constant dense<0.000000e+00> : vector<4xf32>
    %188 = vector.multi_reduction <add>, %187, %cst_79 [1] : vector<4x4xf32> to vector<4xf32>
    %189 = vector.shape_cast %188 : vector<4xf32> to vector<4x1xf32>
    %190 = vector.broadcast %181 : vector<1x16xf32> to vector<4x16xf32>
    %191 = arith.mulf %190, %102 : vector<4x16xf32>
    %192 = math.exp %191 : vector<4x16xf32>
    %193 = arith.mulf %192, %176 : vector<4x16xf32>
    %194 = vector.broadcast %183 : vector<1x16xf32> to vector<4x16xf32>
    %195 = vector.broadcast %189 : vector<4x1xf32> to vector<4x16xf32>
    %196 = arith.mulf %194, %195 : vector<4x16xf32>
    %197 = arith.addf %193, %196 : vector<4x16xf32>
    %cst_80 = arith.constant dense<0.000000e+00> : vector<1x16xf32>
    %198 = tpu.matmul %185, %197, %cst_80 {dimension_numbers = #tpu.dot_dimension_numbers<[1], [0], [0], [1], [0, 0, 1, 1], [], []>} : vector<1x4xf32>, vector<4x16xf32>, vector<1x16xf32> -> vector<1x16xf32>
    %c3_i32 = arith.constant 3 : i32
    %199 = arith.addi %111, %c3_i32 : i32
    %200 = arith.index_cast %199 : i32 to index
    %c0_81 = arith.constant 0 : index
    %201 = vector.load %arg18[%200, %c0_81] : memref<16x16xf32, #tpu.memory_space<vmem>>, vector<1x16xf32>
    tpu.vector_store %arg18[%200, %c0_81], %198 {strides = array<i32>} : memref<16x16xf32, #tpu.memory_space<vmem>>, vector<1x16xf32>,
    %202 = vector.extract_strided_slice %113 {offsets = [4, 0], sizes = [1, 16], strides = [1, 1]} : vector<8x16xf32> to vector<1x16xf32>
    %203 = vector.extract_strided_slice %115 {offsets = [4, 0], sizes = [1, 16], strides = [1, 1]} : vector<8x16xf32> to vector<1x16xf32>
    %204 = arith.mulf %202, %203 : vector<1x16xf32>
    %205 = vector.extract_strided_slice %117 {offsets = [4, 0], sizes = [1, 4], strides = [1, 1]} : vector<8x8xf32> to vector<1x4xf32>
    %206 = vector.extract_strided_slice %117 {offsets = [4, 4], sizes = [1, 4], strides = [1, 1]} : vector<8x8xf32> to vector<1x4xf32>
    %207 = vector.broadcast %205 : vector<1x4xf32> to vector<4x4xf32>
    %208 = arith.mulf %107, %207 : vector<4x4xf32>
    %cst_82 = arith.constant dense<0.000000e+00> : vector<4xf32>
    %209 = vector.multi_reduction <add>, %208, %cst_82 [1] : vector<4x4xf32> to vector<4xf32>
    %210 = vector.shape_cast %209 : vector<4xf32> to vector<4x1xf32>
    %211 = vector.broadcast %202 : vector<1x16xf32> to vector<4x16xf32>
    %212 = arith.mulf %211, %102 : vector<4x16xf32>
    %213 = math.exp %212 : vector<4x16xf32>
    %214 = arith.mulf %213, %197 : vector<4x16xf32>
    %215 = vector.broadcast %204 : vector<1x16xf32> to vector<4x16xf32>
    %216 = vector.broadcast %210 : vector<4x1xf32> to vector<4x16xf32>
    %217 = arith.mulf %215, %216 : vector<4x16xf32>
    %218 = arith.addf %214, %217 : vector<4x16xf32>
    %cst_83 = arith.constant dense<0.000000e+00> : vector<1x16xf32>
    %219 = tpu.matmul %206, %218, %cst_83 {dimension_numbers = #tpu.dot_dimension_numbers<[1], [0], [0], [1], [0, 0, 1, 1], [], []>} : vector<1x4xf32>, vector<4x16xf32>, vector<1x16xf32> -> vector<1x16xf32>
    %c4_i32 = arith.constant 4 : i32
    %220 = arith.addi %111, %c4_i32 : i32
    %221 = arith.index_cast %220 : i32 to index
    %c0_84 = arith.constant 0 : index
    %222 = vector.load %arg18[%221, %c0_84] : memref<16x16xf32, #tpu.memory_space<vmem>>, vector<1x16xf32>
    tpu.vector_store %arg18[%221, %c0_84], %219 {strides = array<i32>} : memref<16x16xf32, #tpu.memory_space<vmem>>, vector<1x16xf32>,
    %223 = vector.extract_strided_slice %113 {offsets = [5, 0], sizes = [1, 16], strides = [1, 1]} : vector<8x16xf32> to vector<1x16xf32>
    %224 = vector.extract_strided_slice %115 {offsets = [5, 0], sizes = [1, 16], strides = [1, 1]} : vector<8x16xf32> to vector<1x16xf32>
    %225 = arith.mulf %223, %224 : vector<1x16xf32>
    %226 = vector.extract_strided_slice %117 {offsets = [5, 0], sizes = [1, 4], strides = [1, 1]} : vector<8x8xf32> to vector<1x4xf32>
    %227 = vector.extract_strided_slice %117 {offsets = [5, 4], sizes = [1, 4], strides = [1, 1]} : vector<8x8xf32> to vector<1x4xf32>
    %228 = vector.broadcast %226 : vector<1x4xf32> to vector<4x4xf32>
    %229 = arith.mulf %107, %228 : vector<4x4xf32>
    %cst_85 = arith.constant dense<0.000000e+00> : vector<4xf32>
    %230 = vector.multi_reduction <add>, %229, %cst_85 [1] : vector<4x4xf32> to vector<4xf32>
    %231 = vector.shape_cast %230 : vector<4xf32> to vector<4x1xf32>
    %232 = vector.broadcast %223 : vector<1x16xf32> to vector<4x16xf32>
    %233 = arith.mulf %232, %102 : vector<4x16xf32>
    %234 = math.exp %233 : vector<4x16xf32>
    %235 = arith.mulf %234, %218 : vector<4x16xf32>
    %236 = vector.broadcast %225 : vector<1x16xf32> to vector<4x16xf32>
    %237 = vector.broadcast %231 : vector<4x1xf32> to vector<4x16xf32>
    %238 = arith.mulf %236, %237 : vector<4x16xf32>
    %239 = arith.addf %235, %238 : vector<4x16xf32>
    %cst_86 = arith.constant dense<0.000000e+00> : vector<1x16xf32>
    %240 = tpu.matmul %227, %239, %cst_86 {dimension_numbers = #tpu.dot_dimension_numbers<[1], [0], [0], [1], [0, 0, 1, 1], [], []>} : vector<1x4xf32>, vector<4x16xf32>, vector<1x16xf32> -> vector<1x16xf32>
    %c5_i32 = arith.constant 5 : i32
    %241 = arith.addi %111, %c5_i32 : i32
    %242 = arith.index_cast %241 : i32 to index
    %c0_87 = arith.constant 0 : index
    %243 = vector.load %arg18[%242, %c0_87] : memref<16x16xf32, #tpu.memory_space<vmem>>, vector<1x16xf32>
    tpu.vector_store %arg18[%242, %c0_87], %240 {strides = array<i32>} : memref<16x16xf32, #tpu.memory_space<vmem>>, vector<1x16xf32>,
    %244 = vector.extract_strided_slice %113 {offsets = [6, 0], sizes = [1, 16], strides = [1, 1]} : vector<8x16xf32> to vector<1x16xf32>
    %245 = vector.extract_strided_slice %115 {offsets = [6, 0], sizes = [1, 16], strides = [1, 1]} : vector<8x16xf32> to vector<1x16xf32>
    %246 = arith.mulf %244, %245 : vector<1x16xf32>
    %247 = vector.extract_strided_slice %117 {offsets = [6, 0], sizes = [1, 4], strides = [1, 1]} : vector<8x8xf32> to vector<1x4xf32>
    %248 = vector.extract_strided_slice %117 {offsets = [6, 4], sizes = [1, 4], strides = [1, 1]} : vector<8x8xf32> to vector<1x4xf32>
    %249 = vector.broadcast %247 : vector<1x4xf32> to vector<4x4xf32>
    %250 = arith.mulf %107, %249 : vector<4x4xf32>
    %cst_88 = arith.constant dense<0.000000e+00> : vector<4xf32>
    %251 = vector.multi_reduction <add>, %250, %cst_88 [1] : vector<4x4xf32> to vector<4xf32>
    %252 = vector.shape_cast %251 : vector<4xf32> to vector<4x1xf32>
    %253 = vector.broadcast %244 : vector<1x16xf32> to vector<4x16xf32>
    %254 = arith.mulf %253, %102 : vector<4x16xf32>
    %255 = math.exp %254 : vector<4x16xf32>
    %256 = arith.mulf %255, %239 : vector<4x16xf32>
    %257 = vector.broadcast %246 : vector<1x16xf32> to vector<4x16xf32>
    %258 = vector.broadcast %252 : vector<4x1xf32> to vector<4x16xf32>
    %259 = arith.mulf %257, %258 : vector<4x16xf32>
    %260 = arith.addf %256, %259 : vector<4x16xf32>
    %cst_89 = arith.constant dense<0.000000e+00> : vector<1x16xf32>
    %261 = tpu.matmul %248, %260, %cst_89 {dimension_numbers = #tpu.dot_dimension_numbers<[1], [0], [0], [1], [0, 0, 1, 1], [], []>} : vector<1x4xf32>, vector<4x16xf32>, vector<1x16xf32> -> vector<1x16xf32>
    %c6_i32 = arith.constant 6 : i32
    %262 = arith.addi %111, %c6_i32 : i32
    %263 = arith.index_cast %262 : i32 to index
    %c0_90 = arith.constant 0 : index
    %264 = vector.load %arg18[%263, %c0_90] : memref<16x16xf32, #tpu.memory_space<vmem>>, vector<1x16xf32>
    tpu.vector_store %arg18[%263, %c0_90], %261 {strides = array<i32>} : memref<16x16xf32, #tpu.memory_space<vmem>>, vector<1x16xf32>,
    %265 = vector.extract_strided_slice %113 {offsets = [7, 0], sizes = [1, 16], strides = [1, 1]} : vector<8x16xf32> to vector<1x16xf32>
    %266 = vector.extract_strided_slice %115 {offsets = [7, 0], sizes = [1, 16], strides = [1, 1]} : vector<8x16xf32> to vector<1x16xf32>
    %267 = arith.mulf %265, %266 : vector<1x16xf32>
    %268 = vector.extract_strided_slice %117 {offsets = [7, 0], sizes = [1, 4], strides = [1, 1]} : vector<8x8xf32> to vector<1x4xf32>
    %269 = vector.extract_strided_slice %117 {offsets = [7, 4], sizes = [1, 4], strides = [1, 1]} : vector<8x8xf32> to vector<1x4xf32>
    %270 = vector.broadcast %268 : vector<1x4xf32> to vector<4x4xf32>
    %271 = arith.mulf %107, %270 : vector<4x4xf32>
    %cst_91 = arith.constant dense<0.000000e+00> : vector<4xf32>
    %272 = vector.multi_reduction <add>, %271, %cst_91 [1] : vector<4x4xf32> to vector<4xf32>
    %273 = vector.shape_cast %272 : vector<4xf32> to vector<4x1xf32>
    %274 = vector.broadcast %265 : vector<1x16xf32> to vector<4x16xf32>
    %275 = arith.mulf %274, %102 : vector<4x16xf32>
    %276 = math.exp %275 : vector<4x16xf32>
    %277 = arith.mulf %276, %260 : vector<4x16xf32>
    %278 = vector.broadcast %267 : vector<1x16xf32> to vector<4x16xf32>
    %279 = vector.broadcast %273 : vector<4x1xf32> to vector<4x16xf32>
    %280 = arith.mulf %278, %279 : vector<4x16xf32>
    %281 = arith.addf %277, %280 : vector<4x16xf32>
    %cst_92 = arith.constant dense<0.000000e+00> : vector<1x16xf32>
    %282 = tpu.matmul %269, %281, %cst_92 {dimension_numbers = #tpu.dot_dimension_numbers<[1], [0], [0], [1], [0, 0, 1, 1], [], []>} : vector<1x4xf32>, vector<4x16xf32>, vector<1x16xf32> -> vector<1x16xf32>
    %c7_i32 = arith.constant 7 : i32
    %283 = arith.addi %111, %c7_i32 : i32
    %284 = arith.index_cast %283 : i32 to index
    %c0_93 = arith.constant 0 : index
    %285 = vector.load %arg18[%284, %c0_93] : memref<16x16xf32, #tpu.memory_space<vmem>>, vector<1x16xf32>
    tpu.vector_store %arg18[%284, %c0_93], %282 {strides = array<i32>} : memref<16x16xf32, #tpu.memory_space<vmem>>, vector<1x16xf32>,
    %c1_i32_94 = arith.constant 1 : i32
    %cst_95 = arith.constant 0.000000e+00 : f32
    %286 = vector.broadcast %cst_95 : f32 to vector<4x16xf32>
    %c0_i32_96 = arith.constant 0 : i32
    %c0_i32_97 = arith.constant 0 : i32
    %287 = arith.subi %c0_i32_97, %c0_i32_96 : i32
    %c8_i32_98 = arith.constant 8 : i32
    %288 = arith.muli %287, %c8_i32_98 : i32
    %c8_i32_99 = arith.constant 8 : i32
    %289 = arith.addi %c8_i32_99, %288 : i32
    %290 = tpu.assume_multiple %289, 8 : i32
    %291 = arith.index_cast %290 : i32 to index
    %c0_100 = arith.constant 0 : index
    %292 = vector.load %arg16[%291, %c0_100] : memref<16x16xf32, #tpu.memory_space<vmem>>, vector<8x16xf32>
    %293 = arith.index_cast %290 : i32 to index
    %c0_101 = arith.constant 0 : index
    %294 = vector.load %arg15[%293, %c0_101] : memref<16x16xf32, #tpu.memory_space<vmem>>, vector<8x16xf32>
    %295 = arith.index_cast %290 : i32 to index
    %c0_102 = arith.constant 0 : index
    %296 = vector.load %arg17[%295, %c0_102] : memref<16x8xf32, #tpu.memory_space<vmem>>, vector<8x8xf32>
    %297 = vector.extract_strided_slice %292 {offsets = [7, 0], sizes = [1, 16], strides = [1, 1]} : vector<8x16xf32> to vector<1x16xf32>
    %298 = vector.extract_strided_slice %294 {offsets = [7, 0], sizes = [1, 16], strides = [1, 1]} : vector<8x16xf32> to vector<1x16xf32>
    %299 = arith.mulf %297, %298 : vector<1x16xf32>
    %300 = vector.extract_strided_slice %296 {offsets = [7, 0], sizes = [1, 4], strides = [1, 1]} : vector<8x8xf32> to vector<1x4xf32>
    %301 = vector.extract_strided_slice %296 {offsets = [7, 4], sizes = [1, 4], strides = [1, 1]} : vector<8x8xf32> to vector<1x4xf32>
    %302 = vector.broadcast %300 : vector<1x4xf32> to vector<4x4xf32>
    %303 = arith.mulf %107, %302 : vector<4x4xf32>
    %cst_103 = arith.constant dense<0.000000e+00> : vector<4xf32>
    %304 = vector.multi_reduction <add>, %303, %cst_103 [1] : vector<4x4xf32> to vector<4xf32>
    %305 = vector.shape_cast %304 : vector<4xf32> to vector<4x1xf32>
    %306 = vector.broadcast %297 : vector<1x16xf32> to vector<4x16xf32>
    %307 = arith.mulf %306, %102 : vector<4x16xf32>
    %308 = math.exp %307 : vector<4x16xf32>
    %309 = arith.mulf %308, %286 : vector<4x16xf32>
    %310 = vector.broadcast %299 : vector<1x16xf32> to vector<4x16xf32>
    %311 = vector.broadcast %305 : vector<4x1xf32> to vector<4x16xf32>
    %312 = arith.mulf %310, %311 : vector<4x16xf32>
    %313 = arith.addf %309, %312 : vector<4x16xf32>
    %cst_104 = arith.constant dense<0.000000e+00> : vector<1x16xf32>
    %314 = tpu.matmul %301, %313, %cst_104 {dimension_numbers = #tpu.dot_dimension_numbers<[1], [0], [0], [1], [0, 0, 1, 1], [], []>} : vector<1x4xf32>, vector<4x16xf32>, vector<1x16xf32> -> vector<1x16xf32>
    %c7_i32_105 = arith.constant 7 : i32
    %315 = arith.addi %290, %c7_i32_105 : i32
    %316 = arith.index_cast %315 : i32 to index
    %c0_106 = arith.constant 0 : index
    %317 = vector.load %arg18[%316, %c0_106] : memref<16x16xf32, #tpu.memory_space<vmem>>, vector<1x16xf32>
    tpu.vector_store %arg18[%316, %c0_106], %314 {strides = array<i32>} : memref<16x16xf32, #tpu.memory_space<vmem>>, vector<1x16xf32>,
    %318 = vector.extract_strided_slice %292 {offsets = [6, 0], sizes = [1, 16], strides = [1, 1]} : vector<8x16xf32> to vector<1x16xf32>
    %319 = vector.extract_strided_slice %294 {offsets = [6, 0], sizes = [1, 16], strides = [1, 1]} : vector<8x16xf32> to vector<1x16xf32>
    %320 = arith.mulf %318, %319 : vector<1x16xf32>
    %321 = vector.extract_strided_slice %296 {offsets = [6, 0], sizes = [1, 4], strides = [1, 1]} : vector<8x8xf32> to vector<1x4xf32>
    %322 = vector.extract_strided_slice %296 {offsets = [6, 4], sizes = [1, 4], strides = [1, 1]} : vector<8x8xf32> to vector<1x4xf32>
    %323 = vector.broadcast %321 : vector<1x4xf32> to vector<4x4xf32>
    %324 = arith.mulf %107, %323 : vector<4x4xf32>
    %cst_107 = arith.constant dense<0.000000e+00> : vector<4xf32>
    %325 = vector.multi_reduction <add>, %324, %cst_107 [1] : vector<4x4xf32> to vector<4xf32>
    %326 = vector.shape_cast %325 : vector<4xf32> to vector<4x1xf32>
    %327 = vector.broadcast %318 : vector<1x16xf32> to vector<4x16xf32>
    %328 = arith.mulf %327, %102 : vector<4x16xf32>
    %329 = math.exp %328 : vector<4x16xf32>
    %330 = arith.mulf %329, %313 : vector<4x16xf32>
    %331 = vector.broadcast %320 : vector<1x16xf32> to vector<4x16xf32>
    %332 = vector.broadcast %326 : vector<4x1xf32> to vector<4x16xf32>
    %333 = arith.mulf %331, %332 : vector<4x16xf32>
    %334 = arith.addf %330, %333 : vector<4x16xf32>
    %cst_108 = arith.constant dense<0.000000e+00> : vector<1x16xf32>
    %335 = tpu.matmul %322, %334, %cst_108 {dimension_numbers = #tpu.dot_dimension_numbers<[1], [0], [0], [1], [0, 0, 1, 1], [], []>} : vector<1x4xf32>, vector<4x16xf32>, vector<1x16xf32> -> vector<1x16xf32>
    %c6_i32_109 = arith.constant 6 : i32
    %336 = arith.addi %290, %c6_i32_109 : i32
    %337 = arith.index_cast %336 : i32 to index
    %c0_110 = arith.constant 0 : index
    %338 = vector.load %arg18[%337, %c0_110] : memref<16x16xf32, #tpu.memory_space<vmem>>, vector<1x16xf32>
    tpu.vector_store %arg18[%337, %c0_110], %335 {strides = array<i32>} : memref<16x16xf32, #tpu.memory_space<vmem>>, vector<1x16xf32>,
    %339 = vector.extract_strided_slice %292 {offsets = [5, 0], sizes = [1, 16], strides = [1, 1]} : vector<8x16xf32> to vector<1x16xf32>
    %340 = vector.extract_strided_slice %294 {offsets = [5, 0], sizes = [1, 16], strides = [1, 1]} : vector<8x16xf32> to vector<1x16xf32>
    %341 = arith.mulf %339, %340 : vector<1x16xf32>
    %342 = vector.extract_strided_slice %296 {offsets = [5, 0], sizes = [1, 4], strides = [1, 1]} : vector<8x8xf32> to vector<1x4xf32>
    %343 = vector.extract_strided_slice %296 {offsets = [5, 4], sizes = [1, 4], strides = [1, 1]} : vector<8x8xf32> to vector<1x4xf32>
    %344 = vector.broadcast %342 : vector<1x4xf32> to vector<4x4xf32>
    %345 = arith.mulf %107, %344 : vector<4x4xf32>
    %cst_111 = arith.constant dense<0.000000e+00> : vector<4xf32>
    %346 = vector.multi_reduction <add>, %345, %cst_111 [1] : vector<4x4xf32> to vector<4xf32>
    %347 = vector.shape_cast %346 : vector<4xf32> to vector<4x1xf32>
    %348 = vector.broadcast %339 : vector<1x16xf32> to vector<4x16xf32>
    %349 = arith.mulf %348, %102 : vector<4x16xf32>
    %350 = math.exp %349 : vector<4x16xf32>
    %351 = arith.mulf %350, %334 : vector<4x16xf32>
    %352 = vector.broadcast %341 : vector<1x16xf32> to vector<4x16xf32>
    %353 = vector.broadcast %347 : vector<4x1xf32> to vector<4x16xf32>
    %354 = arith.mulf %352, %353 : vector<4x16xf32>
    %355 = arith.addf %351, %354 : vector<4x16xf32>
    %cst_112 = arith.constant dense<0.000000e+00> : vector<1x16xf32>
    %356 = tpu.matmul %343, %355, %cst_112 {dimension_numbers = #tpu.dot_dimension_numbers<[1], [0], [0], [1], [0, 0, 1, 1], [], []>} : vector<1x4xf32>, vector<4x16xf32>, vector<1x16xf32> -> vector<1x16xf32>
    %c5_i32_113 = arith.constant 5 : i32
    %357 = arith.addi %290, %c5_i32_113 : i32
    %358 = arith.index_cast %357 : i32 to index
    %c0_114 = arith.constant 0 : index
    %359 = vector.load %arg18[%358, %c0_114] : memref<16x16xf32, #tpu.memory_space<vmem>>, vector<1x16xf32>
    tpu.vector_store %arg18[%358, %c0_114], %356 {strides = array<i32>} : memref<16x16xf32, #tpu.memory_space<vmem>>, vector<1x16xf32>,
    %360 = vector.extract_strided_slice %292 {offsets = [4, 0], sizes = [1, 16], strides = [1, 1]} : vector<8x16xf32> to vector<1x16xf32>
    %361 = vector.extract_strided_slice %294 {offsets = [4, 0], sizes = [1, 16], strides = [1, 1]} : vector<8x16xf32> to vector<1x16xf32>
    %362 = arith.mulf %360, %361 : vector<1x16xf32>
    %363 = vector.extract_strided_slice %296 {offsets = [4, 0], sizes = [1, 4], strides = [1, 1]} : vector<8x8xf32> to vector<1x4xf32>
    %364 = vector.extract_strided_slice %296 {offsets = [4, 4], sizes = [1, 4], strides = [1, 1]} : vector<8x8xf32> to vector<1x4xf32>
    %365 = vector.broadcast %363 : vector<1x4xf32> to vector<4x4xf32>
    %366 = arith.mulf %107, %365 : vector<4x4xf32>
    %cst_115 = arith.constant dense<0.000000e+00> : vector<4xf32>
    %367 = vector.multi_reduction <add>, %366, %cst_115 [1] : vector<4x4xf32> to vector<4xf32>
    %368 = vector.shape_cast %367 : vector<4xf32> to vector<4x1xf32>
    %369 = vector.broadcast %360 : vector<1x16xf32> to vector<4x16xf32>
    %370 = arith.mulf %369, %102 : vector<4x16xf32>
    %371 = math.exp %370 : vector<4x16xf32>
    %372 = arith.mulf %371, %355 : vector<4x16xf32>
    %373 = vector.broadcast %362 : vector<1x16xf32> to vector<4x16xf32>
    %374 = vector.broadcast %368 : vector<4x1xf32> to vector<4x16xf32>
    %375 = arith.mulf %373, %374 : vector<4x16xf32>
    %376 = arith.addf %372, %375 : vector<4x16xf32>
    %cst_116 = arith.constant dense<0.000000e+00> : vector<1x16xf32>
    %377 = tpu.matmul %364, %376, %cst_116 {dimension_numbers = #tpu.dot_dimension_numbers<[1], [0], [0], [1], [0, 0, 1, 1], [], []>} : vector<1x4xf32>, vector<4x16xf32>, vector<1x16xf32> -> vector<1x16xf32>
    %c4_i32_117 = arith.constant 4 : i32
    %378 = arith.addi %290, %c4_i32_117 : i32
    %379 = arith.index_cast %378 : i32 to index
    %c0_118 = arith.constant 0 : index
    %380 = vector.load %arg18[%379, %c0_118] : memref<16x16xf32, #tpu.memory_space<vmem>>, vector<1x16xf32>
    tpu.vector_store %arg18[%379, %c0_118], %377 {strides = array<i32>} : memref<16x16xf32, #tpu.memory_space<vmem>>, vector<1x16xf32>,
    %381 = vector.extract_strided_slice %292 {offsets = [3, 0], sizes = [1, 16], strides = [1, 1]} : vector<8x16xf32> to vector<1x16xf32>
    %382 = vector.extract_strided_slice %294 {offsets = [3, 0], sizes = [1, 16], strides = [1, 1]} : vector<8x16xf32> to vector<1x16xf32>
    %383 = arith.mulf %381, %382 : vector<1x16xf32>
    %384 = vector.extract_strided_slice %296 {offsets = [3, 0], sizes = [1, 4], strides = [1, 1]} : vector<8x8xf32> to vector<1x4xf32>
    %385 = vector.extract_strided_slice %296 {offsets = [3, 4], sizes = [1, 4], strides = [1, 1]} : vector<8x8xf32> to vector<1x4xf32>
    %386 = vector.broadcast %384 : vector<1x4xf32> to vector<4x4xf32>
    %387 = arith.mulf %107, %386 : vector<4x4xf32>
    %cst_119 = arith.constant dense<0.000000e+00> : vector<4xf32>
    %388 = vector.multi_reduction <add>, %387, %cst_119 [1] : vector<4x4xf32> to vector<4xf32>
    %389 = vector.shape_cast %388 : vector<4xf32> to vector<4x1xf32>
    %390 = vector.broadcast %381 : vector<1x16xf32> to vector<4x16xf32>
    %391 = arith.mulf %390, %102 : vector<4x16xf32>
    %392 = math.exp %391 : vector<4x16xf32>
    %393 = arith.mulf %392, %376 : vector<4x16xf32>
    %394 = vector.broadcast %383 : vector<1x16xf32> to vector<4x16xf32>
    %395 = vector.broadcast %389 : vector<4x1xf32> to vector<4x16xf32>
    %396 = arith.mulf %394, %395 : vector<4x16xf32>
    %397 = arith.addf %393, %396 : vector<4x16xf32>
    %cst_120 = arith.constant dense<0.000000e+00> : vector<1x16xf32>
    %398 = tpu.matmul %385, %397, %cst_120 {dimension_numbers = #tpu.dot_dimension_numbers<[1], [0], [0], [1], [0, 0, 1, 1], [], []>} : vector<1x4xf32>, vector<4x16xf32>, vector<1x16xf32> -> vector<1x16xf32>
    %c3_i32_121 = arith.constant 3 : i32
    %399 = arith.addi %290, %c3_i32_121 : i32
    %400 = arith.index_cast %399 : i32 to index
    %c0_122 = arith.constant 0 : index
    %401 = vector.load %arg18[%400, %c0_122] : memref<16x16xf32, #tpu.memory_space<vmem>>, vector<1x16xf32>
    tpu.vector_store %arg18[%400, %c0_122], %398 {strides = array<i32>} : memref<16x16xf32, #tpu.memory_space<vmem>>, vector<1x16xf32>,
    %402 = vector.extract_strided_slice %292 {offsets = [2, 0], sizes = [1, 16], strides = [1, 1]} : vector<8x16xf32> to vector<1x16xf32>
    %403 = vector.extract_strided_slice %294 {offsets = [2, 0], sizes = [1, 16], strides = [1, 1]} : vector<8x16xf32> to vector<1x16xf32>
    %404 = arith.mulf %402, %403 : vector<1x16xf32>
    %405 = vector.extract_strided_slice %296 {offsets = [2, 0], sizes = [1, 4], strides = [1, 1]} : vector<8x8xf32> to vector<1x4xf32>
    %406 = vector.extract_strided_slice %296 {offsets = [2, 4], sizes = [1, 4], strides = [1, 1]} : vector<8x8xf32> to vector<1x4xf32>
    %407 = vector.broadcast %405 : vector<1x4xf32> to vector<4x4xf32>
    %408 = arith.mulf %107, %407 : vector<4x4xf32>
    %cst_123 = arith.constant dense<0.000000e+00> : vector<4xf32>
    %409 = vector.multi_reduction <add>, %408, %cst_123 [1] : vector<4x4xf32> to vector<4xf32>
    %410 = vector.shape_cast %409 : vector<4xf32> to vector<4x1xf32>
    %411 = vector.broadcast %402 : vector<1x16xf32> to vector<4x16xf32>
    %412 = arith.mulf %411, %102 : vector<4x16xf32>
    %413 = math.exp %412 : vector<4x16xf32>
    %414 = arith.mulf %413, %397 : vector<4x16xf32>
    %415 = vector.broadcast %404 : vector<1x16xf32> to vector<4x16xf32>
    %416 = vector.broadcast %410 : vector<4x1xf32> to vector<4x16xf32>
    %417 = arith.mulf %415, %416 : vector<4x16xf32>
    %418 = arith.addf %414, %417 : vector<4x16xf32>
    %cst_124 = arith.constant dense<0.000000e+00> : vector<1x16xf32>
    %419 = tpu.matmul %406, %418, %cst_124 {dimension_numbers = #tpu.dot_dimension_numbers<[1], [0], [0], [1], [0, 0, 1, 1], [], []>} : vector<1x4xf32>, vector<4x16xf32>, vector<1x16xf32> -> vector<1x16xf32>
    %c2_i32_125 = arith.constant 2 : i32
    %420 = arith.addi %290, %c2_i32_125 : i32
    %421 = arith.index_cast %420 : i32 to index
    %c0_126 = arith.constant 0 : index
    %422 = vector.load %arg18[%421, %c0_126] : memref<16x16xf32, #tpu.memory_space<vmem>>, vector<1x16xf32>
    tpu.vector_store %arg18[%421, %c0_126], %419 {strides = array<i32>} : memref<16x16xf32, #tpu.memory_space<vmem>>, vector<1x16xf32>,
    %423 = vector.extract_strided_slice %292 {offsets = [1, 0], sizes = [1, 16], strides = [1, 1]} : vector<8x16xf32> to vector<1x16xf32>
    %424 = vector.extract_strided_slice %294 {offsets = [1, 0], sizes = [1, 16], strides = [1, 1]} : vector<8x16xf32> to vector<1x16xf32>
    %425 = arith.mulf %423, %424 : vector<1x16xf32>
    %426 = vector.extract_strided_slice %296 {offsets = [1, 0], sizes = [1, 4], strides = [1, 1]} : vector<8x8xf32> to vector<1x4xf32>
    %427 = vector.extract_strided_slice %296 {offsets = [1, 4], sizes = [1, 4], strides = [1, 1]} : vector<8x8xf32> to vector<1x4xf32>
    %428 = vector.broadcast %426 : vector<1x4xf32> to vector<4x4xf32>
    %429 = arith.mulf %107, %428 : vector<4x4xf32>
    %cst_127 = arith.constant dense<0.000000e+00> : vector<4xf32>
    %430 = vector.multi_reduction <add>, %429, %cst_127 [1] : vector<4x4xf32> to vector<4xf32>
    %431 = vector.shape_cast %430 : vector<4xf32> to vector<4x1xf32>
    %432 = vector.broadcast %423 : vector<1x16xf32> to vector<4x16xf32>
    %433 = arith.mulf %432, %102 : vector<4x16xf32>
    %434 = math.exp %433 : vector<4x16xf32>
    %435 = arith.mulf %434, %418 : vector<4x16xf32>
    %436 = vector.broadcast %425 : vector<1x16xf32> to vector<4x16xf32>
    %437 = vector.broadcast %431 : vector<4x1xf32> to vector<4x16xf32>
    %438 = arith.mulf %436, %437 : vector<4x16xf32>
    %439 = arith.addf %435, %438 : vector<4x16xf32>
    %cst_128 = arith.constant dense<0.000000e+00> : vector<1x16xf32>
    %440 = tpu.matmul %427, %439, %cst_128 {dimension_numbers = #tpu.dot_dimension_numbers<[1], [0], [0], [1], [0, 0, 1, 1], [], []>} : vector<1x4xf32>, vector<4x16xf32>, vector<1x16xf32> -> vector<1x16xf32>
    %c1_i32_129 = arith.constant 1 : i32
    %441 = arith.addi %290, %c1_i32_129 : i32
    %442 = arith.index_cast %441 : i32 to index
    %c0_130 = arith.constant 0 : index
    %443 = vector.load %arg18[%442, %c0_130] : memref<16x16xf32, #tpu.memory_space<vmem>>, vector<1x16xf32>
    tpu.vector_store %arg18[%442, %c0_130], %440 {strides = array<i32>} : memref<16x16xf32, #tpu.memory_space<vmem>>, vector<1x16xf32>,
    %444 = vector.extract_strided_slice %292 {offsets = [0, 0], sizes = [1, 16], strides = [1, 1]} : vector<8x16xf32> to vector<1x16xf32>
    %445 = vector.extract_strided_slice %294 {offsets = [0, 0], sizes = [1, 16], strides = [1, 1]} : vector<8x16xf32> to vector<1x16xf32>
    %446 = arith.mulf %444, %445 : vector<1x16xf32>
    %447 = vector.extract_strided_slice %296 {offsets = [0, 0], sizes = [1, 4], strides = [1, 1]} : vector<8x8xf32> to vector<1x4xf32>
    %448 = vector.extract_strided_slice %296 {offsets = [0, 4], sizes = [1, 4], strides = [1, 1]} : vector<8x8xf32> to vector<1x4xf32>
    %449 = vector.broadcast %447 : vector<1x4xf32> to vector<4x4xf32>
    %450 = arith.mulf %107, %449 : vector<4x4xf32>
    %cst_131 = arith.constant dense<0.000000e+00> : vector<4xf32>
    %451 = vector.multi_reduction <add>, %450, %cst_131 [1] : vector<4x4xf32> to vector<4xf32>
    %452 = vector.shape_cast %451 : vector<4xf32> to vector<4x1xf32>
    %453 = vector.broadcast %444 : vector<1x16xf32> to vector<4x16xf32>
    %454 = arith.mulf %453, %102 : vector<4x16xf32>
    %455 = math.exp %454 : vector<4x16xf32>
    %456 = arith.mulf %455, %439 : vector<4x16xf32>
    %457 = vector.broadcast %446 : vector<1x16xf32> to vector<4x16xf32>
    %458 = vector.broadcast %452 : vector<4x1xf32> to vector<4x16xf32>
    %459 = arith.mulf %457, %458 : vector<4x16xf32>
    %460 = arith.addf %456, %459 : vector<4x16xf32>
    %cst_132 = arith.constant dense<0.000000e+00> : vector<1x16xf32>
    %461 = tpu.matmul %448, %460, %cst_132 {dimension_numbers = #tpu.dot_dimension_numbers<[1], [0], [0], [1], [0, 0, 1, 1], [], []>} : vector<1x4xf32>, vector<4x16xf32>, vector<1x16xf32> -> vector<1x16xf32>
    %c0_i32_133 = arith.constant 0 : i32
    %462 = arith.addi %290, %c0_i32_133 : i32
    %463 = arith.index_cast %462 : i32 to index
    %c0_134 = arith.constant 0 : index
    %464 = vector.load %arg18[%463, %c0_134] : memref<16x16xf32, #tpu.memory_space<vmem>>, vector<1x16xf32>
    tpu.vector_store %arg18[%463, %c0_134], %461 {strides = array<i32>} : memref<16x16xf32, #tpu.memory_space<vmem>>, vector<1x16xf32>,
    %c1_i32_135 = arith.constant 1 : i32
    %c0_136 = arith.constant 0 : index
    %c0_137 = arith.constant 0 : index
    %465 = vector.load %arg18[%c0_136, %c0_137] : memref<16x16xf32, #tpu.memory_space<vmem>>, vector<16x16xf32>
    %c0_138 = arith.constant 0 : index
    %c0_139 = arith.constant 0 : index
    %466 = vector.load %arg15[%c0_138, %c0_139] : memref<16x16xf32, #tpu.memory_space<vmem>>, vector<16x16xf32>
    %c0_140 = arith.constant 0 : index
    %c0_141 = arith.constant 0 : index
    %467 = vector.load %arg11[%c0_140, %c0_141] : memref<1x16xf32, #tpu.memory_space<vmem>>, vector<1x16xf32>
    %468 = vector.broadcast %467 : vector<1x16xf32> to vector<16x16xf32>
    %469 = arith.mulf %466, %468 : vector<16x16xf32>
    %470 = arith.addf %465, %469 : vector<16x16xf32>
    %cst_142 = arith.constant 0.000000e+00 : f32
    %471 = vector.broadcast %cst_142 : f32 to vector<8x16xf32>
    %472 = arith.subf %471, %27 : vector<8x16xf32>
    %473 = math.exp %472 : vector<8x16xf32>
    %cst_143 = arith.constant 1.000000e+00 : f32
    %474 = vector.broadcast %cst_143 : f32 to vector<8x16xf32>
    %475 = arith.addf %474, %473 : vector<8x16xf32>
    %476 = tpu.reciprocal %475 {approx = true} : vector<8x16xf32> -> vector<8x16xf32>
    %477 = arith.mulf %27, %476 : vector<8x16xf32>
    %478 = vector.extract_strided_slice %470 {offsets = [0, 0], sizes = [8, 16], strides = [1, 1]} : vector<16x16xf32> to vector<8x16xf32>
    %479 = vector.extract_strided_slice %470 {offsets = [8, 0], sizes = [8, 16], strides = [1, 1]} : vector<16x16xf32> to vector<8x16xf32>
    %480 = arith.addf %478, %479 : vector<8x16xf32>
    %481 = arith.mulf %480, %477 : vector<8x16xf32>
    %cst_144 = arith.constant 5.000000e-01 : f32
    %482 = vector.broadcast %cst_144 : f32 to vector<8x16xf32>
    %483 = arith.mulf %481, %482 : vector<8x16xf32>
    %c0_145 = arith.constant 0 : index
    %c0_146 = arith.constant 0 : index
    %484 = vector.load %arg12[%c0_145, %c0_146] : memref<16x8xf32, #tpu.memory_space<vmem>>, vector<16x8xf32>
    %cst_147 = arith.constant dense<0.000000e+00> : vector<8x8xf32>
    %485 = tpu.matmul %483, %484, %cst_147 {dimension_numbers = #tpu.dot_dimension_numbers<[1], [0], [0], [1], [0, 0, 1, 1], [], []>} : vector<8x16xf32>, vector<16x8xf32>, vector<8x8xf32> -> vector<8x8xf32>
    %486 = arith.addf %485, %1 : vector<8x8xf32>
    %c0_148 = arith.constant 0 : index
    %c0_149 = arith.constant 0 : index
    %c0_150 = arith.constant 0 : index
    %487 = vector.load %arg13[%c0_148, %c0_149, %c0_150] : memref<1x8x8xf32, #tpu.memory_space<vmem>>, vector<1x8x8xf32>
    %488 = vector.shape_cast %487 : vector<1x8x8xf32> to vector<8x8xf32>
    %489 = vector.shape_cast %486 : vector<8x8xf32> to vector<1x8x8xf32>
    tpu.vector_store %arg13[%c0_148, %c0_149, %c0_150], %489 {strides = array<i32>} : memref<1x8x8xf32, #tpu.memory_space<vmem>>, vector<1x8x8xf32>,
    return
  }
  func.func @transform_0(%arg0: i32) -> (i32, i32, i32) {
    %c0_i32 = arith.constant 0 : i32
    %c0_i32_0 = arith.constant 0 : i32
    %c0_i32_1 = arith.constant 0 : i32
    return %arg0, %c0_i32, %c0_i32_0 : i32, i32, i32
  }
  func.func @transform_1(%arg0: i32) -> (i32, i32) {
    %c0_i32 = arith.constant 0 : i32
    %c0_i32_0 = arith.constant 0 : i32
    %c0_i32_1 = arith.constant 0 : i32
    return %c0_i32, %c0_i32_0 : i32, i32
  }
  func.func @transform_2(%arg0: i32) -> (i32, i32) {
    %c0_i32 = arith.constant 0 : i32
    %c0_i32_0 = arith.constant 0 : i32
    %c0_i32_1 = arith.constant 0 : i32
    return %c0_i32, %c0_i32_0 : i32, i32
  }
  func.func @transform_3(%arg0: i32) -> (i32, i32) {
    %c0_i32 = arith.constant 0 : i32
    %c0_i32_0 = arith.constant 0 : i32
    %c0_i32_1 = arith.constant 0 : i32
    return %c0_i32, %c0_i32_0 : i32, i32
  }
  func.func @transform_4(%arg0: i32) -> (i32, i32) {
    %c0_i32 = arith.constant 0 : i32
    %c0_i32_0 = arith.constant 0 : i32
    %c0_i32_1 = arith.constant 0 : i32
    return %c0_i32, %c0_i32_0 : i32, i32
  }
  func.func @transform_5(%arg0: i32) -> (i32, i32) {
    %c0_i32 = arith.constant 0 : i32
    %c0_i32_0 = arith.constant 0 : i32
    %c0_i32_1 = arith.constant 0 : i32
    return %c0_i32, %c0_i32_0 : i32, i32
  }
  func.func @transform_6(%arg0: i32) -> (i32, i32) {
    %c0_i32 = arith.constant 0 : i32
    %c0_i32_0 = arith.constant 0 : i32
    %c0_i32_1 = arith.constant 0 : i32
    return %c0_i32, %c0_i32_0 : i32, i32
  }
  func.func @transform_7(%arg0: i32) -> (i32, i32) {
    %c0_i32 = arith.constant 0 : i32
    %c0_i32_0 = arith.constant 0 : i32
    %c0_i32_1 = arith.constant 0 : i32
    return %c0_i32, %c0_i32_0 : i32, i32
  }
  func.func @transform_8(%arg0: i32) -> (i32, i32) {
    %c0_i32 = arith.constant 0 : i32
    %c0_i32_0 = arith.constant 0 : i32
    %c0_i32_1 = arith.constant 0 : i32
    return %c0_i32, %c0_i32_0 : i32, i32
  }
  func.func @transform_9(%arg0: i32) -> (i32, i32) {
    %c0_i32 = arith.constant 0 : i32
    %c0_i32_0 = arith.constant 0 : i32
    %c0_i32_1 = arith.constant 0 : i32
    return %c0_i32, %c0_i32_0 : i32, i32
  }
  func.func @transform_10(%arg0: i32) -> (i32, i32) {
    %c0_i32 = arith.constant 0 : i32
    %c0_i32_0 = arith.constant 0 : i32
    %c0_i32_1 = arith.constant 0 : i32
    return %c0_i32, %c0_i32_0 : i32, i32
  }
  func.func @transform_11(%arg0: i32) -> (i32, i32) {
    %c0_i32 = arith.constant 0 : i32
    %c0_i32_0 = arith.constant 0 : i32
    %c0_i32_1 = arith.constant 0 : i32
    return %c0_i32, %c0_i32_0 : i32, i32
  }
  func.func @transform_12(%arg0: i32) -> (i32, i32, i32) {
    %c0_i32 = arith.constant 0 : i32
    %c0_i32_0 = arith.constant 0 : i32
    %c0_i32_1 = arith.constant 0 : i32
    return %arg0, %c0_i32, %c0_i32_0 : i32, i32, i32
  }
}

</mosaic_0001>

<llo_original>
// kernel: tpu_custom_call.1
$region0: #{tpu_custom_call.1}
  #allocation0 [shape = 'u32[]', space=smem, size = 0x4, offset = 0x4, fixed_abs, tag = 'smem constant byte address 0x4 - core index']
  #allocation1 [shape = 'u32[144,128]{1,0:T(1,128)}', space=vmem, size = 0x12000, scoped, tag = 'internal scratch']
  #allocation2 [shape = 'f32[14,16]{1,0:T(8,128)}', space=vmem, size = 0x2000, scoped, tag = 'scratch operand']
  #allocation3 [shape = 'f32[16,16]{1,0:T(8,128)}', space=vmem, size = 0x2000, scoped, tag = 'scratch operand']
  #allocation4 [shape = 'f32[16,16]{1,0:T(8,128)}', space=vmem, size = 0x2000, scoped, tag = 'scratch operand']
  #allocation5 [shape = 'f32[16,8]{1,0:T(8,128)}', space=vmem, size = 0x2000, scoped, tag = 'scratch operand']
  #allocation6 [shape = 'f32[16,16]{1,0:T(8,128)}', space=vmem, size = 0x2000, scoped, tag = 'scratch operand']
  %s0 = inlined_call_operand.vmem [shape: f32[2,8,8], index: 0, kind: input, shape index: {}]
  %s1 = inlined_call_operand.hbm [shape: f32[1,8], index: 1, kind: input, shape index: {}]
  %s2 = inlined_call_operand.hbm [shape: f32[1,8], index: 2, kind: input, shape index: {}]
  %s3 = inlined_call_operand.hbm [shape: f32[8,32], index: 3, kind: input, shape index: {}]
  %s4 = inlined_call_operand.hbm [shape: f32[4,16], index: 4, kind: input, shape index: {}]
  %s5 = inlined_call_operand.hbm [shape: f32[1,16], index: 5, kind: input, shape index: {}]
  %s6 = inlined_call_operand.vmem [shape: f32[16,10], index: 6, kind: input, shape index: {}]
  %s7 = inlined_call_operand.hbm [shape: f32[2,16], index: 7, kind: input, shape index: {}]
  %s8 = inlined_call_operand.hbm [shape: f32[1,16], index: 8, kind: input, shape index: {}]
  %s9 = inlined_call_operand.hbm [shape: f32[4,16], index: 9, kind: input, shape index: {}]
  %s10 = inlined_call_operand.vmem [shape: f32[1,16], index: 10, kind: input, shape index: {}]
  %s11 = inlined_call_operand.vmem [shape: f32[16,8], index: 11, kind: input, shape index: {}]
  %s12 = inlined_call_operand.hbm [shape: f32[2,8,8], index: 12, kind: output, shape index: {}]
  %s13 = sld [smem:[#allocation0]]
  $region113: #{tpu_custom_call.1} parent=0
    _
  %s15 = ssub.s32 1, %s13
  %s16 = scalar_select 0, %s15, %s13
  $region1: #{tpu_custom_call.1} parent=0
    #allocation7 [shape = 'u8[512]{0}', space=vmem, size = 0x400, scoped, tag = 'input window, operand 1, single buffered']
    #allocation8 [shape = 's32[2]{0}', space=sflag, size = 0x8, scoped, tag = 'scoped memory for tpu_custom_call.1']
    #allocation9 [shape = 's32[2]{0}', space=sflag, size = 0x8, scoped, tag = 'scoped memory for tpu_custom_call.1']
    #allocation10 [shape = 'u8[512]{0}', space=vmem, size = 0x400, scoped, tag = 'input window, operand 2, single buffered']
    #allocation11 [shape = 's32[1]{0}', space=sflag, size = 0x4, scoped, tag = 'scoped memory for tpu_custom_call.1']
    #allocation12 [shape = 'u8[4096]{0}', space=vmem, size = 0x1000, scoped, tag = 'input window, operand 3, single buffered']
    #allocation13 [shape = 'u8[2048]{0}', space=vmem, size = 0x800, scoped, tag = 'input window, operand 4, single buffered']
    #allocation14 [shape = 's32[1]{0}', space=sflag, size = 0x4, scoped, tag = 'scoped memory for tpu_custom_call.1']
    #allocation15 [shape = 'u8[512]{0}', space=vmem, size = 0x400, scoped, tag = 'input window, operand 5, single buffered']
    #allocation16 [shape = 'u8[1024]{0}', space=vmem, size = 0x400, scoped, tag = 'input window, operand 7, single buffered']
    #allocation17 [shape = 's32[1]{0}', space=sflag, size = 0x4, scoped, tag = 'scoped memory for tpu_custom_call.1']
    #allocation18 [shape = 'u8[512]{0}', space=vmem, size = 0x400, scoped, tag = 'input window, operand 8, single buffered']
    #allocation19 [shape = 'u8[2048]{0}', space=vmem, size = 0x800, scoped, tag = 'input window, operand 9, single buffered']
    #allocation20 [shape = 's32[1]{0}', space=sflag, size = 0x4, scoped, tag = 'scoped memory for tpu_custom_call.1']
    #allocation21 [shape = 'u8[8192]{0}', space=vmem, size = 0x2000, scoped, tag = 'output window, operand 0']
    %17 = vsyncpa [#allocation8], 0
    %18 = vsyncpa [#allocation11], 0
    %19 = vsyncpa [#allocation14], 0
    %20 = vsyncpa [#allocation17], 0
    %21 = vsyncpa [#allocation20], 0
    %22 = vsyncpa [#allocation9], 0
    %s23 = scalar_lea.sflag [#allocation9], 1
    %24 = vsyncpa %s23, 0
    loop: start=0, step=1, limit=4
    $region2: #{tpu_custom_call.1} parent=1 // loop_pre_header
      _
    $region3: #{tpu_custom_call.1} parent=1 // loop_header
      %s26 = sphi 0, %s30
      %p27 = scmp.ge.s32.totalorder %s26, 4
      %s36 = sphi 0, %s38
      %s39 = sphi 0, %s36
      %s40 = sphi 0, %s39
      %s56 = sphi 0, %s40
      %s60 = sphi 0, %s60
      %s62 = sphi 0, %s60
      %s63 = sphi 0, %s62
      %s77 = sphi 0, %s63
      %s81 = sphi 0, %s81
      %s83 = sphi 0, %s81
      %s84 = sphi 0, %s83
      %s98 = sphi 0, %s84
      %s102 = sphi 0, %s102
      %s104 = sphi 0, %s102
      %s105 = sphi 0, %s104
      %s119 = sphi 0, %s105
      %s123 = sphi 0, %s123
      %s125 = sphi 0, %s123
      %s126 = sphi 0, %s125
      %s140 = sphi 0, %s126
      %s144 = sphi 0, %s144
      %s146 = sphi 0, %s144
      %s147 = sphi 0, %s146
      %s161 = sphi 0, %s147
      %s165 = sphi 0, %s165
      %s167 = sphi 0, %s165
      %s168 = sphi 0, %s167
      %s182 = sphi 0, %s168
      %s186 = sphi 0, %s186
      %s188 = sphi 0, %s186
      %s189 = sphi 0, %s188
      %s203 = sphi 0, %s189
      %s207 = sphi 0, %s207
      %s209 = sphi 0, %s207
      %s210 = sphi 0, %s209
      %s224 = sphi 0, %s210
      %s228 = sphi 0, %s228
      %s230 = sphi 0, %s228
      %s231 = sphi 0, %s230
      %s245 = sphi 0, %s231
      %s249 = sphi 0, %s249
      %s251 = sphi 0, %s249
      %s252 = sphi 0, %s251
      %s266 = sphi 0, %s252
      %s270 = sphi 0, %s270
      %s272 = sphi 0, %s270
      %s273 = sphi 0, %s272
      %s287 = sphi 0, %s273
      %s293 = sphi 0, %s295
      %s296 = sphi 0, %s293
      %s297 = sphi 0, %s296
      %s313 = sphi 0, %s297
    $region4: #{tpu_custom_call.1} parent=1 // loop_header_branch
      %29 = sbr.rel (%p27) target = $region8
    $region5: #{tpu_custom_call.1} parent=1 // loop_body
      %s31 = ssub.s32 %s26, 1
      %s32 = ssub.s32 %s26, 2
      %s33 = sadd.s32 %s26, 1
      %s34 = ssub.s32 %s26, %s33
      %p35 = scmp.eq.s32.totalorder %s34, 0
      %s37 = sadd.s32 %s36, 1
      %s38 = scalar_select %p35, %s36, %s37
      %p41 = pneg %p35
      %p42 = scmp.eq.s32.totalorder %s26, 1
      %p43 = por %p41, %p42
      %p44 = scmp.ne.s32.totalorder %s36, %s39
      %p45 = scmp.eq.s32.totalorder %s26, 0
      %p46 = por %p44, %p45
      %p47 = scmp.ne.s32.totalorder %s36, %s39
      %p48 = scmp.eq.s32.totalorder %s31, 1
      %p49 = por %p47, %p48
      %p50 = scmp.ne.s32.totalorder %s39, %s40
      %p51 = scmp.eq.s32.totalorder %s31, 0
      %p52 = por %p50, %p51
      %p53 = scmp.ne.s32.totalorder %s39, %s40
      %p54 = scmp.eq.s32.totalorder %s32, 1
      %p55 = por %p53, %p54
      %p57 = scmp.ne.s32.totalorder %s40, %s56
      %p58 = scmp.eq.s32.totalorder %s32, 0
      %p59 = por %p57, %p58
      %s61 = sadd.s32 %s60, 1
      %p64 = scmp.eq.s32.totalorder %s26, 1
      %p65 = scmp.ne.s32.totalorder %s60, %s62
      %p66 = scmp.eq.s32.totalorder %s26, 0
      %p67 = por %p65, %p66
      %p68 = scmp.ne.s32.totalorder %s60, %s62
      %p69 = scmp.eq.s32.totalorder %s31, 1
      %p70 = por %p68, %p69
      %p71 = scmp.ne.s32.totalorder %s62, %s63
      %p72 = scmp.eq.s32.totalorder %s31, 0
      %p73 = por %p71, %p72
      %p74 = scmp.ne.s32.totalorder %s62, %s63
      %p75 = scmp.eq.s32.totalorder %s32, 1
      %p76 = por %p74, %p75
      %p78 = scmp.ne.s32.totalorder %s63, %s77
      %p79 = scmp.eq.s32.totalorder %s32, 0
      %p80 = por %p78, %p79
      %s82 = sadd.s32 %s81, 1
      %p85 = scmp.eq.s32.totalorder %s26, 1
      %p86 = scmp.ne.s32.totalorder %s81, %s83
      %p87 = scmp.eq.s32.totalorder %s26, 0
      %p88 = por %p86, %p87
      %p89 = scmp.ne.s32.totalorder %s81, %s83
      %p90 = scmp.eq.s32.totalorder %s31, 1
      %p91 = por %p89, %p90
      %p92 = scmp.ne.s32.totalorder %s83, %s84
      %p93 = scmp.eq.s32.totalorder %s31, 0
      %p94 = por %p92, %p93
      %p95 = scmp.ne.s32.totalorder %s83, %s84
      %p96 = scmp.eq.s32.totalorder %s32, 1
      %p97 = por %p95, %p96
      %p99 = scmp.ne.s32.totalorder %s84, %s98
      %p100 = scmp.eq.s32.totalorder %s32, 0
      %p101 = por %p99, %p100
      %s103 = sadd.s32 %s102, 1
      %p106 = scmp.eq.s32.totalorder %s26, 1
      %p107 = scmp.ne.s32.totalorder %s102, %s104
      %p108 = scmp.eq.s32.totalorder %s26, 0
      %p109 = por %p107, %p108
      %p110 = scmp.ne.s32.totalorder %s102, %s104
      %p111 = scmp.eq.s32.totalorder %s31, 1
      %p112 = por %p110, %p111
      %p113 = scmp.ne.s32.totalorder %s104, %s105
      %p114 = scmp.eq.s32.totalorder %s31, 0
      %p115 = por %p113, %p114
      %p116 = scmp.ne.s32.totalorder %s104, %s105
      %p117 = scmp.eq.s32.totalorder %s32, 1
      %p118 = por %p116, %p117
      %p120 = scmp.ne.s32.totalorder %s105, %s119
      %p121 = scmp.eq.s32.totalorder %s32, 0
      %p122 = por %p120, %p121
      %s124 = sadd.s32 %s123, 1
      %p127 = scmp.eq.s32.totalorder %s26, 1
      %p128 = scmp.ne.s32.totalorder %s123, %s125
      %p129 = scmp.eq.s32.totalorder %s26, 0
      %p130 = por %p128, %p129
      %p131 = scmp.ne.s32.totalorder %s123, %s125
      %p132 = scmp.eq.s32.totalorder %s31, 1
      %p133 = por %p131, %p132
      %p134 = scmp.ne.s32.totalorder %s125, %s126
      %p135 = scmp.eq.s32.totalorder %s31, 0
      %p136 = por %p134, %p135
      %p137 = scmp.ne.s32.totalorder %s125, %s126
      %p138 = scmp.eq.s32.totalorder %s32, 1
      %p139 = por %p137, %p138
      %p141 = scmp.ne.s32.totalorder %s126, %s140
      %p142 = scmp.eq.s32.totalorder %s32, 0
      %p143 = por %p141, %p142
      %s145 = sadd.s32 %s144, 1
      %p148 = scmp.eq.s32.totalorder %s26, 1
      %p149 = scmp.ne.s32.totalorder %s144, %s146
      %p150 = scmp.eq.s32.totalorder %s26, 0
      %p151 = por %p149, %p150
      %p152 = scmp.ne.s32.totalorder %s144, %s146
      %p153 = scmp.eq.s32.totalorder %s31, 1
      %p154 = por %p152, %p153
      %p155 = scmp.ne.s32.totalorder %s146, %s147
      %p156 = scmp.eq.s32.totalorder %s31, 0
      %p157 = por %p155, %p156
      %p158 = scmp.ne.s32.totalorder %s146, %s147
      %p159 = scmp.eq.s32.totalorder %s32, 1
      %p160 = por %p158, %p159
      %p162 = scmp.ne.s32.totalorder %s147, %s161
      %p163 = scmp.eq.s32.totalorder %s32, 0
      %p164 = por %p162, %p163
      %s166 = sadd.s32 %s165, 1
      %p169 = scmp.eq.s32.totalorder %s26, 1
      %p170 = scmp.ne.s32.totalorder %s165, %s167
      %p171 = scmp.eq.s32.totalorder %s26, 0
      %p172 = por %p170, %p171
      %p173 = scmp.ne.s32.totalorder %s165, %s167
      %p174 = scmp.eq.s32.totalorder %s31, 1
      %p175 = por %p173, %p174
      %p176 = scmp.ne.s32.totalorder %s167, %s168
      %p177 = scmp.eq.s32.totalorder %s31, 0
      %p178 = por %p176, %p177
      %p179 = scmp.ne.s32.totalorder %s167, %s168
      %p180 = scmp.eq.s32.totalorder %s32, 1
      %p181 = por %p179, %p180
      %p183 = scmp.ne.s32.totalorder %s168, %s182
      %p184 = scmp.eq.s32.totalorder %s32, 0
      %p185 = por %p183, %p184
      %s187 = sadd.s32 %s186, 1
      %p190 = scmp.eq.s32.totalorder %s26, 1
      %p191 = scmp.ne.s32.totalorder %s186, %s188
      %p192 = scmp.eq.s32.totalorder %s26, 0
      %p193 = por %p191, %p192
      %p194 = scmp.ne.s32.totalorder %s186, %s188
      %p195 = scmp.eq.s32.totalorder %s31, 1
      %p196 = por %p194, %p195
      %p197 = scmp.ne.s32.totalorder %s188, %s189
      %p198 = scmp.eq.s32.totalorder %s31, 0
      %p199 = por %p197, %p198
      %p200 = scmp.ne.s32.totalorder %s188, %s189
      %p201 = scmp.eq.s32.totalorder %s32, 1
      %p202 = por %p200, %p201
      %p204 = scmp.ne.s32.totalorder %s189, %s203
      %p205 = scmp.eq.s32.totalorder %s32, 0
      %p206 = por %p204, %p205
      %s208 = sadd.s32 %s207, 1
      %p211 = scmp.eq.s32.totalorder %s26, 1
      %p212 = scmp.ne.s32.totalorder %s207, %s209
      %p213 = scmp.eq.s32.totalorder %s26, 0
      %p214 = por %p212, %p213
      %p215 = scmp.ne.s32.totalorder %s207, %s209
      %p216 = scmp.eq.s32.totalorder %s31, 1
      %p217 = por %p215, %p216
      %p218 = scmp.ne.s32.totalorder %s209, %s210
      %p219 = scmp.eq.s32.totalorder %s31, 0
      %p220 = por %p218, %p219
      %p221 = scmp.ne.s32.totalorder %s209, %s210
      %p222 = scmp.eq.s32.totalorder %s32, 1
      %p223 = por %p221, %p222
      %p225 = scmp.ne.s32.totalorder %s210, %s224
      %p226 = scmp.eq.s32.totalorder %s32, 0
      %p227 = por %p225, %p226
      %s229 = sadd.s32 %s228, 1
      %p232 = scmp.eq.s32.totalorder %s26, 1
      %p233 = scmp.ne.s32.totalorder %s228, %s230
      %p234 = scmp.eq.s32.totalorder %s26, 0
      %p235 = por %p233, %p234
      %p236 = scmp.ne.s32.totalorder %s228, %s230
      %p237 = scmp.eq.s32.totalorder %s31, 1
      %p238 = por %p236, %p237
      %p239 = scmp.ne.s32.totalorder %s230, %s231
      %p240 = scmp.eq.s32.totalorder %s31, 0
      %p241 = por %p239, %p240
      %p242 = scmp.ne.s32.totalorder %s230, %s231
      %p243 = scmp.eq.s32.totalorder %s32, 1
      %p244 = por %p242, %p243
      %p246 = scmp.ne.s32.totalorder %s231, %s245
      %p247 = scmp.eq.s32.totalorder %s32, 0
      %p248 = por %p246, %p247
      %s250 = sadd.s32 %s249, 1
      %p253 = scmp.eq.s32.totalorder %s26, 1
      %p254 = scmp.ne.s32.totalorder %s249, %s251
      %p255 = scmp.eq.s32.totalorder %s26, 0
      %p256 = por %p254, %p255
      %p257 = scmp.ne.s32.totalorder %s249, %s251
      %p258 = scmp.eq.s32.totalorder %s31, 1
      %p259 = por %p257, %p258
      %p260 = scmp.ne.s32.totalorder %s251, %s252
      %p261 = scmp.eq.s32.totalorder %s31, 0
      %p262 = por %p260, %p261
      %p263 = scmp.ne.s32.totalorder %s251, %s252
      %p264 = scmp.eq.s32.totalorder %s32, 1
      %p265 = por %p263, %p264
      %p267 = scmp.ne.s32.totalorder %s252, %s266
      %p268 = scmp.eq.s32.totalorder %s32, 0
      %p269 = por %p267, %p268
      %s271 = sadd.s32 %s270, 1
      %p274 = scmp.eq.s32.totalorder %s26, 1
      %p275 = scmp.ne.s32.totalorder %s270, %s272
      %p276 = scmp.eq.s32.totalorder %s26, 0
      %p277 = por %p275, %p276
      %p278 = scmp.ne.s32.totalorder %s270, %s272
      %p279 = scmp.eq.s32.totalorder %s31, 1
      %p280 = por %p278, %p279
      %p281 = scmp.ne.s32.totalorder %s272, %s273
      %p282 = scmp.eq.s32.totalorder %s31, 0
      %p283 = por %p281, %p282
      %p284 = scmp.ne.s32.totalorder %s272, %s273
      %p285 = scmp.eq.s32.totalorder %s32, 1
      %p286 = por %p284, %p285
      %p288 = scmp.ne.s32.totalorder %s273, %s287
      %p289 = scmp.eq.s32.totalorder %s32, 0
      %p290 = por %p288, %p289
      %s291 = ssub.s32 %s26, %s33
      %p292 = scmp.eq.s32.totalorder %s291, 0
      %s294 = sadd.s32 %s293, 1
      %s295 = scalar_select %p292, %s293, %s294
      %p298 = pneg %p292
      %p299 = scmp.eq.s32.totalorder %s26, 1
      %p300 = por %p298, %p299
      %p301 = scmp.ne.s32.totalorder %s293, %s296
      %p302 = scmp.eq.s32.totalorder %s26, 0
      %p303 = por %p301, %p302
      %p304 = scmp.ne.s32.totalorder %s293, %s296
      %p305 = scmp.eq.s32.totalorder %s31, 1
      %p306 = por %p304, %p305
      %p307 = scmp.ne.s32.totalorder %s296, %s297
      %p308 = scmp.eq.s32.totalorder %s31, 0
      %p309 = por %p307, %p308
      %p310 = scmp.ne.s32.totalorder %s296, %s297
      %p311 = scmp.eq.s32.totalorder %s32, 1
      %p312 = por %p310, %p311
      %p314 = scmp.ne.s32.totalorder %s297, %s313
      %p315 = scmp.eq.s32.totalorder %s32, 0
      %p316 = por %p314, %p315
      %p317 = scmp.le.s32.totalorder 1, %s26
      %p318 = scmp.lt.s32.totalorder %s26, 3
      %p319 = pnand %p317, %p318
      %p320 = pneg %p319
      // Predicated region
      $region9: #{tpu_custom_call.1} parent=5 // pred_check
        _
      $region10: #{tpu_custom_call.1} parent=5 // pred_check_branch
        %322 = sbr.rel (%p319) target = $region12
      $region11: #{tpu_custom_call.1} parent=5 // pred_region
        %s323 = ssub.s32 %s26, 1
        // Predicated region
        $region13: #{tpu_custom_call.1} parent=11 // pred_check
          %p324 = pneg %p73
        $region14: #{tpu_custom_call.1} parent=11 // pred_check_branch
          %326 = sbr.rel (%p324) target = $region16
        $region15: #{tpu_custom_call.1} parent=11 // pred_region
          %s328 = ssub.s32 16, 16
          %329 = vsyncadd [#allocation8], %s328
          %s331 = sshll.u32 [#allocation7], 4
          %s332 = int_to_ptr.vmem [resolvable:$true] %s331
          %334 = dma.hbm_to_vmem [thread:$0]  %s1, 16, %s332, [#allocation8]
        $region16: #{tpu_custom_call.1} parent=11 // pred_fallthru
          _
        // Predicated region
        $region17: #{tpu_custom_call.1} parent=11 // pred_check
          %p335 = pneg %p94
        $region18: #{tpu_custom_call.1} parent=11 // pred_check_branch
          %337 = sbr.rel (%p335) target = $region20
        $region19: #{tpu_custom_call.1} parent=11 // pred_region
          %s339 = ssub.s32 16, 16
          %340 = vsyncadd [#allocation11], %s339
          %s342 = sshll.u32 [#allocation10], 4
          %s343 = int_to_ptr.vmem [resolvable:$true] %s342
          %345 = dma.hbm_to_vmem [thread:$0]  %s2, 16, %s343, [#allocation11]
        $region20: #{tpu_custom_call.1} parent=11 // pred_fallthru
          _
        // Predicated region
        $region21: #{tpu_custom_call.1} parent=11 // pred_check
          %p346 = pneg %p115
        $region22: #{tpu_custom_call.1} parent=11 // pred_check_branch
          %348 = sbr.rel (%p346) target = $region24
        $region23: #{tpu_custom_call.1} parent=11 // pred_region
          %s350 = ssub.s32 128, 128
          %351 = vsyncadd [#allocation11], %s350
          %s353 = sshll.u32 [#allocation12], 4
          %s354 = int_to_ptr.vmem [resolvable:$true] %s353
          %356 = dma.hbm_to_vmem [thread:$0]  %s3, 128, %s354, [#allocation11]
        $region24: #{tpu_custom_call.1} parent=11 // pred_fallthru
          _
        // Predicated region
        $region25: #{tpu_custom_call.1} parent=11 // pred_check
          %p357 = pneg %p136
        $region26: #{tpu_custom_call.1} parent=11 // pred_check_branch
          %359 = sbr.rel (%p357) target = $region28
        $region27: #{tpu_custom_call.1} parent=11 // pred_region
          %s361 = ssub.s32 64, 64
          %362 = vsyncadd [#allocation14], %s361
          %s364 = sshll.u32 [#allocation13], 4
          %s365 = int_to_ptr.vmem [resolvable:$true] %s364
          %367 = dma.hbm_to_vmem [thread:$0]  %s4, 64, %s365, [#allocation14]
        $region28: #{tpu_custom_call.1} parent=11 // pred_fallthru
          _
        // Predicated region
        $region29: #{tpu_custom_call.1} parent=11 // pred_check
          %p368 = pneg %p157
        $region30: #{tpu_custom_call.1} parent=11 // pred_check_branch
          %370 = sbr.rel (%p368) target = $region32
        $region31: #{tpu_custom_call.1} parent=11 // pred_region
          %s372 = ssub.s32 16, 16
          %373 = vsyncadd [#allocation14], %s372
          %s375 = sshll.u32 [#allocation15], 4
          %s376 = int_to_ptr.vmem [resolvable:$true] %s375
          %378 = dma.hbm_to_vmem [thread:$0]  %s5, 16, %s376, [#allocation14]
        $region32: #{tpu_custom_call.1} parent=11 // pred_fallthru
          _
        // Predicated region
        $region33: #{tpu_custom_call.1} parent=11 // pred_check
          %p379 = pneg %p178
        $region34: #{tpu_custom_call.1} parent=11 // pred_check_branch
          %381 = sbr.rel (%p379) target = $region36
        $region35: #{tpu_custom_call.1} parent=11 // pred_region
          _
        $region36: #{tpu_custom_call.1} parent=11 // pred_fallthru
          _
        // Predicated region
        $region37: #{tpu_custom_call.1} parent=11 // pred_check
          %p382 = pneg %p199
        $region38: #{tpu_custom_call.1} parent=11 // pred_check_branch
          %384 = sbr.rel (%p382) target = $region40
        $region39: #{tpu_custom_call.1} parent=11 // pred_region
          %s386 = ssub.s32 32, 32
          %387 = vsyncadd [#allocation17], %s386
          %s389 = sshll.u32 [#allocation16], 4
          %s390 = int_to_ptr.vmem [resolvable:$true] %s389
          %392 = dma.hbm_to_vmem [thread:$0]  %s7, 32, %s390, [#allocation17]
        $region40: #{tpu_custom_call.1} parent=11 // pred_fallthru
          _
        // Predicated region
        $region41: #{tpu_custom_call.1} parent=11 // pred_check
          %p393 = pneg %p220
        $region42: #{tpu_custom_call.1} parent=11 // pred_check_branch
          %395 = sbr.rel (%p393) target = $region44
        $region43: #{tpu_custom_call.1} parent=11 // pred_region
          %s397 = ssub.s32 16, 16
          %398 = vsyncadd [#allocation17], %s397
          %s400 = sshll.u32 [#allocation18], 4
          %s401 = int_to_ptr.vmem [resolvable:$true] %s400
          %403 = dma.hbm_to_vmem [thread:$0]  %s8, 16, %s401, [#allocation17]
        $region44: #{tpu_custom_call.1} parent=11 // pred_fallthru
          _
        // Predicated region
        $region45: #{tpu_custom_call.1} parent=11 // pred_check
          %p404 = pneg %p241
        $region46: #{tpu_custom_call.1} parent=11 // pred_check_branch
          %406 = sbr.rel (%p404) target = $region48
        $region47: #{tpu_custom_call.1} parent=11 // pred_region
          %s408 = ssub.s32 64, 64
          %409 = vsyncadd [#allocation20], %s408
          %s411 = sshll.u32 [#allocation19], 4
          %s412 = int_to_ptr.vmem [resolvable:$true] %s411
          %414 = dma.hbm_to_vmem [thread:$0]  %s9, 64, %s412, [#allocation20]
        $region48: #{tpu_custom_call.1} parent=11 // pred_fallthru
          _
        // Predicated region
        $region49: #{tpu_custom_call.1} parent=11 // pred_check
          %p415 = pneg %p262
        $region50: #{tpu_custom_call.1} parent=11 // pred_check_branch
          %417 = sbr.rel (%p415) target = $region52
        $region51: #{tpu_custom_call.1} parent=11 // pred_region
          _
        $region52: #{tpu_custom_call.1} parent=11 // pred_fallthru
          _
        // Predicated region
        $region53: #{tpu_custom_call.1} parent=11 // pred_check
          %p418 = pneg %p283
        $region54: #{tpu_custom_call.1} parent=11 // pred_check_branch
          %420 = sbr.rel (%p418) target = $region56
        $region55: #{tpu_custom_call.1} parent=11 // pred_region
          _
        $region56: #{tpu_custom_call.1} parent=11 // pred_fallthru
          _
      $region12: #{tpu_custom_call.1} parent=5 // pred_fallthru
        _
      %p421 = scmp.lt.s32.totalorder %s26, 2
      // Predicated region
      $region57: #{tpu_custom_call.1} parent=5 // pred_check
        %p422 = pneg %p421
      $region58: #{tpu_custom_call.1} parent=5 // pred_check_branch
        %424 = sbr.rel (%p422) target = $region60
      $region59: #{tpu_custom_call.1} parent=5 // pred_region
        // Predicated region
        $region61: #{tpu_custom_call.1} parent=59 // pred_check
          %p425 = pneg %p46
        $region62: #{tpu_custom_call.1} parent=59 // pred_check_branch
          %427 = sbr.rel (%p425) target = $region64
        $region63: #{tpu_custom_call.1} parent=59 // pred_region
          %p428 = scmp.lt.s32.totalorder %s26, 1
          %s429 = scalar_select %p428, %s26, 1
          %s430 = smul.addr %s429, 8
          %s431 = scalar_lea.vmem %s0, %s430
        $region64: #{tpu_custom_call.1} parent=59 // pred_fallthru
          _
      $region60: #{tpu_custom_call.1} parent=5 // pred_fallthru
        _
      %p432 = scmp.le.s32.totalorder 1, %s26
      %p433 = scmp.lt.s32.totalorder %s26, 3
      %p434 = pnand %p432, %p433
      %p435 = pneg %p434
      // Predicated region
      $region65: #{tpu_custom_call.1} parent=5 // pred_check
        _
      $region66: #{tpu_custom_call.1} parent=5 // pred_check_branch
        %437 = sbr.rel (%p434) target = $region68
      $region67: #{tpu_custom_call.1} parent=5 // pred_region
        %s438 = ssub.s32 %s26, 1
        // Predicated region
        $region69: #{tpu_custom_call.1} parent=67 // pred_check
          %p439 = pneg %p73
        $region70: #{tpu_custom_call.1} parent=67 // pred_check_branch
          %441 = sbr.rel (%p439) target = $region72
        $region71: #{tpu_custom_call.1} parent=67 // pred_region
          %442 = dma.done [#allocation8], 16
        $region72: #{tpu_custom_call.1} parent=67 // pred_fallthru
          _
        // Predicated region
        $region73: #{tpu_custom_call.1} parent=67 // pred_check
          %p443 = pneg %p94
        $region74: #{tpu_custom_call.1} parent=67 // pred_check_branch
          %445 = sbr.rel (%p443) target = $region76
        $region75: #{tpu_custom_call.1} parent=67 // pred_region
          %446 = dma.done [#allocation11], 16
        $region76: #{tpu_custom_call.1} parent=67 // pred_fallthru
          _
        // Predicated region
        $region77: #{tpu_custom_call.1} parent=67 // pred_check
          %p447 = pneg %p115
        $region78: #{tpu_custom_call.1} parent=67 // pred_check_branch
          %449 = sbr.rel (%p447) target = $region80
        $region79: #{tpu_custom_call.1} parent=67 // pred_region
          %450 = dma.done [#allocation11], 128
        $region80: #{tpu_custom_call.1} parent=67 // pred_fallthru
          _
        // Predicated region
        $region81: #{tpu_custom_call.1} parent=67 // pred_check
          %p451 = pneg %p136
        $region82: #{tpu_custom_call.1} parent=67 // pred_check_branch
          %453 = sbr.rel (%p451) target = $region84
        $region83: #{tpu_custom_call.1} parent=67 // pred_region
          %454 = dma.done [#allocation14], 64
        $region84: #{tpu_custom_call.1} parent=67 // pred_fallthru
          _
        // Predicated region
        $region85: #{tpu_custom_call.1} parent=67 // pred_check
          %p455 = pneg %p157
        $region86: #{tpu_custom_call.1} parent=67 // pred_check_branch
          %457 = sbr.rel (%p455) target = $region88
        $region87: #{tpu_custom_call.1} parent=67 // pred_region
          %458 = dma.done [#allocation14], 16
        $region88: #{tpu_custom_call.1} parent=67 // pred_fallthru
          _
        // Predicated region
        $region89: #{tpu_custom_call.1} parent=67 // pred_check
          %p459 = pneg %p199
        $region90: #{tpu_custom_call.1} parent=67 // pred_check_branch
          %461 = sbr.rel (%p459) target = $region92
        $region91: #{tpu_custom_call.1} parent=67 // pred_region
          %462 = dma.done [#allocation17], 32
        $region92: #{tpu_custom_call.1} parent=67 // pred_fallthru
          _
        // Predicated region
        $region93: #{tpu_custom_call.1} parent=67 // pred_check
          %p463 = pneg %p220
        $region94: #{tpu_custom_call.1} parent=67 // pred_check_branch
          %465 = sbr.rel (%p463) target = $region96
        $region95: #{tpu_custom_call.1} parent=67 // pred_region
          %466 = dma.done [#allocation17], 16
        $region96: #{tpu_custom_call.1} parent=67 // pred_fallthru
          _
        // Predicated region
        $region97: #{tpu_custom_call.1} parent=67 // pred_check
          %p467 = pneg %p241
        $region98: #{tpu_custom_call.1} parent=67 // pred_check_branch
          %469 = sbr.rel (%p467) target = $region100
        $region99: #{tpu_custom_call.1} parent=67 // pred_region
          %470 = dma.done [#allocation20], 64
        $region100: #{tpu_custom_call.1} parent=67 // pred_fallthru
          _
        %p471 = scmp.lt.s32.totalorder %s31, 1
        %s472 = scalar_select %p471, %s31, 1
        %s473 = smul.addr %s472, 8
        %s474 = scalar_lea.vmem %s0, %s473
        %p475 = pneg %p52
        %p476 = pneg %p49
        %p477 = pneg %p73
        %p478 = pneg %p70
        %p479 = pneg %p94
        %p480 = pneg %p91
        %p481 = pneg %p115
        %p482 = pneg %p112
        %p483 = pneg %p136
        %p484 = pneg %p133
        %p485 = pneg %p157
        %p486 = pneg %p154
        %p487 = pneg %p178
        %p488 = pneg %p175
        %p489 = pneg %p199
        %p490 = pneg %p196
        %p491 = pneg %p220
        %p492 = pneg %p217
        %p493 = pneg %p241
        %p494 = pneg %p238
        %p495 = pneg %p262
        %p496 = pneg %p259
        %p497 = pneg %p283
        %p498 = pneg %p280
        %p499 = pneg %p309
        %p500 = pneg %p306
        %s501 = sand.u32 %s296, 1
        %s502 = scalar_lea.sflag [#allocation9], %s501
        %s503 = sand.u32 %s296, 1
        %s504 = smul.addr %s503, 8
        %s505 = scalar_lea.vmem [#allocation21], %s504
        %p506 = scmp.lt.s32.totalorder %s31, 1
        %s507 = scalar_select %p506, %s31, 1
        %s508 = smul.addr %s507, 8
        %s509 = scalar_lea.vmem %s0, %s508
        %v510 = vld [vmem:[%s509] sm:$0xff]
        %vm511 = vcmask 64512
        %v512 = vsel %vm511, %v510, 0.0
        %513 = vadd.xlane.f32.xlu0 %v512
        %v514 = vpop.xlane.xlu0 %513
        %v515 = vrcp.pop 8.0
        %v516 = vmul.f32 %v514, %v515
        %v517 = vsub.f32 %v510, %v516
        %v518 = vmul.f32 %v517, %v517
        %v519 = vsel %vm511, %v518, 0.0
        %520 = vadd.xlane.f32.xlu0 %v519
        %v521 = vpop.xlane.xlu0 %520
        %v522 = vmul.f32 %v521, %v515
        %v523 = vadd.f32 %v522, 1e-05
        %v524 = vrsqrt.pop %v523
        %v525 = vmul.f32 %v517, %v524
        %v526 = vld [vmem:[#allocation7] sm:$0x1]
        %v528 = vlaneseq
        %v529 = vshrl.u32 %v528, 7
        %v530 = vsub.s32 0, %v529
        %v531 = vrot.slane %v526, %v530
        %v533 = vmul.f32 %v525, %v531
        %v534 = vld [vmem:[#allocation10] sm:$0x1]
        %v536 = vlaneseq
        %v537 = vshrl.u32 %v536, 7
        %v538 = vsub.s32 0, %v537
        %v539 = vrot.slane %v534, %v538
        %v541 = vadd.f32 %v533, %v539
        %v542 = vld [vmem:[#allocation12] sm:$0xff]
        %v544 = vsel %vm511, %v541, 0
        %546 = vmatprep.subr.mxu0 0.0
        %547 = vmatpush1.msra.mxu0 0.0
        %548 = vmatprep.subr.mxu0 0.0
        %549 = vmatpush1.msra.mxu0 0.0
        %550 = vmatprep.subr.mxu0 0.0
        %551 = vmatpush1.msra.mxu0 0.0
        %552 = vmatprep.subr.mxu0 0.0
        %553 = vmatpush1.msra.mxu0 0.0
        %554 = vmatprep.subr.mxu0 0.0
        %555 = vmatpush1.msra.mxu0 0.0
        %556 = vmatprep.subr.mxu0 0.0
        %557 = vmatpush1.msra.mxu0 0.0
        %558 = vmatprep.subr.mxu0 0.0
        %559 = vmatpush1.msra.mxu0 0.0
        %560 = vmatprep.subr.mxu0 0.0
        %561 = vmatpush1.msra.mxu0 0.0
        %562 = vmatprep.subr.mxu0 0.0
        %563 = vmatpush1.msra.mxu0 0.0
        %564 = vmatprep.subr.mxu0 0.0
        %565 = vmatpush1.msra.mxu0 0.0
        %566 = vmatprep.subr.mxu0 0.0
        %567 = vmatpush1.msra.mxu0 0.0
        %568 = vmatprep.subr.mxu0 0.0
        %569 = vmatpush1.msra.mxu0 0.0
        %570 = vmatprep.subr.mxu0 0.0
        %571 = vmatpush1.msra.mxu0 0.0
        %572 = vmatprep.subr.mxu0 0.0
        %573 = vmatpush1.msra.mxu0 0.0
        %574 = vmatprep.subr.mxu0 0.0
        %575 = vmatpush1.msra.mxu0 0.0
        %576 = vmatprep.subr.mxu0 0.0
        %577 = vmatpush1.msra.mxu0 %v542
        %578 = vmatprep.subr.mxu0 0.0
        %579 = vmatpush2.msra.mxu0 0.0
        %580 = vmatprep.subr.mxu0 0.0
        %581 = vmatpush2.msra.mxu0 0.0
        %582 = vmatprep.subr.mxu0 0.0
        %583 = vmatpush2.msra.mxu0 0.0
        %584 = vmatprep.subr.mxu0 0.0
        %585 = vmatpush2.msra.mxu0 0.0
        %586 = vmatprep.subr.mxu0 0.0
        %587 = vmatpush2.msra.mxu0 0.0
        %588 = vmatprep.subr.mxu0 0.0
        %589 = vmatpush2.msra.mxu0 0.0
        %590 = vmatprep.subr.mxu0 0.0
        %591 = vmatpush2.msra.mxu0 0.0
        %592 = vmatprep.subr.mxu0 0.0
        %593 = vmatpush2.msra.mxu0 0.0
        %594 = vmatprep.subr.mxu0 0.0
        %595 = vmatpush2.msra.mxu0 0.0
        %596 = vmatprep.subr.mxu0 0.0
        %597 = vmatpush2.msra.mxu0 0.0
        %598 = vmatprep.subr.mxu0 0.0
        %599 = vmatpush2.msra.mxu0 0.0
        %600 = vmatprep.subr.mxu0 0.0
        %601 = vmatpush2.msra.mxu0 0.0
        %602 = vmatprep.subr.mxu0 0.0
        %603 = vmatpush2.msra.mxu0 0.0
        %604 = vmatprep.subr.mxu0 0.0
        %605 = vmatpush2.msra.mxu0 0.0
        %606 = vmatprep.subr.mxu0 0.0
        %607 = vmatpush2.msra.mxu0 0.0
        %608 = vmatprep.subr.mxu0 0.0
        %609 = vmatpush2.msra.mxu0 0.0
        %610 = vmatprep.mubr.f32.mxu0 0.0
        %611 = vmatmul.mubr.f32.gmra.mxu0 %v544
        %v612 = vpop.f32.mrf.mxu0
        %v613 = vadd.f32 0.0, %v612
        %v614 = vpop.f32.mrf.mxu0
        %615 = vdwg.mxu0
        %vm616 = vcmask 124928
        %617 = vst.msk [vmem:[#allocation2] sm:$0x7] %vm616, 0.0
        %618 = vst.msk [vmem:[#allocation2 + $0xb] sm:$0x7] %vm616, 0.0
        %vm619 = vcmask 130048
        %620 = vst.msk [vmem:[#allocation2 + $0x3] sm:$0xff] %vm619, %v613
        %v621 = vld [vmem:[#allocation15] sm:$0x1]
        %v622 = vld [vmem:[#allocation13] sm:$0x1]
        %v623 = vld [vmem:[#allocation2] sm:$0xff]
        %v624 = vlaneseq
        %v625 = vshrl.u32 %v624, 7
        %v626 = vsub.s32 0, %v625
        %v627 = vrot.slane %v622, %v626
        %v628 = vmul.f32 %v623, %v627
        %v630 = vlaneseq
        %v631 = vshrl.u32 %v630, 7
        %v632 = vsub.s32 0, %v631
        %v633 = vrot.slane %v621, %v632
        %v635 = vadd.f32 %v633, %v628
        %v636 = vld [vmem:[#allocation2 + $0x6] sm:$0xff]
        %v637 = vmul.f32 %v636, %v627
        %v638 = vadd.f32 %v633, %v637
        %v639 = vld [vmem:[#allocation13 + $0x1] sm:$0x1]
        %v640 = vld [vmem:[#allocation2 + $0x1] sm:$0xff]
        %v641 = vlaneseq
        %v642 = vshrl.u32 %v641, 7
        %v643 = vsub.s32 0, %v642
        %v644 = vrot.slane %v639, %v643
        %v645 = vmul.f32 %v640, %v644
        %v646 = vadd.f32 %v635, %v645
        %v647 = vld [vmem:[#allocation2 + $0x5] sm:$0xff]
        %v648 = vmul.f32 %v647, %v644
        %v649 = vadd.f32 %v638, %v648
        %v650 = vld [vmem:[#allocation13 + $0x2] sm:$0x1]
        %v651 = vld [vmem:[#allocation2 + $0x2] sm:$0xff]
        %v652 = vlaneseq
        %v653 = vshrl.u32 %v652, 7
        %v654 = vsub.s32 0, %v653
        %v655 = vrot.slane %v650, %v654
        %v656 = vmul.f32 %v651, %v655
        %v657 = vadd.f32 %v646, %v656
        %v658 = vld [vmem:[#allocation2 + $0x4] sm:$0xff]
        %v659 = vmul.f32 %v658, %v655
        %v660 = vadd.f32 %v649, %v659
        %v661 = vld [vmem:[#allocation13 + $0x3] sm:$0x1]
        %v662 = vld [vmem:[#allocation2 + $0x3] sm:$0xff]
        %v663 = vlaneseq
        %v664 = vshrl.u32 %v663, 7
        %v665 = vsub.s32 0, %v664
        %v666 = vrot.slane %v661, %v665
        %v667 = vmul.f32 %v662, %v666
        %v668 = vadd.f32 %v657, %v667
        %v669 = vadd.f32 %v660, %v667
        %vm670 = vcmp.gt.f32.partialorder %v668, 20.0
        %v671 = vmul.f32 %v668, 1.442695
        %v672 = vpow.pop %v671
        %v673 = vadd.f32 %v672, 1.0
        %v674 = vlog2.pop %v673
        %v675 = vmul.f32 %v674, 0.6931472
        %v676 = vmul.f32 -0.5, %v672
        %v677 = vadd.f32 %v676, 1.0
        %v678 = vmul.f32 %v677, %v672
        %v679 = vand.u32 2147483647, %v672
        %vm680 = vcmp.lt.f32.partialorder %v679, 0.0004427343
        %v681 = vsel %vm680, %v678, %v675
        %v682 = vsel %vm670, %v668, %v681
        %683 = vst.msk [vmem:[#allocation3] sm:$0xff] %vm619, %v682
        %vm684 = vcmp.gt.f32.partialorder %v669, 20.0
        %v685 = vmul.f32 %v669, 1.442695
        %v686 = vpow.pop %v685
        %v687 = vadd.f32 %v686, 1.0
        %v688 = vlog2.pop %v687
        %v689 = vmul.f32 %v688, 0.6931472
        %v690 = vmul.f32 -0.5, %v686
        %v691 = vadd.f32 %v690, 1.0
        %v692 = vmul.f32 %v691, %v686
        %v693 = vand.u32 2147483647, %v686
        %vm694 = vcmp.lt.f32.partialorder %v693, 0.0004427343
        %v695 = vsel %vm694, %v692, %v689
        %v696 = vsel %vm684, %v669, %v695
        %697 = vst.msk [vmem:[#allocation3 + $0x8] sm:$0xff] %vm619, %v696
        %v698 = vld [vmem:[#allocation3] sm:$0xff]
        %v699 = vld [vmem:[#allocation3 + $0x8] sm:$0xff]
        %v700 = vld [vmem:[%s6] sm:$0xff]
        %v701 = vld [vmem:[%s6 + $0x8] sm:$0xff]
        %v703 = vsel %vm619, %v698, 0
        %v706 = vsel %vm619, %v699, 0
        %708 = vmatprep.subr.mxu0 0.0
        %709 = vmatpush1.msra.mxu0 0.0
        %710 = vmatprep.subr.mxu0 0.0
        %711 = vmatpush1.msra.mxu0 0.0
        %712 = vmatprep.subr.mxu0 0.0
        %713 = vmatpush1.msra.mxu0 0.0
        %714 = vmatprep.subr.mxu0 0.0
        %715 = vmatpush1.msra.mxu0 0.0
        %716 = vmatprep.subr.mxu0 0.0
        %717 = vmatpush1.msra.mxu0 0.0
        %718 = vmatprep.subr.mxu0 0.0
        %719 = vmatpush1.msra.mxu0 0.0
        %720 = vmatprep.subr.mxu0 0.0
        %721 = vmatpush1.msra.mxu0 0.0
        %722 = vmatprep.subr.mxu0 0.0
        %723 = vmatpush1.msra.mxu0 0.0
        %724 = vmatprep.subr.mxu0 0.0
        %725 = vmatpush1.msra.mxu0 0.0
        %726 = vmatprep.subr.mxu0 0.0
        %727 = vmatpush1.msra.mxu0 0.0
        %728 = vmatprep.subr.mxu0 0.0
        %729 = vmatpush1.msra.mxu0 0.0
        %730 = vmatprep.subr.mxu0 0.0
        %731 = vmatpush1.msra.mxu0 0.0
        %732 = vmatprep.subr.mxu0 0.0
        %733 = vmatpush1.msra.mxu0 0.0
        %734 = vmatprep.subr.mxu0 0.0
        %735 = vmatpush1.msra.mxu0 0.0
        %736 = vmatprep.subr.mxu0 0.0
        %737 = vmatpush1.msra.mxu0 %v701
        %738 = vmatprep.subr.mxu0 0.0
        %739 = vmatpush1.msra.mxu0 %v700
        %740 = vmatprep.subr.mxu0 0.0
        %741 = vmatpush2.msra.mxu0 0.0
        %742 = vmatprep.subr.mxu0 0.0
        %743 = vmatpush2.msra.mxu0 0.0
        %744 = vmatprep.subr.mxu0 0.0
        %745 = vmatpush2.msra.mxu0 0.0
        %746 = vmatprep.subr.mxu0 0.0
        %747 = vmatpush2.msra.mxu0 0.0
        %748 = vmatprep.subr.mxu0 0.0
        %749 = vmatpush2.msra.mxu0 0.0
        %750 = vmatprep.subr.mxu0 0.0
        %751 = vmatpush2.msra.mxu0 0.0
        %752 = vmatprep.subr.mxu0 0.0
        %753 = vmatpush2.msra.mxu0 0.0
        %754 = vmatprep.subr.mxu0 0.0
        %755 = vmatpush2.msra.mxu0 0.0
        %756 = vmatprep.subr.mxu0 0.0
        %757 = vmatpush2.msra.mxu0 0.0
        %758 = vmatprep.subr.mxu0 0.0
        %759 = vmatpush2.msra.mxu0 0.0
        %760 = vmatprep.subr.mxu0 0.0
        %761 = vmatpush2.msra.mxu0 0.0
        %762 = vmatprep.subr.mxu0 0.0
        %763 = vmatpush2.msra.mxu0 0.0
        %764 = vmatprep.subr.mxu0 0.0
        %765 = vmatpush2.msra.mxu0 0.0
        %766 = vmatprep.subr.mxu0 0.0
        %767 = vmatpush2.msra.mxu0 0.0
        %768 = vmatprep.subr.mxu0 0.0
        %769 = vmatpush2.msra.mxu0 0.0
        %770 = vmatprep.subr.mxu0 0.0
        %771 = vmatpush2.msra.mxu0 0.0
        %772 = vmatprep.mubr.f32.mxu0 0.0
        %773 = vmatmul.mubr.f32.gmra.mxu0 %v703
        %v774 = vpop.f32.mrf.mxu0
        %v775 = vadd.f32 0.0, %v774
        %v776 = vpop.f32.mrf.mxu0
        %777 = vmatprep.mubr.f32.mxu0 0.0
        %778 = vmatmul.mubr.f32.gmra.mxu0 %v706
        %v779 = vpop.f32.mrf.mxu0
        %v780 = vadd.f32 0.0, %v779
        %v781 = vpop.f32.mrf.mxu0
        %782 = vdwg.mxu0
        %785 = vrot.lane.b32.xlu0 %v775, 126
        %v786 = vpop.permute.xlu0 %785
        %787 = vrot.lane.b32.xlu0 %v780, 126
        %v788 = vpop.permute.xlu0 %787
        %791 = vst.msk [vmem:[#allocation5] sm:$0xff] %vm511, %v786
        %792 = vst.msk [vmem:[#allocation5 + $0x8] sm:$0xff] %vm511, %v788
        %v793 = vld [vmem:[#allocation16] sm:$0x3]
        %v794 = vld [vmem:[#allocation18] sm:$0x1]
        %v796 = vlaneseq
        %v797 = vshrl.u32 %v796, 7
        %v798 = vsub.s32 0, %v797
        %v799 = vrot.slane %v794, %v798
        %vm801 = vcmask 15360
        %v802 = vsel %vm801, %v775, 0
        %v804 = vsel %vm801, %v780, 0
        %vm806 = vcmask 1041408
        %v808 = vsel %vm806, %v793, 0
        %810 = vmatprep.subr.mxu0 0.0
        %811 = vmatpush1.msra.mxu0 0.0
        %812 = vmatprep.subr.mxu0 0.0
        %813 = vmatpush1.msra.mxu0 0.0
        %814 = vmatprep.subr.mxu0 0.0
        %815 = vmatpush1.msra.mxu0 0.0
        %816 = vmatprep.subr.mxu0 0.0
        %817 = vmatpush1.msra.mxu0 0.0
        %818 = vmatprep.subr.mxu0 0.0
        %819 = vmatpush1.msra.mxu0 0.0
        %820 = vmatprep.subr.mxu0 0.0
        %821 = vmatpush1.msra.mxu0 0.0
        %822 = vmatprep.subr.mxu0 0.0
        %823 = vmatpush1.msra.mxu0 0.0
        %824 = vmatprep.subr.mxu0 0.0
        %825 = vmatpush1.msra.mxu0 0.0
        %826 = vmatprep.subr.mxu0 0.0
        %827 = vmatpush1.msra.mxu0 0.0
        %828 = vmatprep.subr.mxu0 0.0
        %829 = vmatpush1.msra.mxu0 0.0
        %830 = vmatprep.subr.mxu0 0.0
        %831 = vmatpush1.msra.mxu0 0.0
        %832 = vmatprep.subr.mxu0 0.0
        %833 = vmatpush1.msra.mxu0 0.0
        %834 = vmatprep.subr.mxu0 0.0
        %835 = vmatpush1.msra.mxu0 0.0
        %836 = vmatprep.subr.mxu0 0.0
        %837 = vmatpush1.msra.mxu0 0.0
        %838 = vmatprep.subr.mxu0 0.0
        %839 = vmatpush1.msra.mxu0 0.0
        %840 = vmatprep.subr.mxu0 0.0
        %841 = vmatpush1.msra.mxu0 %v808
        %842 = vmatprep.subr.mxu0 0.0
        %843 = vmatpush2.msra.mxu0 0.0
        %844 = vmatprep.subr.mxu0 0.0
        %845 = vmatpush2.msra.mxu0 0.0
        %846 = vmatprep.subr.mxu0 0.0
        %847 = vmatpush2.msra.mxu0 0.0
        %848 = vmatprep.subr.mxu0 0.0
        %849 = vmatpush2.msra.mxu0 0.0
        %850 = vmatprep.subr.mxu0 0.0
        %851 = vmatpush2.msra.mxu0 0.0
        %852 = vmatprep.subr.mxu0 0.0
        %853 = vmatpush2.msra.mxu0 0.0
        %854 = vmatprep.subr.mxu0 0.0
        %855 = vmatpush2.msra.mxu0 0.0
        %856 = vmatprep.subr.mxu0 0.0
        %857 = vmatpush2.msra.mxu0 0.0
        %858 = vmatprep.subr.mxu0 0.0
        %859 = vmatpush2.msra.mxu0 0.0
        %860 = vmatprep.subr.mxu0 0.0
        %861 = vmatpush2.msra.mxu0 0.0
        %862 = vmatprep.subr.mxu0 0.0
        %863 = vmatpush2.msra.mxu0 0.0
        %864 = vmatprep.subr.mxu0 0.0
        %865 = vmatpush2.msra.mxu0 0.0
        %866 = vmatprep.subr.mxu0 0.0
        %867 = vmatpush2.msra.mxu0 0.0
        %868 = vmatprep.subr.mxu0 0.0
        %869 = vmatpush2.msra.mxu0 0.0
        %870 = vmatprep.subr.mxu0 0.0
        %871 = vmatpush2.msra.mxu0 0.0
        %872 = vmatprep.subr.mxu0 0.0
        %873 = vmatpush2.msra.mxu0 0.0
        %874 = vmatprep.mubr.f32.mxu0 0.0
        %875 = vmatmul.mubr.f32.gmra.mxu0 %v802
        %v876 = vpop.f32.mrf.mxu0
        %v877 = vadd.f32 %v799, %v876
        %v878 = vpop.f32.mrf.mxu0
        %879 = vmatprep.mubr.f32.mxu0 0.0
        %880 = vmatmul.mubr.f32.gmra.mxu0 %v804
        %v881 = vpop.f32.mrf.mxu0
        %v882 = vadd.f32 %v799, %v881
        %v883 = vpop.f32.mrf.mxu0
        %884 = vdwg.mxu0
        %vm885 = vcmp.gt.f32.partialorder %v877, 20.0
        %vm886 = vcmp.gt.f32.partialorder %v882, 20.0
        %v887 = vmul.f32 %v877, 1.442695
        %v888 = vpow.pop %v887
        %v889 = vmul.f32 %v882, 1.442695
        %v890 = vpow.pop %v889
        %v891 = vadd.f32 %v888, 1.0
        %v892 = vlog2.pop %v891
        %v893 = vmul.f32 %v892, 0.6931472
        %v894 = vmul.f32 -0.5, %v888
        %v895 = vadd.f32 %v894, 1.0
        %v896 = vmul.f32 %v895, %v888
        %v897 = vand.u32 2147483647, %v888
        %vm898 = vcmp.lt.f32.partialorder %v897, 0.0004427343
        %v899 = vsel %vm898, %v896, %v893
        %v900 = vadd.f32 %v890, 1.0
        %v901 = vlog2.pop %v900
        %v902 = vmul.f32 %v901, 0.6931472
        %v903 = vmul.f32 -0.5, %v890
        %v904 = vadd.f32 %v903, 1.0
        %v905 = vmul.f32 %v904, %v890
        %v906 = vand.u32 2147483647, %v890
        %vm907 = vcmp.lt.f32.partialorder %v906, 0.0004427343
        %v908 = vsel %vm907, %v905, %v902
        %v909 = vsel %vm885, %v877, %v899
        %v910 = vsel %vm886, %v882, %v908
        %911 = vst.msk [vmem:[#allocation4] sm:$0xff] %vm619, %v909
        %912 = vst.msk [vmem:[#allocation4 + $0x8] sm:$0xff] %vm619, %v910
        %v913 = vld [vmem:[#allocation19] sm:$0xf]
        %v914 = vlaneseq
        %v915 = vshrl.u32 %v914, 7
        %v916 = vlaneseq
        %v917 = vand.u32 %v916, 127
        %vm918 = vcmp.eq.s32.totalorder %v915, %v917
        %v919 = vsel %vm918, 1, 0
        %v920 = vcvt.s32.f32 %v919
        %v921 = vld [vmem:[#allocation4] sm:$0xff]
        %v922 = vld [vmem:[#allocation3] sm:$0xff]
        %v923 = vld [vmem:[#allocation5] sm:$0xff]
        %v924 = vmul.f32 %v921, %v922
        %v925 = vlaneseq
        %v926 = vshrl.u32 %v925, 7
        %v927 = vsub.s32 0, %v926
        %v928 = vrot.slane %v923, %v927
        %v929 = vmul.f32 %v920, %v928
        %vm930 = vcmask 27648
        %v931 = vsel %vm930, %v929, 0.0
        %932 = vadd.xlane.f32.xlu0 %v931
        %v933 = vpop.xlane.xlu0 %932
        %v934 = vlaneseq
        %v935 = vshrl.u32 %v934, 7
        %v936 = vsub.s32 0, %v935
        %v937 = vrot.slane %v921, %v936
        %v938 = vmul.f32 %v937, %v913
        %v939 = vmul.f32 %v938, 1.442695
        %v940 = vpow.pop %v939
        %v941 = vmul.f32 %v940, 0.0
        %v942 = vlaneseq
        %v943 = vshrl.u32 %v942, 7
        %v944 = vsub.s32 0, %v943
        %v945 = vrot.slane %v924, %v944
        %v946 = vmul.f32 %v945, %v933
        %v947 = vadd.f32 %v941, %v946
        %949 = vrot.lane.b32.xlu0 %v923, 124
        %v950 = vpop.permute.xlu0 %949
        %vm951 = vcmask 31744
        %v952 = vsel %vm951, %v950, 0
        %vm954 = vcmask 1043456
        %v956 = vsel %vm954, %v947, 0
        %958 = vmatprep.subr.mxu0 0.0
        %959 = vmatpush1.msra.mxu0 0.0
        %960 = vmatprep.subr.mxu0 0.0
        %961 = vmatpush1.msra.mxu0 0.0
        %962 = vmatprep.subr.mxu0 0.0
        %963 = vmatpush1.msra.mxu0 0.0
        %964 = vmatprep.subr.mxu0 0.0
        %965 = vmatpush1.msra.mxu0 0.0
        %966 = vmatprep.subr.mxu0 0.0
        %967 = vmatpush1.msra.mxu0 0.0
        %968 = vmatprep.subr.mxu0 0.0
        %969 = vmatpush1.msra.mxu0 0.0
        %970 = vmatprep.subr.mxu0 0.0
        %971 = vmatpush1.msra.mxu0 0.0
        %972 = vmatprep.subr.mxu0 0.0
        %973 = vmatpush1.msra.mxu0 0.0
        %974 = vmatprep.subr.mxu0 0.0
        %975 = vmatpush1.msra.mxu0 0.0
        %976 = vmatprep.subr.mxu0 0.0
        %977 = vmatpush1.msra.mxu0 0.0
        %978 = vmatprep.subr.mxu0 0.0
        %979 = vmatpush1.msra.mxu0 0.0
        %980 = vmatprep.subr.mxu0 0.0
        %981 = vmatpush1.msra.mxu0 0.0
        %982 = vmatprep.subr.mxu0 0.0
        %983 = vmatpush1.msra.mxu0 0.0
        %984 = vmatprep.subr.mxu0 0.0
        %985 = vmatpush1.msra.mxu0 0.0
        %986 = vmatprep.subr.mxu0 0.0
        %987 = vmatpush1.msra.mxu0 0.0
        %988 = vmatprep.subr.mxu0 0.0
        %989 = vmatpush1.msra.mxu0 %v956
        %990 = vmatprep.subr.mxu0 0.0
        %991 = vmatpush2.msra.mxu0 0.0
        %992 = vmatprep.subr.mxu0 0.0
        %993 = vmatpush2.msra.mxu0 0.0
        %994 = vmatprep.subr.mxu0 0.0
        %995 = vmatpush2.msra.mxu0 0.0
        %996 = vmatprep.subr.mxu0 0.0
        %997 = vmatpush2.msra.mxu0 0.0
        %998 = vmatprep.subr.mxu0 0.0
        %999 = vmatpush2.msra.mxu0 0.0
        %1000 = vmatprep.subr.mxu0 0.0
        %1001 = vmatpush2.msra.mxu0 0.0
        %1002 = vmatprep.subr.mxu0 0.0
        %1003 = vmatpush2.msra.mxu0 0.0
        %1004 = vmatprep.subr.mxu0 0.0
        %1005 = vmatpush2.msra.mxu0 0.0
        %1006 = vmatprep.subr.mxu0 0.0
        %1007 = vmatpush2.msra.mxu0 0.0
        %1008 = vmatprep.subr.mxu0 0.0
        %1009 = vmatpush2.msra.mxu0 0.0
        %1010 = vmatprep.subr.mxu0 0.0
        %1011 = vmatpush2.msra.mxu0 0.0
        %1012 = vmatprep.subr.mxu0 0.0
        %1013 = vmatpush2.msra.mxu0 0.0
        %1014 = vmatprep.subr.mxu0 0.0
        %1015 = vmatpush2.msra.mxu0 0.0
        %1016 = vmatprep.subr.mxu0 0.0
        %1017 = vmatpush2.msra.mxu0 0.0
        %1018 = vmatprep.subr.mxu0 0.0
        %1019 = vmatpush2.msra.mxu0 0.0
        %1020 = vmatprep.subr.mxu0 0.0
        %1021 = vmatpush2.msra.mxu0 0.0
        %1022 = vmatprep.mubr.f32.mxu0 0.0
        %1023 = vmatmul.mubr.f32.gmra.mxu0 %v952
        %v1024 = vpop.f32.mrf.mxu0
        %v1025 = vadd.f32 0.0, %v1024
        %v1026 = vpop.f32.mrf.mxu0
        %1027 = vdwg.mxu0
        %vm1028 = vcmask 122880
        %1029 = vst.msk [vmem:[#allocation6] sm:$0x1] %vm1028, %v1025
        %v1030 = vlaneseq
        %v1031 = vshrl.u32 %v1030, 7
        %v1032 = vsub.s32 1, %v1031
        %v1033 = vrot.slane %v923, %v1032
        %v1034 = vmul.f32 %v920, %v1033
        %v1035 = vsel %vm930, %v1034, 0.0
        %1036 = vadd.xlane.f32.xlu0 %v1035
        %v1037 = vpop.xlane.xlu0 %1036
        %v1038 = vlaneseq
        %v1039 = vshrl.u32 %v1038, 7
        %v1040 = vsub.s32 1, %v1039
        %v1041 = vrot.slane %v921, %v1040
        %v1042 = vmul.f32 %v1041, %v913
        %v1043 = vmul.f32 %v1042, 1.442695
        %v1044 = vpow.pop %v1043
        %v1045 = vmul.f32 %v1044, %v947
        %v1046 = vlaneseq
        %v1047 = vshrl.u32 %v1046, 7
        %v1048 = vsub.s32 1, %v1047
        %v1049 = vrot.slane %v924, %v1048
        %v1050 = vmul.f32 %v1049, %v1037
        %v1051 = vadd.f32 %v1045, %v1050
        %v1052 = vrot.slane %v923, 1
        %1053 = vrot.lane.b32.xlu0 %v1052, 124
        %v1054 = vpop.permute.xlu0 %1053
        %v1055 = vsel %vm951, %v1054, 0
        %v1058 = vsel %vm954, %v1051, 0
        %1060 = vmatprep.subr.mxu0 0.0
        %1061 = vmatpush1.msra.mxu0 0.0
        %1062 = vmatprep.subr.mxu0 0.0
        %1063 = vmatpush1.msra.mxu0 0.0
        %1064 = vmatprep.subr.mxu0 0.0
        %1065 = vmatpush1.msra.mxu0 0.0
        %1066 = vmatprep.subr.mxu0 0.0
        %1067 = vmatpush1.msra.mxu0 0.0
        %1068 = vmatprep.subr.mxu0 0.0
        %1069 = vmatpush1.msra.mxu0 0.0
        %1070 = vmatprep.subr.mxu0 0.0
        %1071 = vmatpush1.msra.mxu0 0.0
        %1072 = vmatprep.subr.mxu0 0.0
        %1073 = vmatpush1.msra.mxu0 0.0
        %1074 = vmatprep.subr.mxu0 0.0
        %1075 = vmatpush1.msra.mxu0 0.0
        %1076 = vmatprep.subr.mxu0 0.0
        %1077 = vmatpush1.msra.mxu0 0.0
        %1078 = vmatprep.subr.mxu0 0.0
        %1079 = vmatpush1.msra.mxu0 0.0
        %1080 = vmatprep.subr.mxu0 0.0
        %1081 = vmatpush1.msra.mxu0 0.0
        %1082 = vmatprep.subr.mxu0 0.0
        %1083 = vmatpush1.msra.mxu0 0.0
        %1084 = vmatprep.subr.mxu0 0.0
        %1085 = vmatpush1.msra.mxu0 0.0
        %1086 = vmatprep.subr.mxu0 0.0
        %1087 = vmatpush1.msra.mxu0 0.0
        %1088 = vmatprep.subr.mxu0 0.0
        %1089 = vmatpush1.msra.mxu0 0.0
        %1090 = vmatprep.subr.mxu0 0.0
        %1091 = vmatpush1.msra.mxu0 %v1058
        %1092 = vmatprep.subr.mxu0 0.0
        %1093 = vmatpush2.msra.mxu0 0.0
        %1094 = vmatprep.subr.mxu0 0.0
        %1095 = vmatpush2.msra.mxu0 0.0
        %1096 = vmatprep.subr.mxu0 0.0
        %1097 = vmatpush2.msra.mxu0 0.0
        %1098 = vmatprep.subr.mxu0 0.0
        %1099 = vmatpush2.msra.mxu0 0.0
        %1100 = vmatprep.subr.mxu0 0.0
        %1101 = vmatpush2.msra.mxu0 0.0
        %1102 = vmatprep.subr.mxu0 0.0
        %1103 = vmatpush2.msra.mxu0 0.0
        %1104 = vmatprep.subr.mxu0 0.0
        %1105 = vmatpush2.msra.mxu0 0.0
        %1106 = vmatprep.subr.mxu0 0.0
        %1107 = vmatpush2.msra.mxu0 0.0
        %1108 = vmatprep.subr.mxu0 0.0
        %1109 = vmatpush2.msra.mxu0 0.0
        %1110 = vmatprep.subr.mxu0 0.0
        %1111 = vmatpush2.msra.mxu0 0.0
        %1112 = vmatprep.subr.mxu0 0.0
        %1113 = vmatpush2.msra.mxu0 0.0
        %1114 = vmatprep.subr.mxu0 0.0
        %1115 = vmatpush2.msra.mxu0 0.0
        %1116 = vmatprep.subr.mxu0 0.0
        %1117 = vmatpush2.msra.mxu0 0.0
        %1118 = vmatprep.subr.mxu0 0.0
        %1119 = vmatpush2.msra.mxu0 0.0
        %1120 = vmatprep.subr.mxu0 0.0
        %1121 = vmatpush2.msra.mxu0 0.0
        %1122 = vmatprep.subr.mxu0 0.0
        %1123 = vmatpush2.msra.mxu0 0.0
        %1124 = vmatprep.mubr.f32.mxu0 0.0
        %1125 = vmatmul.mubr.f32.gmra.mxu0 %v1055
        %v1126 = vpop.f32.mrf.mxu0
        %v1127 = vadd.f32 0.0, %v1126
        %v1128 = vpop.f32.mrf.mxu0
        %1129 = vdwg.mxu0
        %s1130 = sadd.s32 0, 1
        %s1131 = scalar_lea.vmem [#allocation6], %s1130
        %1132 = vst.msk [vmem:[%s1131] sm:$0x1] %vm1028, %v1127
        %v1133 = vlaneseq
        %v1134 = vshrl.u32 %v1133, 7
        %v1135 = vsub.s32 2, %v1134
        %v1136 = vrot.slane %v923, %v1135
        %v1137 = vmul.f32 %v920, %v1136
        %v1138 = vsel %vm930, %v1137, 0.0
        %1139 = vadd.xlane.f32.xlu0 %v1138
        %v1140 = vpop.xlane.xlu0 %1139
        %v1141 = vlaneseq
        %v1142 = vshrl.u32 %v1141, 7
        %v1143 = vsub.s32 2, %v1142
        %v1144 = vrot.slane %v921, %v1143
        %v1145 = vmul.f32 %v1144, %v913
        %v1146 = vmul.f32 %v1145, 1.442695
        %v1147 = vpow.pop %v1146
        %v1148 = vmul.f32 %v1147, %v1051
        %v1149 = vlaneseq
        %v1150 = vshrl.u32 %v1149, 7
        %v1151 = vsub.s32 2, %v1150
        %v1152 = vrot.slane %v924, %v1151
        %v1153 = vmul.f32 %v1152, %v1140
        %v1154 = vadd.f32 %v1148, %v1153
        %v1155 = vrot.slane %v923, 2
        %1156 = vrot.lane.b32.xlu0 %v1155, 124
        %v1157 = vpop.permute.xlu0 %1156
        %v1158 = vsel %vm951, %v1157, 0
        %v1161 = vsel %vm954, %v1154, 0
        %1163 = vmatprep.subr.mxu0 0.0
        %1164 = vmatpush1.msra.mxu0 0.0
        %1165 = vmatprep.subr.mxu0 0.0
        %1166 = vmatpush1.msra.mxu0 0.0
        %1167 = vmatprep.subr.mxu0 0.0
        %1168 = vmatpush1.msra.mxu0 0.0
        %1169 = vmatprep.subr.mxu0 0.0
        %1170 = vmatpush1.msra.mxu0 0.0
        %1171 = vmatprep.subr.mxu0 0.0
        %1172 = vmatpush1.msra.mxu0 0.0
        %1173 = vmatprep.subr.mxu0 0.0
        %1174 = vmatpush1.msra.mxu0 0.0
        %1175 = vmatprep.subr.mxu0 0.0
        %1176 = vmatpush1.msra.mxu0 0.0
        %1177 = vmatprep.subr.mxu0 0.0
        %1178 = vmatpush1.msra.mxu0 0.0
        %1179 = vmatprep.subr.mxu0 0.0
        %1180 = vmatpush1.msra.mxu0 0.0
        %1181 = vmatprep.subr.mxu0 0.0
        %1182 = vmatpush1.msra.mxu0 0.0
        %1183 = vmatprep.subr.mxu0 0.0
        %1184 = vmatpush1.msra.mxu0 0.0
        %1185 = vmatprep.subr.mxu0 0.0
        %1186 = vmatpush1.msra.mxu0 0.0
        %1187 = vmatprep.subr.mxu0 0.0
        %1188 = vmatpush1.msra.mxu0 0.0
        %1189 = vmatprep.subr.mxu0 0.0
        %1190 = vmatpush1.msra.mxu0 0.0
        %1191 = vmatprep.subr.mxu0 0.0
        %1192 = vmatpush1.msra.mxu0 0.0
        %1193 = vmatprep.subr.mxu0 0.0
        %1194 = vmatpush1.msra.mxu0 %v1161
        %1195 = vmatprep.subr.mxu0 0.0
        %1196 = vmatpush2.msra.mxu0 0.0
        %1197 = vmatprep.subr.mxu0 0.0
        %1198 = vmatpush2.msra.mxu0 0.0
        %1199 = vmatprep.subr.mxu0 0.0
        %1200 = vmatpush2.msra.mxu0 0.0
        %1201 = vmatprep.subr.mxu0 0.0
        %1202 = vmatpush2.msra.mxu0 0.0
        %1203 = vmatprep.subr.mxu0 0.0
        %1204 = vmatpush2.msra.mxu0 0.0
        %1205 = vmatprep.subr.mxu0 0.0
        %1206 = vmatpush2.msra.mxu0 0.0
        %1207 = vmatprep.subr.mxu0 0.0
        %1208 = vmatpush2.msra.mxu0 0.0
        %1209 = vmatprep.subr.mxu0 0.0
        %1210 = vmatpush2.msra.mxu0 0.0
        %1211 = vmatprep.subr.mxu0 0.0
        %1212 = vmatpush2.msra.mxu0 0.0
        %1213 = vmatprep.subr.mxu0 0.0
        %1214 = vmatpush2.msra.mxu0 0.0
        %1215 = vmatprep.subr.mxu0 0.0
        %1216 = vmatpush2.msra.mxu0 0.0
        %1217 = vmatprep.subr.mxu0 0.0
        %1218 = vmatpush2.msra.mxu0 0.0
        %1219 = vmatprep.subr.mxu0 0.0
        %1220 = vmatpush2.msra.mxu0 0.0
        %1221 = vmatprep.subr.mxu0 0.0
        %1222 = vmatpush2.msra.mxu0 0.0
        %1223 = vmatprep.subr.mxu0 0.0
        %1224 = vmatpush2.msra.mxu0 0.0
        %1225 = vmatprep.subr.mxu0 0.0
        %1226 = vmatpush2.msra.mxu0 0.0
        %1227 = vmatprep.mubr.f32.mxu0 0.0
        %1228 = vmatmul.mubr.f32.gmra.mxu0 %v1158
        %v1229 = vpop.f32.mrf.mxu0
        %v1230 = vadd.f32 0.0, %v1229
        %v1231 = vpop.f32.mrf.mxu0
        %1232 = vdwg.mxu0
        %s1233 = sadd.s32 0, 2
        %s1234 = scalar_lea.vmem [#allocation6], %s1233
        %1235 = vst.msk [vmem:[%s1234] sm:$0x1] %vm1028, %v1230
        %v1236 = vlaneseq
        %v1237 = vshrl.u32 %v1236, 7
        %v1238 = vsub.s32 3, %v1237
        %v1239 = vrot.slane %v923, %v1238
        %v1240 = vmul.f32 %v920, %v1239
        %v1241 = vsel %vm930, %v1240, 0.0
        %1242 = vadd.xlane.f32.xlu0 %v1241
        %v1243 = vpop.xlane.xlu0 %1242
        %v1244 = vlaneseq
        %v1245 = vshrl.u32 %v1244, 7
        %v1246 = vsub.s32 3, %v1245
        %v1247 = vrot.slane %v921, %v1246
        %v1248 = vmul.f32 %v1247, %v913
        %v1249 = vmul.f32 %v1248, 1.442695
        %v1250 = vpow.pop %v1249
        %v1251 = vmul.f32 %v1250, %v1154
        %v1252 = vlaneseq
        %v1253 = vshrl.u32 %v1252, 7
        %v1254 = vsub.s32 3, %v1253
        %v1255 = vrot.slane %v924, %v1254
        %v1256 = vmul.f32 %v1255, %v1243
        %v1257 = vadd.f32 %v1251, %v1256
        %v1258 = vrot.slane %v923, 3
        %1259 = vrot.lane.b32.xlu0 %v1258, 124
        %v1260 = vpop.permute.xlu0 %1259
        %v1261 = vsel %vm951, %v1260, 0
        %v1264 = vsel %vm954, %v1257, 0
        %1266 = vmatprep.subr.mxu0 0.0
        %1267 = vmatpush1.msra.mxu0 0.0
        %1268 = vmatprep.subr.mxu0 0.0
        %1269 = vmatpush1.msra.mxu0 0.0
        %1270 = vmatprep.subr.mxu0 0.0
        %1271 = vmatpush1.msra.mxu0 0.0
        %1272 = vmatprep.subr.mxu0 0.0
        %1273 = vmatpush1.msra.mxu0 0.0
        %1274 = vmatprep.subr.mxu0 0.0
        %1275 = vmatpush1.msra.mxu0 0.0
        %1276 = vmatprep.subr.mxu0 0.0
        %1277 = vmatpush1.msra.mxu0 0.0
        %1278 = vmatprep.subr.mxu0 0.0
        %1279 = vmatpush1.msra.mxu0 0.0
        %1280 = vmatprep.subr.mxu0 0.0
        %1281 = vmatpush1.msra.mxu0 0.0
        %1282 = vmatprep.subr.mxu0 0.0
        %1283 = vmatpush1.msra.mxu0 0.0
        %1284 = vmatprep.subr.mxu0 0.0
        %1285 = vmatpush1.msra.mxu0 0.0
        %1286 = vmatprep.subr.mxu0 0.0
        %1287 = vmatpush1.msra.mxu0 0.0
        %1288 = vmatprep.subr.mxu0 0.0
        %1289 = vmatpush1.msra.mxu0 0.0
        %1290 = vmatprep.subr.mxu0 0.0
        %1291 = vmatpush1.msra.mxu0 0.0
        %1292 = vmatprep.subr.mxu0 0.0
        %1293 = vmatpush1.msra.mxu0 0.0
        %1294 = vmatprep.subr.mxu0 0.0
        %1295 = vmatpush1.msra.mxu0 0.0
        %1296 = vmatprep.subr.mxu0 0.0
        %1297 = vmatpush1.msra.mxu0 %v1264
        %1298 = vmatprep.subr.mxu0 0.0
        %1299 = vmatpush2.msra.mxu0 0.0
        %1300 = vmatprep.subr.mxu0 0.0
        %1301 = vmatpush2.msra.mxu0 0.0
        %1302 = vmatprep.subr.mxu0 0.0
        %1303 = vmatpush2.msra.mxu0 0.0
        %1304 = vmatprep.subr.mxu0 0.0
        %1305 = vmatpush2.msra.mxu0 0.0
        %1306 = vmatprep.subr.mxu0 0.0
        %1307 = vmatpush2.msra.mxu0 0.0
        %1308 = vmatprep.subr.mxu0 0.0
        %1309 = vmatpush2.msra.mxu0 0.0
        %1310 = vmatprep.subr.mxu0 0.0
        %1311 = vmatpush2.msra.mxu0 0.0
        %1312 = vmatprep.subr.mxu0 0.0
        %1313 = vmatpush2.msra.mxu0 0.0
        %1314 = vmatprep.subr.mxu0 0.0
        %1315 = vmatpush2.msra.mxu0 0.0
        %1316 = vmatprep.subr.mxu0 0.0
        %1317 = vmatpush2.msra.mxu0 0.0
        %1318 = vmatprep.subr.mxu0 0.0
        %1319 = vmatpush2.msra.mxu0 0.0
        %1320 = vmatprep.subr.mxu0 0.0
        %1321 = vmatpush2.msra.mxu0 0.0
        %1322 = vmatprep.subr.mxu0 0.0
        %1323 = vmatpush2.msra.mxu0 0.0
        %1324 = vmatprep.subr.mxu0 0.0
        %1325 = vmatpush2.msra.mxu0 0.0
        %1326 = vmatprep.subr.mxu0 0.0
        %1327 = vmatpush2.msra.mxu0 0.0
        %1328 = vmatprep.subr.mxu0 0.0
        %1329 = vmatpush2.msra.mxu0 0.0
        %1330 = vmatprep.mubr.f32.mxu0 0.0
        %1331 = vmatmul.mubr.f32.gmra.mxu0 %v1261
        %v1332 = vpop.f32.mrf.mxu0
        %v1333 = vadd.f32 0.0, %v1332
        %v1334 = vpop.f32.mrf.mxu0
        %1335 = vdwg.mxu0
        %s1336 = sadd.s32 0, 3
        %s1337 = scalar_lea.vmem [#allocation6], %s1336
        %1338 = vst.msk [vmem:[%s1337] sm:$0x1] %vm1028, %v1333
        %v1339 = vlaneseq
        %v1340 = vshrl.u32 %v1339, 7
        %v1341 = vsub.s32 4, %v1340
        %v1342 = vrot.slane %v923, %v1341
        %v1343 = vmul.f32 %v920, %v1342
        %v1344 = vsel %vm930, %v1343, 0.0
        %1345 = vadd.xlane.f32.xlu0 %v1344
        %v1346 = vpop.xlane.xlu0 %1345
        %v1347 = vlaneseq
        %v1348 = vshrl.u32 %v1347, 7
        %v1349 = vsub.s32 4, %v1348
        %v1350 = vrot.slane %v921, %v1349
        %v1351 = vmul.f32 %v1350, %v913
        %v1352 = vmul.f32 %v1351, 1.442695
        %v1353 = vpow.pop %v1352
        %v1354 = vmul.f32 %v1353, %v1257
        %v1355 = vlaneseq
        %v1356 = vshrl.u32 %v1355, 7
        %v1357 = vsub.s32 4, %v1356
        %v1358 = vrot.slane %v924, %v1357
        %v1359 = vmul.f32 %v1358, %v1346
        %v1360 = vadd.f32 %v1354, %v1359
        %v1361 = vrot.slane %v923, 4
        %1362 = vrot.lane.b32.xlu0 %v1361, 124
        %v1363 = vpop.permute.xlu0 %1362
        %v1364 = vsel %vm951, %v1363, 0
        %v1367 = vsel %vm954, %v1360, 0
        %1369 = vmatprep.subr.mxu0 0.0
        %1370 = vmatpush1.msra.mxu0 0.0
        %1371 = vmatprep.subr.mxu0 0.0
        %1372 = vmatpush1.msra.mxu0 0.0
        %1373 = vmatprep.subr.mxu0 0.0
        %1374 = vmatpush1.msra.mxu0 0.0
        %1375 = vmatprep.subr.mxu0 0.0
        %1376 = vmatpush1.msra.mxu0 0.0
        %1377 = vmatprep.subr.mxu0 0.0
        %1378 = vmatpush1.msra.mxu0 0.0
        %1379 = vmatprep.subr.mxu0 0.0
        %1380 = vmatpush1.msra.mxu0 0.0
        %1381 = vmatprep.subr.mxu0 0.0
        %1382 = vmatpush1.msra.mxu0 0.0
        %1383 = vmatprep.subr.mxu0 0.0
        %1384 = vmatpush1.msra.mxu0 0.0
        %1385 = vmatprep.subr.mxu0 0.0
        %1386 = vmatpush1.msra.mxu0 0.0
        %1387 = vmatprep.subr.mxu0 0.0
        %1388 = vmatpush1.msra.mxu0 0.0
        %1389 = vmatprep.subr.mxu0 0.0
        %1390 = vmatpush1.msra.mxu0 0.0
        %1391 = vmatprep.subr.mxu0 0.0
        %1392 = vmatpush1.msra.mxu0 0.0
        %1393 = vmatprep.subr.mxu0 0.0
        %1394 = vmatpush1.msra.mxu0 0.0
        %1395 = vmatprep.subr.mxu0 0.0
        %1396 = vmatpush1.msra.mxu0 0.0
        %1397 = vmatprep.subr.mxu0 0.0
        %1398 = vmatpush1.msra.mxu0 0.0
        %1399 = vmatprep.subr.mxu0 0.0
        %1400 = vmatpush1.msra.mxu0 %v1367
        %1401 = vmatprep.subr.mxu0 0.0
        %1402 = vmatpush2.msra.mxu0 0.0
        %1403 = vmatprep.subr.mxu0 0.0
        %1404 = vmatpush2.msra.mxu0 0.0
        %1405 = vmatprep.subr.mxu0 0.0
        %1406 = vmatpush2.msra.mxu0 0.0
        %1407 = vmatprep.subr.mxu0 0.0
        %1408 = vmatpush2.msra.mxu0 0.0
        %1409 = vmatprep.subr.mxu0 0.0
        %1410 = vmatpush2.msra.mxu0 0.0
        %1411 = vmatprep.subr.mxu0 0.0
        %1412 = vmatpush2.msra.mxu0 0.0
        %1413 = vmatprep.subr.mxu0 0.0
        %1414 = vmatpush2.msra.mxu0 0.0
        %1415 = vmatprep.subr.mxu0 0.0
        %1416 = vmatpush2.msra.mxu0 0.0
        %1417 = vmatprep.subr.mxu0 0.0
        %1418 = vmatpush2.msra.mxu0 0.0
        %1419 = vmatprep.subr.mxu0 0.0
        %1420 = vmatpush2.msra.mxu0 0.0
        %1421 = vmatprep.subr.mxu0 0.0
        %1422 = vmatpush2.msra.mxu0 0.0
        %1423 = vmatprep.subr.mxu0 0.0
        %1424 = vmatpush2.msra.mxu0 0.0
        %1425 = vmatprep.subr.mxu0 0.0
        %1426 = vmatpush2.msra.mxu0 0.0
        %1427 = vmatprep.subr.mxu0 0.0
        %1428 = vmatpush2.msra.mxu0 0.0
        %1429 = vmatprep.subr.mxu0 0.0
        %1430 = vmatpush2.msra.mxu0 0.0
        %1431 = vmatprep.subr.mxu0 0.0
        %1432 = vmatpush2.msra.mxu0 0.0
        %1433 = vmatprep.mubr.f32.mxu0 0.0
        %1434 = vmatmul.mubr.f32.gmra.mxu0 %v1364
        %v1435 = vpop.f32.mrf.mxu0
        %v1436 = vadd.f32 0.0, %v1435
        %v1437 = vpop.f32.mrf.mxu0
        %1438 = vdwg.mxu0
        %s1439 = sadd.s32 0, 4
        %s1440 = scalar_lea.vmem [#allocation6], %s1439
        %1441 = vst.msk [vmem:[%s1440] sm:$0x1] %vm1028, %v1436
        %v1442 = vlaneseq
        %v1443 = vshrl.u32 %v1442, 7
        %v1444 = vsub.s32 5, %v1443
        %v1445 = vrot.slane %v923, %v1444
        %v1446 = vmul.f32 %v920, %v1445
        %v1447 = vsel %vm930, %v1446, 0.0
        %1448 = vadd.xlane.f32.xlu0 %v1447
        %v1449 = vpop.xlane.xlu0 %1448
        %v1450 = vlaneseq
        %v1451 = vshrl.u32 %v1450, 7
        %v1452 = vsub.s32 5, %v1451
        %v1453 = vrot.slane %v921, %v1452
        %v1454 = vmul.f32 %v1453, %v913
        %v1455 = vmul.f32 %v1454, 1.442695
        %v1456 = vpow.pop %v1455
        %v1457 = vmul.f32 %v1456, %v1360
        %v1458 = vlaneseq
        %v1459 = vshrl.u32 %v1458, 7
        %v1460 = vsub.s32 5, %v1459
        %v1461 = vrot.slane %v924, %v1460
        %v1462 = vmul.f32 %v1461, %v1449
        %v1463 = vadd.f32 %v1457, %v1462
        %v1464 = vrot.slane %v923, 5
        %1465 = vrot.lane.b32.xlu0 %v1464, 124
        %v1466 = vpop.permute.xlu0 %1465
        %v1467 = vsel %vm951, %v1466, 0
        %v1470 = vsel %vm954, %v1463, 0
        %1472 = vmatprep.subr.mxu0 0.0
        %1473 = vmatpush1.msra.mxu0 0.0
        %1474 = vmatprep.subr.mxu0 0.0
        %1475 = vmatpush1.msra.mxu0 0.0
        %1476 = vmatprep.subr.mxu0 0.0
        %1477 = vmatpush1.msra.mxu0 0.0
        %1478 = vmatprep.subr.mxu0 0.0
        %1479 = vmatpush1.msra.mxu0 0.0
        %1480 = vmatprep.subr.mxu0 0.0
        %1481 = vmatpush1.msra.mxu0 0.0
        %1482 = vmatprep.subr.mxu0 0.0
        %1483 = vmatpush1.msra.mxu0 0.0
        %1484 = vmatprep.subr.mxu0 0.0
        %1485 = vmatpush1.msra.mxu0 0.0
        %1486 = vmatprep.subr.mxu0 0.0
        %1487 = vmatpush1.msra.mxu0 0.0
        %1488 = vmatprep.subr.mxu0 0.0
        %1489 = vmatpush1.msra.mxu0 0.0
        %1490 = vmatprep.subr.mxu0 0.0
        %1491 = vmatpush1.msra.mxu0 0.0
        %1492 = vmatprep.subr.mxu0 0.0
        %1493 = vmatpush1.msra.mxu0 0.0
        %1494 = vmatprep.subr.mxu0 0.0
        %1495 = vmatpush1.msra.mxu0 0.0
        %1496 = vmatprep.subr.mxu0 0.0
        %1497 = vmatpush1.msra.mxu0 0.0
        %1498 = vmatprep.subr.mxu0 0.0
        %1499 = vmatpush1.msra.mxu0 0.0
        %1500 = vmatprep.subr.mxu0 0.0
        %1501 = vmatpush1.msra.mxu0 0.0
        %1502 = vmatprep.subr.mxu0 0.0
        %1503 = vmatpush1.msra.mxu0 %v1470
        %1504 = vmatprep.subr.mxu0 0.0
        %1505 = vmatpush2.msra.mxu0 0.0
        %1506 = vmatprep.subr.mxu0 0.0
        %1507 = vmatpush2.msra.mxu0 0.0
        %1508 = vmatprep.subr.mxu0 0.0
        %1509 = vmatpush2.msra.mxu0 0.0
        %1510 = vmatprep.subr.mxu0 0.0
        %1511 = vmatpush2.msra.mxu0 0.0
        %1512 = vmatprep.subr.mxu0 0.0
        %1513 = vmatpush2.msra.mxu0 0.0
        %1514 = vmatprep.subr.mxu0 0.0
        %1515 = vmatpush2.msra.mxu0 0.0
        %1516 = vmatprep.subr.mxu0 0.0
        %1517 = vmatpush2.msra.mxu0 0.0
        %1518 = vmatprep.subr.mxu0 0.0
        %1519 = vmatpush2.msra.mxu0 0.0
        %1520 = vmatprep.subr.mxu0 0.0
        %1521 = vmatpush2.msra.mxu0 0.0
        %1522 = vmatprep.subr.mxu0 0.0
        %1523 = vmatpush2.msra.mxu0 0.0
        %1524 = vmatprep.subr.mxu0 0.0
        %1525 = vmatpush2.msra.mxu0 0.0
        %1526 = vmatprep.subr.mxu0 0.0
        %1527 = vmatpush2.msra.mxu0 0.0
        %1528 = vmatprep.subr.mxu0 0.0
        %1529 = vmatpush2.msra.mxu0 0.0
        %1530 = vmatprep.subr.mxu0 0.0
        %1531 = vmatpush2.msra.mxu0 0.0
        %1532 = vmatprep.subr.mxu0 0.0
        %1533 = vmatpush2.msra.mxu0 0.0
        %1534 = vmatprep.subr.mxu0 0.0
        %1535 = vmatpush2.msra.mxu0 0.0
        %1536 = vmatprep.mubr.f32.mxu0 0.0
        %1537 = vmatmul.mubr.f32.gmra.mxu0 %v1467
        %v1538 = vpop.f32.mrf.mxu0
        %v1539 = vadd.f32 0.0, %v1538
        %v1540 = vpop.f32.mrf.mxu0
        %1541 = vdwg.mxu0
        %s1542 = sadd.s32 0, 5
        %s1543 = scalar_lea.vmem [#allocation6], %s1542
        %1544 = vst.msk [vmem:[%s1543] sm:$0x1] %vm1028, %v1539
        %v1545 = vlaneseq
        %v1546 = vshrl.u32 %v1545, 7
        %v1547 = vsub.s32 6, %v1546
        %v1548 = vrot.slane %v923, %v1547
        %v1549 = vmul.f32 %v920, %v1548
        %v1550 = vsel %vm930, %v1549, 0.0
        %1551 = vadd.xlane.f32.xlu0 %v1550
        %v1552 = vpop.xlane.xlu0 %1551
        %v1553 = vlaneseq
        %v1554 = vshrl.u32 %v1553, 7
        %v1555 = vsub.s32 6, %v1554
        %v1556 = vrot.slane %v921, %v1555
        %v1557 = vmul.f32 %v1556, %v913
        %v1558 = vmul.f32 %v1557, 1.442695
        %v1559 = vpow.pop %v1558
        %v1560 = vmul.f32 %v1559, %v1463
        %v1561 = vlaneseq
        %v1562 = vshrl.u32 %v1561, 7
        %v1563 = vsub.s32 6, %v1562
        %v1564 = vrot.slane %v924, %v1563
        %v1565 = vmul.f32 %v1564, %v1552
        %v1566 = vadd.f32 %v1560, %v1565
        %v1567 = vrot.slane %v923, 6
        %1568 = vrot.lane.b32.xlu0 %v1567, 124
        %v1569 = vpop.permute.xlu0 %1568
        %v1570 = vsel %vm951, %v1569, 0
        %v1573 = vsel %vm954, %v1566, 0
        %1575 = vmatprep.subr.mxu0 0.0
        %1576 = vmatpush1.msra.mxu0 0.0
        %1577 = vmatprep.subr.mxu0 0.0
        %1578 = vmatpush1.msra.mxu0 0.0
        %1579 = vmatprep.subr.mxu0 0.0
        %1580 = vmatpush1.msra.mxu0 0.0
        %1581 = vmatprep.subr.mxu0 0.0
        %1582 = vmatpush1.msra.mxu0 0.0
        %1583 = vmatprep.subr.mxu0 0.0
        %1584 = vmatpush1.msra.mxu0 0.0
        %1585 = vmatprep.subr.mxu0 0.0
        %1586 = vmatpush1.msra.mxu0 0.0
        %1587 = vmatprep.subr.mxu0 0.0
        %1588 = vmatpush1.msra.mxu0 0.0
        %1589 = vmatprep.subr.mxu0 0.0
        %1590 = vmatpush1.msra.mxu0 0.0
        %1591 = vmatprep.subr.mxu0 0.0
        %1592 = vmatpush1.msra.mxu0 0.0
        %1593 = vmatprep.subr.mxu0 0.0
        %1594 = vmatpush1.msra.mxu0 0.0
        %1595 = vmatprep.subr.mxu0 0.0
        %1596 = vmatpush1.msra.mxu0 0.0
        %1597 = vmatprep.subr.mxu0 0.0
        %1598 = vmatpush1.msra.mxu0 0.0
        %1599 = vmatprep.subr.mxu0 0.0
        %1600 = vmatpush1.msra.mxu0 0.0
        %1601 = vmatprep.subr.mxu0 0.0
        %1602 = vmatpush1.msra.mxu0 0.0
        %1603 = vmatprep.subr.mxu0 0.0
        %1604 = vmatpush1.msra.mxu0 0.0
        %1605 = vmatprep.subr.mxu0 0.0
        %1606 = vmatpush1.msra.mxu0 %v1573
        %1607 = vmatprep.subr.mxu0 0.0
        %1608 = vmatpush2.msra.mxu0 0.0
        %1609 = vmatprep.subr.mxu0 0.0
        %1610 = vmatpush2.msra.mxu0 0.0
        %1611 = vmatprep.subr.mxu0 0.0
        %1612 = vmatpush2.msra.mxu0 0.0
        %1613 = vmatprep.subr.mxu0 0.0
        %1614 = vmatpush2.msra.mxu0 0.0
        %1615 = vmatprep.subr.mxu0 0.0
        %1616 = vmatpush2.msra.mxu0 0.0
        %1617 = vmatprep.subr.mxu0 0.0
        %1618 = vmatpush2.msra.mxu0 0.0
        %1619 = vmatprep.subr.mxu0 0.0
        %1620 = vmatpush2.msra.mxu0 0.0
        %1621 = vmatprep.subr.mxu0 0.0
        %1622 = vmatpush2.msra.mxu0 0.0
        %1623 = vmatprep.subr.mxu0 0.0
        %1624 = vmatpush2.msra.mxu0 0.0
        %1625 = vmatprep.subr.mxu0 0.0
        %1626 = vmatpush2.msra.mxu0 0.0
        %1627 = vmatprep.subr.mxu0 0.0
        %1628 = vmatpush2.msra.mxu0 0.0
        %1629 = vmatprep.subr.mxu0 0.0
        %1630 = vmatpush2.msra.mxu0 0.0
        %1631 = vmatprep.subr.mxu0 0.0
        %1632 = vmatpush2.msra.mxu0 0.0
        %1633 = vmatprep.subr.mxu0 0.0
        %1634 = vmatpush2.msra.mxu0 0.0
        %1635 = vmatprep.subr.mxu0 0.0
        %1636 = vmatpush2.msra.mxu0 0.0
        %1637 = vmatprep.subr.mxu0 0.0
        %1638 = vmatpush2.msra.mxu0 0.0
        %1639 = vmatprep.mubr.f32.mxu0 0.0
        %1640 = vmatmul.mubr.f32.gmra.mxu0 %v1570
        %v1641 = vpop.f32.mrf.mxu0
        %v1642 = vadd.f32 0.0, %v1641
        %v1643 = vpop.f32.mrf.mxu0
        %1644 = vdwg.mxu0
        %s1645 = sadd.s32 0, 6
        %s1646 = scalar_lea.vmem [#allocation6], %s1645
        %1647 = vst.msk [vmem:[%s1646] sm:$0x1] %vm1028, %v1642
        %v1648 = vlaneseq
        %v1649 = vshrl.u32 %v1648, 7
        %v1650 = vsub.s32 7, %v1649
        %v1651 = vrot.slane %v923, %v1650
        %v1652 = vmul.f32 %v920, %v1651
        %v1653 = vsel %vm930, %v1652, 0.0
        %1654 = vadd.xlane.f32.xlu0 %v1653
        %v1655 = vpop.xlane.xlu0 %1654
        %v1656 = vlaneseq
        %v1657 = vshrl.u32 %v1656, 7
        %v1658 = vsub.s32 7, %v1657
        %v1659 = vrot.slane %v921, %v1658
        %v1660 = vmul.f32 %v1659, %v913
        %v1661 = vmul.f32 %v1660, 1.442695
        %v1662 = vpow.pop %v1661
        %v1663 = vmul.f32 %v1662, %v1566
        %v1664 = vlaneseq
        %v1665 = vshrl.u32 %v1664, 7
        %v1666 = vsub.s32 7, %v1665
        %v1667 = vrot.slane %v924, %v1666
        %v1668 = vmul.f32 %v1667, %v1655
        %v1669 = vadd.f32 %v1663, %v1668
        %v1670 = vrot.slane %v923, 7
        %1671 = vrot.lane.b32.xlu0 %v1670, 124
        %v1672 = vpop.permute.xlu0 %1671
        %v1673 = vsel %vm951, %v1672, 0
        %v1676 = vsel %vm954, %v1669, 0
        %1678 = vmatprep.subr.mxu0 0.0
        %1679 = vmatpush1.msra.mxu0 0.0
        %1680 = vmatprep.subr.mxu0 0.0
        %1681 = vmatpush1.msra.mxu0 0.0
        %1682 = vmatprep.subr.mxu0 0.0
        %1683 = vmatpush1.msra.mxu0 0.0
        %1684 = vmatprep.subr.mxu0 0.0
        %1685 = vmatpush1.msra.mxu0 0.0
        %1686 = vmatprep.subr.mxu0 0.0
        %1687 = vmatpush1.msra.mxu0 0.0
        %1688 = vmatprep.subr.mxu0 0.0
        %1689 = vmatpush1.msra.mxu0 0.0
        %1690 = vmatprep.subr.mxu0 0.0
        %1691 = vmatpush1.msra.mxu0 0.0
        %1692 = vmatprep.subr.mxu0 0.0
        %1693 = vmatpush1.msra.mxu0 0.0
        %1694 = vmatprep.subr.mxu0 0.0
        %1695 = vmatpush1.msra.mxu0 0.0
        %1696 = vmatprep.subr.mxu0 0.0
        %1697 = vmatpush1.msra.mxu0 0.0
        %1698 = vmatprep.subr.mxu0 0.0
        %1699 = vmatpush1.msra.mxu0 0.0
        %1700 = vmatprep.subr.mxu0 0.0
        %1701 = vmatpush1.msra.mxu0 0.0
        %1702 = vmatprep.subr.mxu0 0.0
        %1703 = vmatpush1.msra.mxu0 0.0
        %1704 = vmatprep.subr.mxu0 0.0
        %1705 = vmatpush1.msra.mxu0 0.0
        %1706 = vmatprep.subr.mxu0 0.0
        %1707 = vmatpush1.msra.mxu0 0.0
        %1708 = vmatprep.subr.mxu0 0.0
        %1709 = vmatpush1.msra.mxu0 %v1676
        %1710 = vmatprep.subr.mxu0 0.0
        %1711 = vmatpush2.msra.mxu0 0.0
        %1712 = vmatprep.subr.mxu0 0.0
        %1713 = vmatpush2.msra.mxu0 0.0
        %1714 = vmatprep.subr.mxu0 0.0
        %1715 = vmatpush2.msra.mxu0 0.0
        %1716 = vmatprep.subr.mxu0 0.0
        %1717 = vmatpush2.msra.mxu0 0.0
        %1718 = vmatprep.subr.mxu0 0.0
        %1719 = vmatpush2.msra.mxu0 0.0
        %1720 = vmatprep.subr.mxu0 0.0
        %1721 = vmatpush2.msra.mxu0 0.0
        %1722 = vmatprep.subr.mxu0 0.0
        %1723 = vmatpush2.msra.mxu0 0.0
        %1724 = vmatprep.subr.mxu0 0.0
        %1725 = vmatpush2.msra.mxu0 0.0
        %1726 = vmatprep.subr.mxu0 0.0
        %1727 = vmatpush2.msra.mxu0 0.0
        %1728 = vmatprep.subr.mxu0 0.0
        %1729 = vmatpush2.msra.mxu0 0.0
        %1730 = vmatprep.subr.mxu0 0.0
        %1731 = vmatpush2.msra.mxu0 0.0
        %1732 = vmatprep.subr.mxu0 0.0
        %1733 = vmatpush2.msra.mxu0 0.0
        %1734 = vmatprep.subr.mxu0 0.0
        %1735 = vmatpush2.msra.mxu0 0.0
        %1736 = vmatprep.subr.mxu0 0.0
        %1737 = vmatpush2.msra.mxu0 0.0
        %1738 = vmatprep.subr.mxu0 0.0
        %1739 = vmatpush2.msra.mxu0 0.0
        %1740 = vmatprep.subr.mxu0 0.0
        %1741 = vmatpush2.msra.mxu0 0.0
        %1742 = vmatprep.mubr.f32.mxu0 0.0
        %1743 = vmatmul.mubr.f32.gmra.mxu0 %v1673
        %v1744 = vpop.f32.mrf.mxu0
        %v1745 = vadd.f32 0.0, %v1744
        %v1746 = vpop.f32.mrf.mxu0
        %1747 = vdwg.mxu0
        %s1748 = sadd.s32 0, 7
        %s1749 = scalar_lea.vmem [#allocation6], %s1748
        %1750 = vst.msk [vmem:[%s1749] sm:$0x1] %vm1028, %v1745
        %s1751 = scalar_lea.vmem [#allocation4], 8
        %v1752 = vld [vmem:[%s1751] sm:$0xff]
        %s1753 = scalar_lea.vmem [#allocation3], 8
        %v1754 = vld [vmem:[%s1753] sm:$0xff]
        %s1755 = scalar_lea.vmem [#allocation5], 8
        %v1756 = vld [vmem:[%s1755] sm:$0xff]
        %v1757 = vmul.f32 %v1752, %v1754
        %v1758 = vlaneseq
        %v1759 = vshrl.u32 %v1758, 7
        %v1760 = vsub.s32 7, %v1759
        %v1761 = vrot.slane %v1756, %v1760
        %v1762 = vmul.f32 %v920, %v1761
        %v1763 = vsel %vm930, %v1762, 0.0
        %1764 = vadd.xlane.f32.xlu0 %v1763
        %v1765 = vpop.xlane.xlu0 %1764
        %v1766 = vlaneseq
        %v1767 = vshrl.u32 %v1766, 7
        %v1768 = vsub.s32 7, %v1767
        %v1769 = vrot.slane %v1752, %v1768
        %v1770 = vmul.f32 %v1769, %v913
        %v1771 = vmul.f32 %v1770, 1.442695
        %v1772 = vpow.pop %v1771
        %v1773 = vmul.f32 %v1772, 0.0
        %v1774 = vlaneseq
        %v1775 = vshrl.u32 %v1774, 7
        %v1776 = vsub.s32 7, %v1775
        %v1777 = vrot.slane %v1757, %v1776
        %v1778 = vmul.f32 %v1777, %v1765
        %v1779 = vadd.f32 %v1773, %v1778
        %v1781 = vrot.slane %v1756, 7
        %1782 = vrot.lane.b32.xlu0 %v1781, 124
        %v1783 = vpop.permute.xlu0 %1782
        %v1784 = vsel %vm951, %v1783, 0
        %v1787 = vsel %vm954, %v1779, 0
        %1789 = vmatprep.subr.mxu0 0.0
        %1790 = vmatpush1.msra.mxu0 0.0
        %1791 = vmatprep.subr.mxu0 0.0
        %1792 = vmatpush1.msra.mxu0 0.0
        %1793 = vmatprep.subr.mxu0 0.0
        %1794 = vmatpush1.msra.mxu0 0.0
        %1795 = vmatprep.subr.mxu0 0.0
        %1796 = vmatpush1.msra.mxu0 0.0
        %1797 = vmatprep.subr.mxu0 0.0
        %1798 = vmatpush1.msra.mxu0 0.0
        %1799 = vmatprep.subr.mxu0 0.0
        %1800 = vmatpush1.msra.mxu0 0.0
        %1801 = vmatprep.subr.mxu0 0.0
        %1802 = vmatpush1.msra.mxu0 0.0
        %1803 = vmatprep.subr.mxu0 0.0
        %1804 = vmatpush1.msra.mxu0 0.0
        %1805 = vmatprep.subr.mxu0 0.0
        %1806 = vmatpush1.msra.mxu0 0.0
        %1807 = vmatprep.subr.mxu0 0.0
        %1808 = vmatpush1.msra.mxu0 0.0
        %1809 = vmatprep.subr.mxu0 0.0
        %1810 = vmatpush1.msra.mxu0 0.0
        %1811 = vmatprep.subr.mxu0 0.0
        %1812 = vmatpush1.msra.mxu0 0.0
        %1813 = vmatprep.subr.mxu0 0.0
        %1814 = vmatpush1.msra.mxu0 0.0
        %1815 = vmatprep.subr.mxu0 0.0
        %1816 = vmatpush1.msra.mxu0 0.0
        %1817 = vmatprep.subr.mxu0 0.0
        %1818 = vmatpush1.msra.mxu0 0.0
        %1819 = vmatprep.subr.mxu0 0.0
        %1820 = vmatpush1.msra.mxu0 %v1787
        %1821 = vmatprep.subr.mxu0 0.0
        %1822 = vmatpush2.msra.mxu0 0.0
        %1823 = vmatprep.subr.mxu0 0.0
        %1824 = vmatpush2.msra.mxu0 0.0
        %1825 = vmatprep.subr.mxu0 0.0
        %1826 = vmatpush2.msra.mxu0 0.0
        %1827 = vmatprep.subr.mxu0 0.0
        %1828 = vmatpush2.msra.mxu0 0.0
        %1829 = vmatprep.subr.mxu0 0.0
        %1830 = vmatpush2.msra.mxu0 0.0
        %1831 = vmatprep.subr.mxu0 0.0
        %1832 = vmatpush2.msra.mxu0 0.0
        %1833 = vmatprep.subr.mxu0 0.0
        %1834 = vmatpush2.msra.mxu0 0.0
        %1835 = vmatprep.subr.mxu0 0.0
        %1836 = vmatpush2.msra.mxu0 0.0
        %1837 = vmatprep.subr.mxu0 0.0
        %1838 = vmatpush2.msra.mxu0 0.0
        %1839 = vmatprep.subr.mxu0 0.0
        %1840 = vmatpush2.msra.mxu0 0.0
        %1841 = vmatprep.subr.mxu0 0.0
        %1842 = vmatpush2.msra.mxu0 0.0
        %1843 = vmatprep.subr.mxu0 0.0
        %1844 = vmatpush2.msra.mxu0 0.0
        %1845 = vmatprep.subr.mxu0 0.0
        %1846 = vmatpush2.msra.mxu0 0.0
        %1847 = vmatprep.subr.mxu0 0.0
        %1848 = vmatpush2.msra.mxu0 0.0
        %1849 = vmatprep.subr.mxu0 0.0
        %1850 = vmatpush2.msra.mxu0 0.0
        %1851 = vmatprep.subr.mxu0 0.0
        %1852 = vmatpush2.msra.mxu0 0.0
        %1853 = vmatprep.mubr.f32.mxu0 0.0
        %1854 = vmatmul.mubr.f32.gmra.mxu0 %v1784
        %v1855 = vpop.f32.mrf.mxu0
        %v1856 = vadd.f32 0.0, %v1855
        %v1857 = vpop.f32.mrf.mxu0
        %1858 = vdwg.mxu0
        %s1859 = sadd.s32 8, 7
        %s1860 = scalar_lea.vmem [#allocation6], %s1859
        %1861 = vst.msk [vmem:[%s1860] sm:$0x1] %vm1028, %v1856
        %v1862 = vlaneseq
        %v1863 = vshrl.u32 %v1862, 7
        %v1864 = vsub.s32 6, %v1863
        %v1865 = vrot.slane %v1756, %v1864
        %v1866 = vmul.f32 %v920, %v1865
        %v1867 = vsel %vm930, %v1866, 0.0
        %1868 = vadd.xlane.f32.xlu0 %v1867
        %v1869 = vpop.xlane.xlu0 %1868
        %v1870 = vlaneseq
        %v1871 = vshrl.u32 %v1870, 7
        %v1872 = vsub.s32 6, %v1871
        %v1873 = vrot.slane %v1752, %v1872
        %v1874 = vmul.f32 %v1873, %v913
        %v1875 = vmul.f32 %v1874, 1.442695
        %v1876 = vpow.pop %v1875
        %v1877 = vmul.f32 %v1876, %v1779
        %v1878 = vlaneseq
        %v1879 = vshrl.u32 %v1878, 7
        %v1880 = vsub.s32 6, %v1879
        %v1881 = vrot.slane %v1757, %v1880
        %v1882 = vmul.f32 %v1881, %v1869
        %v1883 = vadd.f32 %v1877, %v1882
        %v1884 = vrot.slane %v1756, 6
        %1885 = vrot.lane.b32.xlu0 %v1884, 124
        %v1886 = vpop.permute.xlu0 %1885
        %v1887 = vsel %vm951, %v1886, 0
        %v1890 = vsel %vm954, %v1883, 0
        %1892 = vmatprep.subr.mxu0 0.0
        %1893 = vmatpush1.msra.mxu0 0.0
        %1894 = vmatprep.subr.mxu0 0.0
        %1895 = vmatpush1.msra.mxu0 0.0
        %1896 = vmatprep.subr.mxu0 0.0
        %1897 = vmatpush1.msra.mxu0 0.0
        %1898 = vmatprep.subr.mxu0 0.0
        %1899 = vmatpush1.msra.mxu0 0.0
        %1900 = vmatprep.subr.mxu0 0.0
        %1901 = vmatpush1.msra.mxu0 0.0
        %1902 = vmatprep.subr.mxu0 0.0
        %1903 = vmatpush1.msra.mxu0 0.0
        %1904 = vmatprep.subr.mxu0 0.0
        %1905 = vmatpush1.msra.mxu0 0.0
        %1906 = vmatprep.subr.mxu0 0.0
        %1907 = vmatpush1.msra.mxu0 0.0
        %1908 = vmatprep.subr.mxu0 0.0
        %1909 = vmatpush1.msra.mxu0 0.0
        %1910 = vmatprep.subr.mxu0 0.0
        %1911 = vmatpush1.msra.mxu0 0.0
        %1912 = vmatprep.subr.mxu0 0.0
        %1913 = vmatpush1.msra.mxu0 0.0
        %1914 = vmatprep.subr.mxu0 0.0
        %1915 = vmatpush1.msra.mxu0 0.0
        %1916 = vmatprep.subr.mxu0 0.0
        %1917 = vmatpush1.msra.mxu0 0.0
        %1918 = vmatprep.subr.mxu0 0.0
        %1919 = vmatpush1.msra.mxu0 0.0
        %1920 = vmatprep.subr.mxu0 0.0
        %1921 = vmatpush1.msra.mxu0 0.0
        %1922 = vmatprep.subr.mxu0 0.0
        %1923 = vmatpush1.msra.mxu0 %v1890
        %1924 = vmatprep.subr.mxu0 0.0
        %1925 = vmatpush2.msra.mxu0 0.0
        %1926 = vmatprep.subr.mxu0 0.0
        %1927 = vmatpush2.msra.mxu0 0.0
        %1928 = vmatprep.subr.mxu0 0.0
        %1929 = vmatpush2.msra.mxu0 0.0
        %1930 = vmatprep.subr.mxu0 0.0
        %1931 = vmatpush2.msra.mxu0 0.0
        %1932 = vmatprep.subr.mxu0 0.0
        %1933 = vmatpush2.msra.mxu0 0.0
        %1934 = vmatprep.subr.mxu0 0.0
        %1935 = vmatpush2.msra.mxu0 0.0
        %1936 = vmatprep.subr.mxu0 0.0
        %1937 = vmatpush2.msra.mxu0 0.0
        %1938 = vmatprep.subr.mxu0 0.0
        %1939 = vmatpush2.msra.mxu0 0.0
        %1940 = vmatprep.subr.mxu0 0.0
        %1941 = vmatpush2.msra.mxu0 0.0
        %1942 = vmatprep.subr.mxu0 0.0
        %1943 = vmatpush2.msra.mxu0 0.0
        %1944 = vmatprep.subr.mxu0 0.0
        %1945 = vmatpush2.msra.mxu0 0.0
        %1946 = vmatprep.subr.mxu0 0.0
        %1947 = vmatpush2.msra.mxu0 0.0
        %1948 = vmatprep.subr.mxu0 0.0
        %1949 = vmatpush2.msra.mxu0 0.0
        %1950 = vmatprep.subr.mxu0 0.0
        %1951 = vmatpush2.msra.mxu0 0.0
        %1952 = vmatprep.subr.mxu0 0.0
        %1953 = vmatpush2.msra.mxu0 0.0
        %1954 = vmatprep.subr.mxu0 0.0
        %1955 = vmatpush2.msra.mxu0 0.0
        %1956 = vmatprep.mubr.f32.mxu0 0.0
        %1957 = vmatmul.mubr.f32.gmra.mxu0 %v1887
        %v1958 = vpop.f32.mrf.mxu0
        %v1959 = vadd.f32 0.0, %v1958
        %v1960 = vpop.f32.mrf.mxu0
        %1961 = vdwg.mxu0
        %s1962 = sadd.s32 8, 6
        %s1963 = scalar_lea.vmem [#allocation6], %s1962
        %1964 = vst.msk [vmem:[%s1963] sm:$0x1] %vm1028, %v1959
        %v1965 = vlaneseq
        %v1966 = vshrl.u32 %v1965, 7
        %v1967 = vsub.s32 5, %v1966
        %v1968 = vrot.slane %v1756, %v1967
        %v1969 = vmul.f32 %v920, %v1968
        %v1970 = vsel %vm930, %v1969, 0.0
        %1971 = vadd.xlane.f32.xlu0 %v1970
        %v1972 = vpop.xlane.xlu0 %1971
        %v1973 = vlaneseq
        %v1974 = vshrl.u32 %v1973, 7
        %v1975 = vsub.s32 5, %v1974
        %v1976 = vrot.slane %v1752, %v1975
        %v1977 = vmul.f32 %v1976, %v913
        %v1978 = vmul.f32 %v1977, 1.442695
        %v1979 = vpow.pop %v1978
        %v1980 = vmul.f32 %v1979, %v1883
        %v1981 = vlaneseq
        %v1982 = vshrl.u32 %v1981, 7
        %v1983 = vsub.s32 5, %v1982
        %v1984 = vrot.slane %v1757, %v1983
        %v1985 = vmul.f32 %v1984, %v1972
        %v1986 = vadd.f32 %v1980, %v1985
        %v1987 = vrot.slane %v1756, 5
        %1988 = vrot.lane.b32.xlu0 %v1987, 124
        %v1989 = vpop.permute.xlu0 %1988
        %v1990 = vsel %vm951, %v1989, 0
        %v1993 = vsel %vm954, %v1986, 0
        %1995 = vmatprep.subr.mxu0 0.0
        %1996 = vmatpush1.msra.mxu0 0.0
        %1997 = vmatprep.subr.mxu0 0.0
        %1998 = vmatpush1.msra.mxu0 0.0
        %1999 = vmatprep.subr.mxu0 0.0
        %2000 = vmatpush1.msra.mxu0 0.0
        %2001 = vmatprep.subr.mxu0 0.0
        %2002 = vmatpush1.msra.mxu0 0.0
        %2003 = vmatprep.subr.mxu0 0.0
        %2004 = vmatpush1.msra.mxu0 0.0
        %2005 = vmatprep.subr.mxu0 0.0
        %2006 = vmatpush1.msra.mxu0 0.0
        %2007 = vmatprep.subr.mxu0 0.0
        %2008 = vmatpush1.msra.mxu0 0.0
        %2009 = vmatprep.subr.mxu0 0.0
        %2010 = vmatpush1.msra.mxu0 0.0
        %2011 = vmatprep.subr.mxu0 0.0
        %2012 = vmatpush1.msra.mxu0 0.0
        %2013 = vmatprep.subr.mxu0 0.0
        %2014 = vmatpush1.msra.mxu0 0.0
        %2015 = vmatprep.subr.mxu0 0.0
        %2016 = vmatpush1.msra.mxu0 0.0
        %2017 = vmatprep.subr.mxu0 0.0
        %2018 = vmatpush1.msra.mxu0 0.0
        %2019 = vmatprep.subr.mxu0 0.0
        %2020 = vmatpush1.msra.mxu0 0.0
        %2021 = vmatprep.subr.mxu0 0.0
        %2022 = vmatpush1.msra.mxu0 0.0
        %2023 = vmatprep.subr.mxu0 0.0
        %2024 = vmatpush1.msra.mxu0 0.0
        %2025 = vmatprep.subr.mxu0 0.0
        %2026 = vmatpush1.msra.mxu0 %v1993
        %2027 = vmatprep.subr.mxu0 0.0
        %2028 = vmatpush2.msra.mxu0 0.0
        %2029 = vmatprep.subr.mxu0 0.0
        %2030 = vmatpush2.msra.mxu0 0.0
        %2031 = vmatprep.subr.mxu0 0.0
        %2032 = vmatpush2.msra.mxu0 0.0
        %2033 = vmatprep.subr.mxu0 0.0
        %2034 = vmatpush2.msra.mxu0 0.0
        %2035 = vmatprep.subr.mxu0 0.0
        %2036 = vmatpush2.msra.mxu0 0.0
        %2037 = vmatprep.subr.mxu0 0.0
        %2038 = vmatpush2.msra.mxu0 0.0
        %2039 = vmatprep.subr.mxu0 0.0
        %2040 = vmatpush2.msra.mxu0 0.0
        %2041 = vmatprep.subr.mxu0 0.0
        %2042 = vmatpush2.msra.mxu0 0.0
        %2043 = vmatprep.subr.mxu0 0.0
        %2044 = vmatpush2.msra.mxu0 0.0
        %2045 = vmatprep.subr.mxu0 0.0
        %2046 = vmatpush2.msra.mxu0 0.0
        %2047 = vmatprep.subr.mxu0 0.0
        %2048 = vmatpush2.msra.mxu0 0.0
        %2049 = vmatprep.subr.mxu0 0.0
        %2050 = vmatpush2.msra.mxu0 0.0
        %2051 = vmatprep.subr.mxu0 0.0
        %2052 = vmatpush2.msra.mxu0 0.0
        %2053 = vmatprep.subr.mxu0 0.0
        %2054 = vmatpush2.msra.mxu0 0.0
        %2055 = vmatprep.subr.mxu0 0.0
        %2056 = vmatpush2.msra.mxu0 0.0
        %2057 = vmatprep.subr.mxu0 0.0
        %2058 = vmatpush2.msra.mxu0 0.0
        %2059 = vmatprep.mubr.f32.mxu0 0.0
        %2060 = vmatmul.mubr.f32.gmra.mxu0 %v1990
        %v2061 = vpop.f32.mrf.mxu0
        %v2062 = vadd.f32 0.0, %v2061
        %v2063 = vpop.f32.mrf.mxu0
        %2064 = vdwg.mxu0
        %s2065 = sadd.s32 8, 5
        %s2066 = scalar_lea.vmem [#allocation6], %s2065
        %2067 = vst.msk [vmem:[%s2066] sm:$0x1] %vm1028, %v2062
        %v2068 = vlaneseq
        %v2069 = vshrl.u32 %v2068, 7
        %v2070 = vsub.s32 4, %v2069
        %v2071 = vrot.slane %v1756, %v2070
        %v2072 = vmul.f32 %v920, %v2071
        %v2073 = vsel %vm930, %v2072, 0.0
        %2074 = vadd.xlane.f32.xlu0 %v2073
        %v2075 = vpop.xlane.xlu0 %2074
        %v2076 = vlaneseq
        %v2077 = vshrl.u32 %v2076, 7
        %v2078 = vsub.s32 4, %v2077
        %v2079 = vrot.slane %v1752, %v2078
        %v2080 = vmul.f32 %v2079, %v913
        %v2081 = vmul.f32 %v2080, 1.442695
        %v2082 = vpow.pop %v2081
        %v2083 = vmul.f32 %v2082, %v1986
        %v2084 = vlaneseq
        %v2085 = vshrl.u32 %v2084, 7
        %v2086 = vsub.s32 4, %v2085
        %v2087 = vrot.slane %v1757, %v2086
        %v2088 = vmul.f32 %v2087, %v2075
        %v2089 = vadd.f32 %v2083, %v2088
        %v2090 = vrot.slane %v1756, 4
        %2091 = vrot.lane.b32.xlu0 %v2090, 124
        %v2092 = vpop.permute.xlu0 %2091
        %v2093 = vsel %vm951, %v2092, 0
        %v2096 = vsel %vm954, %v2089, 0
        %2098 = vmatprep.subr.mxu0 0.0
        %2099 = vmatpush1.msra.mxu0 0.0
        %2100 = vmatprep.subr.mxu0 0.0
        %2101 = vmatpush1.msra.mxu0 0.0
        %2102 = vmatprep.subr.mxu0 0.0
        %2103 = vmatpush1.msra.mxu0 0.0
        %2104 = vmatprep.subr.mxu0 0.0
        %2105 = vmatpush1.msra.mxu0 0.0
        %2106 = vmatprep.subr.mxu0 0.0
        %2107 = vmatpush1.msra.mxu0 0.0
        %2108 = vmatprep.subr.mxu0 0.0
        %2109 = vmatpush1.msra.mxu0 0.0
        %2110 = vmatprep.subr.mxu0 0.0
        %2111 = vmatpush1.msra.mxu0 0.0
        %2112 = vmatprep.subr.mxu0 0.0
        %2113 = vmatpush1.msra.mxu0 0.0
        %2114 = vmatprep.subr.mxu0 0.0
        %2115 = vmatpush1.msra.mxu0 0.0
        %2116 = vmatprep.subr.mxu0 0.0
        %2117 = vmatpush1.msra.mxu0 0.0
        %2118 = vmatprep.subr.mxu0 0.0
        %2119 = vmatpush1.msra.mxu0 0.0
        %2120 = vmatprep.subr.mxu0 0.0
        %2121 = vmatpush1.msra.mxu0 0.0
        %2122 = vmatprep.subr.mxu0 0.0
        %2123 = vmatpush1.msra.mxu0 0.0
        %2124 = vmatprep.subr.mxu0 0.0
        %2125 = vmatpush1.msra.mxu0 0.0
        %2126 = vmatprep.subr.mxu0 0.0
        %2127 = vmatpush1.msra.mxu0 0.0
        %2128 = vmatprep.subr.mxu0 0.0
        %2129 = vmatpush1.msra.mxu0 %v2096
        %2130 = vmatprep.subr.mxu0 0.0
        %2131 = vmatpush2.msra.mxu0 0.0
        %2132 = vmatprep.subr.mxu0 0.0
        %2133 = vmatpush2.msra.mxu0 0.0
        %2134 = vmatprep.subr.mxu0 0.0
        %2135 = vmatpush2.msra.mxu0 0.0
        %2136 = vmatprep.subr.mxu0 0.0
        %2137 = vmatpush2.msra.mxu0 0.0
        %2138 = vmatprep.subr.mxu0 0.0
        %2139 = vmatpush2.msra.mxu0 0.0
        %2140 = vmatprep.subr.mxu0 0.0
        %2141 = vmatpush2.msra.mxu0 0.0
        %2142 = vmatprep.subr.mxu0 0.0
        %2143 = vmatpush2.msra.mxu0 0.0
        %2144 = vmatprep.subr.mxu0 0.0
        %2145 = vmatpush2.msra.mxu0 0.0
        %2146 = vmatprep.subr.mxu0 0.0
        %2147 = vmatpush2.msra.mxu0 0.0
        %2148 = vmatprep.subr.mxu0 0.0
        %2149 = vmatpush2.msra.mxu0 0.0
        %2150 = vmatprep.subr.mxu0 0.0
        %2151 = vmatpush2.msra.mxu0 0.0
        %2152 = vmatprep.subr.mxu0 0.0
        %2153 = vmatpush2.msra.mxu0 0.0
        %2154 = vmatprep.subr.mxu0 0.0
        %2155 = vmatpush2.msra.mxu0 0.0
        %2156 = vmatprep.subr.mxu0 0.0
        %2157 = vmatpush2.msra.mxu0 0.0
        %2158 = vmatprep.subr.mxu0 0.0
        %2159 = vmatpush2.msra.mxu0 0.0
        %2160 = vmatprep.subr.mxu0 0.0
        %2161 = vmatpush2.msra.mxu0 0.0
        %2162 = vmatprep.mubr.f32.mxu0 0.0
        %2163 = vmatmul.mubr.f32.gmra.mxu0 %v2093
        %v2164 = vpop.f32.mrf.mxu0
        %v2165 = vadd.f32 0.0, %v2164
        %v2166 = vpop.f32.mrf.mxu0
        %2167 = vdwg.mxu0
        %s2168 = sadd.s32 8, 4
        %s2169 = scalar_lea.vmem [#allocation6], %s2168
        %2170 = vst.msk [vmem:[%s2169] sm:$0x1] %vm1028, %v2165
        %v2171 = vlaneseq
        %v2172 = vshrl.u32 %v2171, 7
        %v2173 = vsub.s32 3, %v2172
        %v2174 = vrot.slane %v1756, %v2173
        %v2175 = vmul.f32 %v920, %v2174
        %v2176 = vsel %vm930, %v2175, 0.0
        %2177 = vadd.xlane.f32.xlu0 %v2176
        %v2178 = vpop.xlane.xlu0 %2177
        %v2179 = vlaneseq
        %v2180 = vshrl.u32 %v2179, 7
        %v2181 = vsub.s32 3, %v2180
        %v2182 = vrot.slane %v1752, %v2181
        %v2183 = vmul.f32 %v2182, %v913
        %v2184 = vmul.f32 %v2183, 1.442695
        %v2185 = vpow.pop %v2184
        %v2186 = vmul.f32 %v2185, %v2089
        %v2187 = vlaneseq
        %v2188 = vshrl.u32 %v2187, 7
        %v2189 = vsub.s32 3, %v2188
        %v2190 = vrot.slane %v1757, %v2189
        %v2191 = vmul.f32 %v2190, %v2178
        %v2192 = vadd.f32 %v2186, %v2191
        %v2193 = vrot.slane %v1756, 3
        %2194 = vrot.lane.b32.xlu0 %v2193, 124
        %v2195 = vpop.permute.xlu0 %2194
        %v2196 = vsel %vm951, %v2195, 0
        %v2199 = vsel %vm954, %v2192, 0
        %2201 = vmatprep.subr.mxu0 0.0
        %2202 = vmatpush1.msra.mxu0 0.0
        %2203 = vmatprep.subr.mxu0 0.0
        %2204 = vmatpush1.msra.mxu0 0.0
        %2205 = vmatprep.subr.mxu0 0.0
        %2206 = vmatpush1.msra.mxu0 0.0
        %2207 = vmatprep.subr.mxu0 0.0
        %2208 = vmatpush1.msra.mxu0 0.0
        %2209 = vmatprep.subr.mxu0 0.0
        %2210 = vmatpush1.msra.mxu0 0.0
        %2211 = vmatprep.subr.mxu0 0.0
        %2212 = vmatpush1.msra.mxu0 0.0
        %2213 = vmatprep.subr.mxu0 0.0
        %2214 = vmatpush1.msra.mxu0 0.0
        %2215 = vmatprep.subr.mxu0 0.0
        %2216 = vmatpush1.msra.mxu0 0.0
        %2217 = vmatprep.subr.mxu0 0.0
        %2218 = vmatpush1.msra.mxu0 0.0
        %2219 = vmatprep.subr.mxu0 0.0
        %2220 = vmatpush1.msra.mxu0 0.0
        %2221 = vmatprep.subr.mxu0 0.0
        %2222 = vmatpush1.msra.mxu0 0.0
        %2223 = vmatprep.subr.mxu0 0.0
        %2224 = vmatpush1.msra.mxu0 0.0
        %2225 = vmatprep.subr.mxu0 0.0
        %2226 = vmatpush1.msra.mxu0 0.0
        %2227 = vmatprep.subr.mxu0 0.0
        %2228 = vmatpush1.msra.mxu0 0.0
        %2229 = vmatprep.subr.mxu0 0.0
        %2230 = vmatpush1.msra.mxu0 0.0
        %2231 = vmatprep.subr.mxu0 0.0
        %2232 = vmatpush1.msra.mxu0 %v2199
        %2233 = vmatprep.subr.mxu0 0.0
        %2234 = vmatpush2.msra.mxu0 0.0
        %2235 = vmatprep.subr.mxu0 0.0
        %2236 = vmatpush2.msra.mxu0 0.0
        %2237 = vmatprep.subr.mxu0 0.0
        %2238 = vmatpush2.msra.mxu0 0.0
        %2239 = vmatprep.subr.mxu0 0.0
        %2240 = vmatpush2.msra.mxu0 0.0
        %2241 = vmatprep.subr.mxu0 0.0
        %2242 = vmatpush2.msra.mxu0 0.0
        %2243 = vmatprep.subr.mxu0 0.0
        %2244 = vmatpush2.msra.mxu0 0.0
        %2245 = vmatprep.subr.mxu0 0.0
        %2246 = vmatpush2.msra.mxu0 0.0
        %2247 = vmatprep.subr.mxu0 0.0
        %2248 = vmatpush2.msra.mxu0 0.0
        %2249 = vmatprep.subr.mxu0 0.0
        %2250 = vmatpush2.msra.mxu0 0.0
        %2251 = vmatprep.subr.mxu0 0.0
        %2252 = vmatpush2.msra.mxu0 0.0
        %2253 = vmatprep.subr.mxu0 0.0
        %2254 = vmatpush2.msra.mxu0 0.0
        %2255 = vmatprep.subr.mxu0 0.0
        %2256 = vmatpush2.msra.mxu0 0.0
        %2257 = vmatprep.subr.mxu0 0.0
        %2258 = vmatpush2.msra.mxu0 0.0
        %2259 = vmatprep.subr.mxu0 0.0
        %2260 = vmatpush2.msra.mxu0 0.0
        %2261 = vmatprep.subr.mxu0 0.0
        %2262 = vmatpush2.msra.mxu0 0.0
        %2263 = vmatprep.subr.mxu0 0.0
        %2264 = vmatpush2.msra.mxu0 0.0
        %2265 = vmatprep.mubr.f32.mxu0 0.0
        %2266 = vmatmul.mubr.f32.gmra.mxu0 %v2196
        %v2267 = vpop.f32.mrf.mxu0
        %v2268 = vadd.f32 0.0, %v2267
        %v2269 = vpop.f32.mrf.mxu0
        %2270 = vdwg.mxu0
        %s2271 = sadd.s32 8, 3
        %s2272 = scalar_lea.vmem [#allocation6], %s2271
        %2273 = vst.msk [vmem:[%s2272] sm:$0x1] %vm1028, %v2268
        %v2274 = vlaneseq
        %v2275 = vshrl.u32 %v2274, 7
        %v2276 = vsub.s32 2, %v2275
        %v2277 = vrot.slane %v1756, %v2276
        %v2278 = vmul.f32 %v920, %v2277
        %v2279 = vsel %vm930, %v2278, 0.0
        %2280 = vadd.xlane.f32.xlu0 %v2279
        %v2281 = vpop.xlane.xlu0 %2280
        %v2282 = vlaneseq
        %v2283 = vshrl.u32 %v2282, 7
        %v2284 = vsub.s32 2, %v2283
        %v2285 = vrot.slane %v1752, %v2284
        %v2286 = vmul.f32 %v2285, %v913
        %v2287 = vmul.f32 %v2286, 1.442695
        %v2288 = vpow.pop %v2287
        %v2289 = vmul.f32 %v2288, %v2192
        %v2290 = vlaneseq
        %v2291 = vshrl.u32 %v2290, 7
        %v2292 = vsub.s32 2, %v2291
        %v2293 = vrot.slane %v1757, %v2292
        %v2294 = vmul.f32 %v2293, %v2281
        %v2295 = vadd.f32 %v2289, %v2294
        %v2296 = vrot.slane %v1756, 2
        %2297 = vrot.lane.b32.xlu0 %v2296, 124
        %v2298 = vpop.permute.xlu0 %2297
        %v2299 = vsel %vm951, %v2298, 0
        %v2302 = vsel %vm954, %v2295, 0
        %2304 = vmatprep.subr.mxu0 0.0
        %2305 = vmatpush1.msra.mxu0 0.0
        %2306 = vmatprep.subr.mxu0 0.0
        %2307 = vmatpush1.msra.mxu0 0.0
        %2308 = vmatprep.subr.mxu0 0.0
        %2309 = vmatpush1.msra.mxu0 0.0
        %2310 = vmatprep.subr.mxu0 0.0
        %2311 = vmatpush1.msra.mxu0 0.0
        %2312 = vmatprep.subr.mxu0 0.0
        %2313 = vmatpush1.msra.mxu0 0.0
        %2314 = vmatprep.subr.mxu0 0.0
        %2315 = vmatpush1.msra.mxu0 0.0
        %2316 = vmatprep.subr.mxu0 0.0
        %2317 = vmatpush1.msra.mxu0 0.0
        %2318 = vmatprep.subr.mxu0 0.0
        %2319 = vmatpush1.msra.mxu0 0.0
        %2320 = vmatprep.subr.mxu0 0.0
        %2321 = vmatpush1.msra.mxu0 0.0
        %2322 = vmatprep.subr.mxu0 0.0
        %2323 = vmatpush1.msra.mxu0 0.0
        %2324 = vmatprep.subr.mxu0 0.0
        %2325 = vmatpush1.msra.mxu0 0.0
        %2326 = vmatprep.subr.mxu0 0.0
        %2327 = vmatpush1.msra.mxu0 0.0
        %2328 = vmatprep.subr.mxu0 0.0
        %2329 = vmatpush1.msra.mxu0 0.0
        %2330 = vmatprep.subr.mxu0 0.0
        %2331 = vmatpush1.msra.mxu0 0.0
        %2332 = vmatprep.subr.mxu0 0.0
        %2333 = vmatpush1.msra.mxu0 0.0
        %2334 = vmatprep.subr.mxu0 0.0
        %2335 = vmatpush1.msra.mxu0 %v2302
        %2336 = vmatprep.subr.mxu0 0.0
        %2337 = vmatpush2.msra.mxu0 0.0
        %2338 = vmatprep.subr.mxu0 0.0
        %2339 = vmatpush2.msra.mxu0 0.0
        %2340 = vmatprep.subr.mxu0 0.0
        %2341 = vmatpush2.msra.mxu0 0.0
        %2342 = vmatprep.subr.mxu0 0.0
        %2343 = vmatpush2.msra.mxu0 0.0
        %2344 = vmatprep.subr.mxu0 0.0
        %2345 = vmatpush2.msra.mxu0 0.0
        %2346 = vmatprep.subr.mxu0 0.0
        %2347 = vmatpush2.msra.mxu0 0.0
        %2348 = vmatprep.subr.mxu0 0.0
        %2349 = vmatpush2.msra.mxu0 0.0
        %2350 = vmatprep.subr.mxu0 0.0
        %2351 = vmatpush2.msra.mxu0 0.0
        %2352 = vmatprep.subr.mxu0 0.0
        %2353 = vmatpush2.msra.mxu0 0.0
        %2354 = vmatprep.subr.mxu0 0.0
        %2355 = vmatpush2.msra.mxu0 0.0
        %2356 = vmatprep.subr.mxu0 0.0
        %2357 = vmatpush2.msra.mxu0 0.0
        %2358 = vmatprep.subr.mxu0 0.0
        %2359 = vmatpush2.msra.mxu0 0.0
        %2360 = vmatprep.subr.mxu0 0.0
        %2361 = vmatpush2.msra.mxu0 0.0
        %2362 = vmatprep.subr.mxu0 0.0
        %2363 = vmatpush2.msra.mxu0 0.0
        %2364 = vmatprep.subr.mxu0 0.0
        %2365 = vmatpush2.msra.mxu0 0.0
        %2366 = vmatprep.subr.mxu0 0.0
        %2367 = vmatpush2.msra.mxu0 0.0
        %2368 = vmatprep.mubr.f32.mxu0 0.0
        %2369 = vmatmul.mubr.f32.gmra.mxu0 %v2299
        %v2370 = vpop.f32.mrf.mxu0
        %v2371 = vadd.f32 0.0, %v2370
        %v2372 = vpop.f32.mrf.mxu0
        %2373 = vdwg.mxu0
        %s2374 = sadd.s32 8, 2
        %s2375 = scalar_lea.vmem [#allocation6], %s2374
        %2376 = vst.msk [vmem:[%s2375] sm:$0x1] %vm1028, %v2371
        %v2377 = vlaneseq
        %v2378 = vshrl.u32 %v2377, 7
        %v2379 = vsub.s32 1, %v2378
        %v2380 = vrot.slane %v1756, %v2379
        %v2381 = vmul.f32 %v920, %v2380
        %v2382 = vsel %vm930, %v2381, 0.0
        %2383 = vadd.xlane.f32.xlu0 %v2382
        %v2384 = vpop.xlane.xlu0 %2383
        %v2385 = vlaneseq
        %v2386 = vshrl.u32 %v2385, 7
        %v2387 = vsub.s32 1, %v2386
        %v2388 = vrot.slane %v1752, %v2387
        %v2389 = vmul.f32 %v2388, %v913
        %v2390 = vmul.f32 %v2389, 1.442695
        %v2391 = vpow.pop %v2390
        %v2392 = vmul.f32 %v2391, %v2295
        %v2393 = vlaneseq
        %v2394 = vshrl.u32 %v2393, 7
        %v2395 = vsub.s32 1, %v2394
        %v2396 = vrot.slane %v1757, %v2395
        %v2397 = vmul.f32 %v2396, %v2384
        %v2398 = vadd.f32 %v2392, %v2397
        %v2399 = vrot.slane %v1756, 1
        %2400 = vrot.lane.b32.xlu0 %v2399, 124
        %v2401 = vpop.permute.xlu0 %2400
        %v2402 = vsel %vm951, %v2401, 0
        %v2405 = vsel %vm954, %v2398, 0
        %2407 = vmatprep.subr.mxu0 0.0
        %2408 = vmatpush1.msra.mxu0 0.0
        %2409 = vmatprep.subr.mxu0 0.0
        %2410 = vmatpush1.msra.mxu0 0.0
        %2411 = vmatprep.subr.mxu0 0.0
        %2412 = vmatpush1.msra.mxu0 0.0
        %2413 = vmatprep.subr.mxu0 0.0
        %2414 = vmatpush1.msra.mxu0 0.0
        %2415 = vmatprep.subr.mxu0 0.0
        %2416 = vmatpush1.msra.mxu0 0.0
        %2417 = vmatprep.subr.mxu0 0.0
        %2418 = vmatpush1.msra.mxu0 0.0
        %2419 = vmatprep.subr.mxu0 0.0
        %2420 = vmatpush1.msra.mxu0 0.0
        %2421 = vmatprep.subr.mxu0 0.0
        %2422 = vmatpush1.msra.mxu0 0.0
        %2423 = vmatprep.subr.mxu0 0.0
        %2424 = vmatpush1.msra.mxu0 0.0
        %2425 = vmatprep.subr.mxu0 0.0
        %2426 = vmatpush1.msra.mxu0 0.0
        %2427 = vmatprep.subr.mxu0 0.0
        %2428 = vmatpush1.msra.mxu0 0.0
        %2429 = vmatprep.subr.mxu0 0.0
        %2430 = vmatpush1.msra.mxu0 0.0
        %2431 = vmatprep.subr.mxu0 0.0
        %2432 = vmatpush1.msra.mxu0 0.0
        %2433 = vmatprep.subr.mxu0 0.0
        %2434 = vmatpush1.msra.mxu0 0.0
        %2435 = vmatprep.subr.mxu0 0.0
        %2436 = vmatpush1.msra.mxu0 0.0
        %2437 = vmatprep.subr.mxu0 0.0
        %2438 = vmatpush1.msra.mxu0 %v2405
        %2439 = vmatprep.subr.mxu0 0.0
        %2440 = vmatpush2.msra.mxu0 0.0
        %2441 = vmatprep.subr.mxu0 0.0
        %2442 = vmatpush2.msra.mxu0 0.0
        %2443 = vmatprep.subr.mxu0 0.0
        %2444 = vmatpush2.msra.mxu0 0.0
        %2445 = vmatprep.subr.mxu0 0.0
        %2446 = vmatpush2.msra.mxu0 0.0
        %2447 = vmatprep.subr.mxu0 0.0
        %2448 = vmatpush2.msra.mxu0 0.0
        %2449 = vmatprep.subr.mxu0 0.0
        %2450 = vmatpush2.msra.mxu0 0.0
        %2451 = vmatprep.subr.mxu0 0.0
        %2452 = vmatpush2.msra.mxu0 0.0
        %2453 = vmatprep.subr.mxu0 0.0
        %2454 = vmatpush2.msra.mxu0 0.0
        %2455 = vmatprep.subr.mxu0 0.0
        %2456 = vmatpush2.msra.mxu0 0.0
        %2457 = vmatprep.subr.mxu0 0.0
        %2458 = vmatpush2.msra.mxu0 0.0
        %2459 = vmatprep.subr.mxu0 0.0
        %2460 = vmatpush2.msra.mxu0 0.0
        %2461 = vmatprep.subr.mxu0 0.0
        %2462 = vmatpush2.msra.mxu0 0.0
        %2463 = vmatprep.subr.mxu0 0.0
        %2464 = vmatpush2.msra.mxu0 0.0
        %2465 = vmatprep.subr.mxu0 0.0
        %2466 = vmatpush2.msra.mxu0 0.0
        %2467 = vmatprep.subr.mxu0 0.0
        %2468 = vmatpush2.msra.mxu0 0.0
        %2469 = vmatprep.subr.mxu0 0.0
        %2470 = vmatpush2.msra.mxu0 0.0
        %2471 = vmatprep.mubr.f32.mxu0 0.0
        %2472 = vmatmul.mubr.f32.gmra.mxu0 %v2402
        %v2473 = vpop.f32.mrf.mxu0
        %v2474 = vadd.f32 0.0, %v2473
        %v2475 = vpop.f32.mrf.mxu0
        %2476 = vdwg.mxu0
        %s2477 = sadd.s32 8, 1
        %s2478 = scalar_lea.vmem [#allocation6], %s2477
        %2479 = vst.msk [vmem:[%s2478] sm:$0x1] %vm1028, %v2474
        %v2480 = vlaneseq
        %v2481 = vshrl.u32 %v2480, 7
        %v2482 = vsub.s32 0, %v2481
        %v2483 = vrot.slane %v1756, %v2482
        %v2484 = vmul.f32 %v920, %v2483
        %v2485 = vsel %vm930, %v2484, 0.0
        %2486 = vadd.xlane.f32.xlu0 %v2485
        %v2487 = vpop.xlane.xlu0 %2486
        %v2488 = vlaneseq
        %v2489 = vshrl.u32 %v2488, 7
        %v2490 = vsub.s32 0, %v2489
        %v2491 = vrot.slane %v1752, %v2490
        %v2492 = vmul.f32 %v2491, %v913
        %v2493 = vmul.f32 %v2492, 1.442695
        %v2494 = vpow.pop %v2493
        %v2495 = vmul.f32 %v2494, %v2398
        %v2496 = vlaneseq
        %v2497 = vshrl.u32 %v2496, 7
        %v2498 = vsub.s32 0, %v2497
        %v2499 = vrot.slane %v1757, %v2498
        %v2500 = vmul.f32 %v2499, %v2487
        %v2501 = vadd.f32 %v2495, %v2500
        %2502 = vrot.lane.b32.xlu0 %v1756, 124
        %v2503 = vpop.permute.xlu0 %2502
        %v2504 = vsel %vm951, %v2503, 0
        %v2507 = vsel %vm954, %v2501, 0
        %2509 = vmatprep.subr.mxu0 0.0
        %2510 = vmatpush1.msra.mxu0 0.0
        %2511 = vmatprep.subr.mxu0 0.0
        %2512 = vmatpush1.msra.mxu0 0.0
        %2513 = vmatprep.subr.mxu0 0.0
        %2514 = vmatpush1.msra.mxu0 0.0
        %2515 = vmatprep.subr.mxu0 0.0
        %2516 = vmatpush1.msra.mxu0 0.0
        %2517 = vmatprep.subr.mxu0 0.0
        %2518 = vmatpush1.msra.mxu0 0.0
        %2519 = vmatprep.subr.mxu0 0.0
        %2520 = vmatpush1.msra.mxu0 0.0
        %2521 = vmatprep.subr.mxu0 0.0
        %2522 = vmatpush1.msra.mxu0 0.0
        %2523 = vmatprep.subr.mxu0 0.0
        %2524 = vmatpush1.msra.mxu0 0.0
        %2525 = vmatprep.subr.mxu0 0.0
        %2526 = vmatpush1.msra.mxu0 0.0
        %2527 = vmatprep.subr.mxu0 0.0
        %2528 = vmatpush1.msra.mxu0 0.0
        %2529 = vmatprep.subr.mxu0 0.0
        %2530 = vmatpush1.msra.mxu0 0.0
        %2531 = vmatprep.subr.mxu0 0.0
        %2532 = vmatpush1.msra.mxu0 0.0
        %2533 = vmatprep.subr.mxu0 0.0
        %2534 = vmatpush1.msra.mxu0 0.0
        %2535 = vmatprep.subr.mxu0 0.0
        %2536 = vmatpush1.msra.mxu0 0.0
        %2537 = vmatprep.subr.mxu0 0.0
        %2538 = vmatpush1.msra.mxu0 0.0
        %2539 = vmatprep.subr.mxu0 0.0
        %2540 = vmatpush1.msra.mxu0 %v2507
        %2541 = vmatprep.subr.mxu0 0.0
        %2542 = vmatpush2.msra.mxu0 0.0
        %2543 = vmatprep.subr.mxu0 0.0
        %2544 = vmatpush2.msra.mxu0 0.0
        %2545 = vmatprep.subr.mxu0 0.0
        %2546 = vmatpush2.msra.mxu0 0.0
        %2547 = vmatprep.subr.mxu0 0.0
        %2548 = vmatpush2.msra.mxu0 0.0
        %2549 = vmatprep.subr.mxu0 0.0
        %2550 = vmatpush2.msra.mxu0 0.0
        %2551 = vmatprep.subr.mxu0 0.0
        %2552 = vmatpush2.msra.mxu0 0.0
        %2553 = vmatprep.subr.mxu0 0.0
        %2554 = vmatpush2.msra.mxu0 0.0
        %2555 = vmatprep.subr.mxu0 0.0
        %2556 = vmatpush2.msra.mxu0 0.0
        %2557 = vmatprep.subr.mxu0 0.0
        %2558 = vmatpush2.msra.mxu0 0.0
        %2559 = vmatprep.subr.mxu0 0.0
        %2560 = vmatpush2.msra.mxu0 0.0
        %2561 = vmatprep.subr.mxu0 0.0
        %2562 = vmatpush2.msra.mxu0 0.0
        %2563 = vmatprep.subr.mxu0 0.0
        %2564 = vmatpush2.msra.mxu0 0.0
        %2565 = vmatprep.subr.mxu0 0.0
        %2566 = vmatpush2.msra.mxu0 0.0
        %2567 = vmatprep.subr.mxu0 0.0
        %2568 = vmatpush2.msra.mxu0 0.0
        %2569 = vmatprep.subr.mxu0 0.0
        %2570 = vmatpush2.msra.mxu0 0.0
        %2571 = vmatprep.subr.mxu0 0.0
        %2572 = vmatpush2.msra.mxu0 0.0
        %2573 = vmatprep.mubr.f32.mxu0 0.0
        %2574 = vmatmul.mubr.f32.gmra.mxu0 %v2504
        %v2575 = vpop.f32.mrf.mxu0
        %v2576 = vadd.f32 0.0, %v2575
        %v2577 = vpop.f32.mrf.mxu0
        %2578 = vdwg.mxu0
        %s2579 = scalar_lea.vmem [#allocation6], 8
        %2580 = vst.msk [vmem:[%s2579] sm:$0x1] %vm1028, %v2576
        %v2581 = vld [vmem:[#allocation6] sm:$0xff]
        %v2582 = vld [vmem:[#allocation6 + $0x8] sm:$0xff]
        %v2583 = vld [vmem:[#allocation3] sm:$0xff]
        %v2584 = vld [vmem:[#allocation3 + $0x8] sm:$0xff]
        %v2585 = vld [vmem:[%s10] sm:$0x1]
        %v2587 = vlaneseq
        %v2588 = vshrl.u32 %v2587, 7
        %v2589 = vsub.s32 0, %v2588
        %v2590 = vrot.slane %v2585, %v2589
        %v2592 = vmul.f32 %v2583, %v2590
        %v2593 = vmul.f32 %v2584, %v2590
        %v2594 = vadd.f32 %v2581, %v2592
        %v2595 = vadd.f32 %v2582, %v2593
        %v2596 = vsub.f32 0.0, %v613
        %v2597 = vmul.f32 %v2596, 1.442695
        %v2598 = vpow.pop %v2597
        %v2599 = vadd.f32 %v2598, 1.0
        %v2600 = vrcp.pop %v2599
        %v2601 = vmul.f32 %v613, %v2600
        %v2602 = vadd.f32 %v2594, %v2595
        %2604 = vrot.lane.b32.xlu0 %v2601, 112
        %v2605 = vpop.permute.xlu0 %2604
        %v2607 = vmul.f32 %v2602, %v2605
        %v2608 = vmul.f32 %v2607, 0.5
        %v2609 = vld [vmem:[%s11] sm:$0xff]
        %v2610 = vld [vmem:[%s11 + $0x8] sm:$0xff]
        %v2612 = vsel %vm619, %v2608, 0
        %2614 = vmatprep.subr.mxu0 0.0
        %2615 = vmatpush1.msra.mxu0 0.0
        %2616 = vmatprep.subr.mxu0 0.0
        %2617 = vmatpush1.msra.mxu0 0.0
        %2618 = vmatprep.subr.mxu0 0.0
        %2619 = vmatpush1.msra.mxu0 0.0
        %2620 = vmatprep.subr.mxu0 0.0
        %2621 = vmatpush1.msra.mxu0 0.0
        %2622 = vmatprep.subr.mxu0 0.0
        %2623 = vmatpush1.msra.mxu0 0.0
        %2624 = vmatprep.subr.mxu0 0.0
        %2625 = vmatpush1.msra.mxu0 0.0
        %2626 = vmatprep.subr.mxu0 0.0
        %2627 = vmatpush1.msra.mxu0 0.0
        %2628 = vmatprep.subr.mxu0 0.0
        %2629 = vmatpush1.msra.mxu0 0.0
        %2630 = vmatprep.subr.mxu0 0.0
        %2631 = vmatpush1.msra.mxu0 0.0
        %2632 = vmatprep.subr.mxu0 0.0
        %2633 = vmatpush1.msra.mxu0 0.0
        %2634 = vmatprep.subr.mxu0 0.0
        %2635 = vmatpush1.msra.mxu0 0.0
        %2636 = vmatprep.subr.mxu0 0.0
        %2637 = vmatpush1.msra.mxu0 0.0
        %2638 = vmatprep.subr.mxu0 0.0
        %2639 = vmatpush1.msra.mxu0 0.0
        %2640 = vmatprep.subr.mxu0 0.0
        %2641 = vmatpush1.msra.mxu0 0.0
        %2642 = vmatprep.subr.mxu0 0.0
        %2643 = vmatpush1.msra.mxu0 %v2610
        %2644 = vmatprep.subr.mxu0 0.0
        %2645 = vmatpush1.msra.mxu0 %v2609
        %2646 = vmatprep.subr.mxu0 0.0
        %2647 = vmatpush2.msra.mxu0 0.0
        %2648 = vmatprep.subr.mxu0 0.0
        %2649 = vmatpush2.msra.mxu0 0.0
        %2650 = vmatprep.subr.mxu0 0.0
        %2651 = vmatpush2.msra.mxu0 0.0
        %2652 = vmatprep.subr.mxu0 0.0
        %2653 = vmatpush2.msra.mxu0 0.0
        %2654 = vmatprep.subr.mxu0 0.0
        %2655 = vmatpush2.msra.mxu0 0.0
        %2656 = vmatprep.subr.mxu0 0.0
        %2657 = vmatpush2.msra.mxu0 0.0
        %2658 = vmatprep.subr.mxu0 0.0
        %2659 = vmatpush2.msra.mxu0 0.0
        %2660 = vmatprep.subr.mxu0 0.0
        %2661 = vmatpush2.msra.mxu0 0.0
        %2662 = vmatprep.subr.mxu0 0.0
        %2663 = vmatpush2.msra.mxu0 0.0
        %2664 = vmatprep.subr.mxu0 0.0
        %2665 = vmatpush2.msra.mxu0 0.0
        %2666 = vmatprep.subr.mxu0 0.0
        %2667 = vmatpush2.msra.mxu0 0.0
        %2668 = vmatprep.subr.mxu0 0.0
        %2669 = vmatpush2.msra.mxu0 0.0
        %2670 = vmatprep.subr.mxu0 0.0
        %2671 = vmatpush2.msra.mxu0 0.0
        %2672 = vmatprep.subr.mxu0 0.0
        %2673 = vmatpush2.msra.mxu0 0.0
        %2674 = vmatprep.subr.mxu0 0.0
        %2675 = vmatpush2.msra.mxu0 0.0
        %2676 = vmatprep.subr.mxu0 0.0
        %2677 = vmatpush2.msra.mxu0 0.0
        %2678 = vmatprep.mubr.f32.mxu0 0.0
        %2679 = vmatmul.mubr.f32.gmra.mxu0 %v2612
        %v2680 = vpop.f32.mrf.mxu0
        %v2681 = vadd.f32 %v510, %v2680
        %v2682 = vpop.f32.mrf.mxu0
        %2683 = vdwg.mxu0
        %2684 = vst.msk [vmem:[%s505] sm:$0xff] %vm511, %v2681
        %s2685 = sand.u32 %s296, 1
        %s2686 = scalar_lea.sflag [#allocation9], %s2685
        %s2687 = sand.u32 %s296, 1
        %s2688 = smul.addr %s2687, 8
        %s2689 = scalar_lea.vmem [#allocation21], %s2688
        // Predicated region
        $region101: #{tpu_custom_call.1} parent=67 // pred_check
          %p2690 = pneg %p306
        $region102: #{tpu_custom_call.1} parent=67 // pred_check_branch
          %2692 = sbr.rel (%p2690) target = $region104
        $region103: #{tpu_custom_call.1} parent=67 // pred_region
          %s2694 = ssub.s32 128, 128
          %2695 = vsyncadd %s2686, %s2694
          %s2696 = smul.addr %s31, 128
          %s2697 = scalar_lea.hbm %s12, %s2696
          %s2699 = sshll.u32 %s2689, 4
          %s2700 = int_to_ptr.vmem [resolvable:$true] %s2699
          %2702 = dma.vmem_to_hbm [thread:$0]  %s2700, 128, %s2697, %s2686
        $region104: #{tpu_custom_call.1} parent=67 // pred_fallthru
          _
      $region68: #{tpu_custom_call.1} parent=5 // pred_fallthru
        _
      %p2703 = scmp.le.s32.totalorder 2, %s26
      // Predicated region
      $region105: #{tpu_custom_call.1} parent=5 // pred_check
        %p2704 = pneg %p2703
      $region106: #{tpu_custom_call.1} parent=5 // pred_check_branch
        %2706 = sbr.rel (%p2704) target = $region108
      $region107: #{tpu_custom_call.1} parent=5 // pred_region
        %s2707 = ssub.s32 %s26, 2
        // Predicated region
        $region109: #{tpu_custom_call.1} parent=107 // pred_check
          %p2708 = pneg %p312
        $region110: #{tpu_custom_call.1} parent=107 // pred_check_branch
          %2710 = sbr.rel (%p2708) target = $region112
        $region111: #{tpu_custom_call.1} parent=107 // pred_region
          %s2711 = sand.u32 %s297, 1
          %s2712 = scalar_lea.sflag [#allocation9], %s2711
          %s2713 = sand.u32 %s297, 1
          %s2714 = smul.addr %s2713, 8
          %s2715 = scalar_lea.vmem [#allocation21], %s2714
          %2716 = dma.done %s2712, 128
        $region112: #{tpu_custom_call.1} parent=107 // pred_fallthru
          _
      $region108: #{tpu_custom_call.1} parent=5 // pred_fallthru
        _
    $region6: #{tpu_custom_call.1} parent=1 // loop_footer
      %s30 = sadd.s32 1, %s26
    $region7: #{tpu_custom_call.1} parent=1 // loop_footer_branch
      %25 = sbr.rel target = $region3
    $region8: #{tpu_custom_call.1} parent=1 // loop_exit
      _
    %2717 = vsyncpa [#allocation8], 1
    %s2718 = scalar_lea.sflag [#allocation8], 1
    %2719 = vsyncpa %s2718, 1
    %2720 = vsyncpa [#allocation11], 1
    %2721 = vsyncpa [#allocation14], 1
    %2722 = vsyncpa [#allocation17], 1
    %2723 = vsyncpa [#allocation20], 1
    %2724 = vsyncpa [#allocation9], 1
    %s2725 = scalar_lea.sflag [#allocation9], 1
    %2726 = vsyncpa %s2725, 1

</llo_original>
